<compile_context>
chip_gen: v7x
topology: tpu7x:2x2x1
jax: 0.10.0
libtpu: 0.0.40
codegen_flags: <defaults>
</compile_context>

<pallas_src>
import functools

import jax
import jax.numpy as jnp
from jax import lax
from jax.experimental import pallas as pl
from jax.experimental.pallas import tpu as pltpu


# ----------------------------- config (small) -------------------------------
BATCH = 2
SEQ = 8
EMBED = 32                       # true model embedding dim
HEADS = 4
HEAD_DIM = EMBED // HEADS        # 8
FFN = 4 * EMBED                  # 128 (already lane-dense)
VOCAB = 64
N_LAYERS = 2
EPS = 1e-5

# lane-dense / MXU-friendly padded sizes
D_PAD = 128                      # residual stream padded to one full vreg row
HD_PAD = D_PAD // HEADS          # 32 padded per-head dim
V_PAD = 128                      # padded vocab for the head output


# ------------------------------ in-kernel math ------------------------------
def _gelu(x):
    # GPT-style tanh approximation of GELU (tanh -> EUP slot).
    c = jnp.sqrt(2.0 / jnp.pi).astype(x.dtype)
    return 0.5 * x * (1.0 + jnp.tanh(c * (x + 0.044715 * x * x * x)))


# --------------------------- fused forward kernel ---------------------------
def fused_gpt_kernel(
    x_ref,      # (1, T, D_PAD)      activations for one batch element
    ln1_ref,    # (L, 2, D_PAD)      row0=gamma, row1=beta (zero-padded)
    wqkv_ref,   # (L, D_PAD, 3*D_PAD)
    bqkv_ref,   # (L, 1, 3*D_PAD)
    wo_ref,     # (L, D_PAD, D_PAD)
    bo_ref,     # (L, 1, D_PAD)
    ln2_ref,    # (L, 2, D_PAD)
    w1_ref,     # (L, D_PAD, FFN)
    b1_ref,     # (L, 1, FFN)
    w2_ref,     # (L, FFN, D_PAD)
    b2_ref,     # (L, 1, D_PAD)
    lnf_ref,    # (2, D_PAD)
    wv_ref,     # (D_PAD, V_PAD)     tied reverse-embedding (E^T, zero-padded)
    o_ref,      # (1, T, V_PAD)
    *, seq, n_layers, heads, hd_pad, d_model, head_dim,
):
    x = x_ref[0]                                   # (T, D_PAD); pad lanes are 0

    # Additive causal mask, built once and reused by every layer / head.
    row = lax.broadcasted_iota(jnp.int32, (seq, seq), 0)
    col = lax.broadcasted_iota(jnp.int32, (seq, seq), 1)
    amask = jnp.where(col <= row, 0.0, -1e30).astype(jnp.float32)

    inv_d = 1.0 / d_model
    scale = 1.0 / (head_dim ** 0.5)                # scale by the TRUE head dim
    d_pad = heads * hd_pad

    def layer_norm(v, gamma, beta):
        # Padded lanes of v are exactly zero, so plain full-lane sums divided
        # by the true width d_model reproduce LayerNorm over the real dims.
        mu = jnp.sum(v, axis=-1, keepdims=True) * inv_d
        ex2 = jnp.sum(v * v, axis=-1, keepdims=True) * inv_d
        var = ex2 - mu * mu
        return (v - mu) * lax.rsqrt(var + EPS) * gamma + beta

    for l in range(n_layers):
        # ---- multi-head causal self-attention (pre-LN) ----
        ln1 = ln1_ref[l]                           # (2, D_PAD)
        h = layer_norm(x, ln1[0:1], ln1[1:2])
        qkv = jnp.dot(h, wqkv_ref[l],
                      preferred_element_type=jnp.float32) + bqkv_ref[l]
        wo_l = wo_ref[l]                           # (D_PAD, D_PAD)

        y = x + bo_ref[l]                          # residual + output bias
        for hh in range(heads):
            lo, hi = hh * hd_pad, (hh + 1) * hd_pad
            qh = qkv[:, lo:hi]                     # (T, HD_PAD), pad cols zero
            kh = qkv[:, d_pad + lo:d_pad + hi]
            vh = qkv[:, 2 * d_pad + lo:2 * d_pad + hi]
            s = jnp.dot(qh, kh.T,
                        preferred_element_type=jnp.float32) * scale + amask
            s = s - jnp.max(s, axis=-1, keepdims=True)
            p = jnp.exp(s)
            p = p * pl.reciprocal(jnp.sum(p, axis=-1, keepdims=True),
                                  approx=True)
            oh = jnp.dot(p, vh, preferred_element_type=jnp.float32)
            # Fold this head's context straight through its row-block of W_o;
            # no per-head concatenate needed.
            y = y + jnp.dot(oh, wo_l[lo:hi, :],
                            preferred_element_type=jnp.float32)
        x = y

        # ---- feed-forward (pre-LN) ----
        ln2 = ln2_ref[l]
        h2 = layer_norm(x, ln2[0:1], ln2[1:2])
        ff = _gelu(jnp.dot(h2, w1_ref[l],
                           preferred_element_type=jnp.float32) + b1_ref[l])
        x = x + jnp.dot(ff, w2_ref[l],
                        preferred_element_type=jnp.float32) + b2_ref[l]

    # ---- final LayerNorm + tied reverse-embedding projection ----
    lnf = lnf_ref[...]
    hf = layer_norm(x, lnf[0:1], lnf[1:2])
    o_ref[0] = jnp.dot(hf, wv_ref[...], preferred_element_type=jnp.float32)


def vfgpt_pallas(x_pad, packed):
    """x_pad: (B, T, D_PAD) f32; packed: dict of padded, layer-stacked weights."""
    B, T, DP = x_pad.shape
    kernel = functools.partial(
        fused_gpt_kernel,
        seq=T, n_layers=N_LAYERS, heads=HEADS, hd_pad=HD_PAD,
        d_model=EMBED, head_dim=HEAD_DIM,
    )

    weights = [
        packed["ln1"], packed["wqkv"], packed["bqkv"], packed["wo"],
        packed["bo"], packed["ln2"], packed["w1"], packed["b1"],
        packed["w2"], packed["b2"], packed["lnf"], packed["wv"],
    ]

    def const_spec(a):
        shape = a.shape
        if len(shape) == 2:
            return pl.BlockSpec(shape, lambda b: (0, 0))
        return pl.BlockSpec(shape, lambda b: (0, 0, 0))

    in_specs = [pl.BlockSpec((1, T, DP), lambda b: (b, 0, 0))]
    in_specs += [const_spec(w) for w in weights]
    out_spec = pl.BlockSpec((1, T, V_PAD), lambda b: (b, 0, 0))

    return pl.pallas_call(
        kernel,
        out_shape=jax.ShapeDtypeStruct((B, T, V_PAD), jnp.float32),
        grid_spec=pltpu.PrefetchScalarGridSpec(
            num_scalar_prefetch=0,
            grid=(B,),
            in_specs=in_specs,
            out_specs=out_spec,
        ),
        compiler_params=pltpu.CompilerParams(
            dimension_semantics=("parallel",)),   # B=2 -> one per v7x TC
    )(x_pad, *weights)


# ------------------------------- parameters ---------------------------------
def init_params(key):
    keys = jax.random.split(key, 2 + 4 * N_LAYERS)
    ki = iter(keys)

    def dense(k, shape, scale=0.02):
        return (scale * jax.random.normal(k, shape)).astype(jnp.float32)

    params = {
        "tok_emb": dense(next(ki), (VOCAB, EMBED)),
        "pos_emb": dense(next(ki), (SEQ, EMBED)),
        "ln_final": (jnp.ones((EMBED,), jnp.float32),
                     jnp.zeros((EMBED,), jnp.float32)),
        "blocks": [],
    }
    for _ in range(N_LAYERS):
        params["blocks"].append({
            "ln1": (jnp.ones((EMBED,), jnp.float32),
                    jnp.zeros((EMBED,), jnp.float32)),
            "wqkv": dense(next(ki), (EMBED, 3 * EMBED)),
            "bqkv": jnp.zeros((3 * EMBED,), jnp.float32),
            "wo": dense(next(ki), (EMBED, EMBED)),
            "bo": jnp.zeros((EMBED,), jnp.float32),
            "ln2": (jnp.ones((EMBED,), jnp.float32),
                    jnp.zeros((EMBED,), jnp.float32)),
            "w1": dense(next(ki), (EMBED, FFN)),
            "b1": jnp.zeros((FFN,), jnp.float32),
            "w2": dense(next(ki), (FFN, EMBED)),
            "b2": jnp.zeros((EMBED,), jnp.float32),
        })
    return params


# ----------------------- padding / packing of weights -----------------------
def _pad_vec(v):                         # (EMBED,) -> (D_PAD,), rest zero
    return jnp.zeros((D_PAD,), jnp.float32).at[:EMBED].set(v)


def _pad_rows(w, n_rows):                # (r, C) -> (n_rows, C), rest zero
    return jnp.zeros((n_rows, w.shape[1]), jnp.float32).at[:w.shape[0]].set(w)


def _pad_cols(w, n_cols):                # (R, c) -> (R, n_cols), rest zero
    return jnp.zeros((w.shape[0], n_cols), jnp.float32).at[:, :w.shape[1]].set(w)


def _remap_qkv_cols(w):
    """(rows, 3*EMBED) -> (rows, 3*D_PAD): head h's 8 dims land at h*HD_PAD."""
    rows = w.shape[0]
    out = jnp.zeros((rows, 3 * D_PAD), jnp.float32)
    for part in range(3):                              # q, k, v
        for h in range(HEADS):
            src = w[:, part * EMBED + h * HEAD_DIM:
                       part * EMBED + (h + 1) * HEAD_DIM]
            dst = part * D_PAD + h * HD_PAD
            out = out.at[:, dst:dst + HEAD_DIM].set(src)
    return out


def _remap_wo(w):
    """(EMBED, EMBED) -> (D_PAD, D_PAD): rows in head layout, cols in residual."""
    out = jnp.zeros((D_PAD, D_PAD), jnp.float32)
    for h in range(HEADS):
        out = out.at[h * HD_PAD:h * HD_PAD + HEAD_DIM, :EMBED].set(
            w[h * HEAD_DIM:(h + 1) * HEAD_DIM, :])
    return out


def pack_params(params):
    stacks = {k: [] for k in
              ("ln1", "wqkv", "bqkv", "wo", "bo", "ln2", "w1", "b1", "w2", "b2")}
    for blk in params["blocks"]:
        stacks["ln1"].append(jnp.stack([_pad_vec(blk["ln1"][0]),
                                        _pad_vec(blk["ln1"][1])]))
        stacks["wqkv"].append(_remap_qkv_cols(_pad_rows(blk["wqkv"], D_PAD)))
        stacks["bqkv"].append(_remap_qkv_cols(blk["bqkv"][None, :]))
        stacks["wo"].append(_remap_wo(blk["wo"]))
        stacks["bo"].append(_pad_vec(blk["bo"])[None, :])
        stacks["ln2"].append(jnp.stack([_pad_vec(blk["ln2"][0]),
                                        _pad_vec(blk["ln2"][1])]))
        stacks["w1"].append(_pad_rows(blk["w1"], D_PAD))
        stacks["b1"].append(blk["b1"][None, :])
        stacks["w2"].append(_pad_cols(blk["w2"], D_PAD))
        stacks["b2"].append(_pad_vec(blk["b2"])[None, :])

    packed = {k: jnp.stack(v) for k, v in stacks.items()}
    packed["lnf"] = jnp.stack([_pad_vec(params["ln_final"][0]),
                               _pad_vec(params["ln_final"][1])])
    packed["wv"] = (jnp.zeros((D_PAD, V_PAD), jnp.float32)
                    .at[:EMBED, :VOCAB].set(params["tok_emb"].T))
    return packed


# --------------------------------- forward ----------------------------------
def vfgpt_forward(tokens, params, packed):
    """tokens: (B, T) int32 -> logits (B, T, VOCAB) float32."""
    # Embedding lookup (glue, plain JAX): token + positional; zero-pad to D_PAD.
    x = params["tok_emb"][tokens] + params["pos_emb"][None, :, :]   # (B, T, D)
    x = jnp.pad(x.astype(jnp.float32),
                ((0, 0), (0, 0), (0, D_PAD - EMBED)))
    # drop_emb: nn.Dropout in eval mode -> identity.
    logits_pad = vfgpt_pallas(x, packed)                            # (B, T, V_PAD)
    return logits_pad[:, :, :VOCAB]


# ------------------------- plain-JAX reference check -------------------------
def reference_forward(tokens, params):
    x = (params["tok_emb"][tokens] + params["pos_emb"][None, :, :]).astype(jnp.float32)

    def ln(v, gamma, beta):
        mu = jnp.mean(v, axis=-1, keepdims=True)
        var = jnp.mean((v - mu) ** 2, axis=-1, keepdims=True)
        return (v - mu) * lax.rsqrt(var + EPS) * gamma + beta

    causal = jnp.tril(jnp.ones((SEQ, SEQ), bool))
    for blk in params["blocks"]:
        h = ln(x, blk["ln1"][0], blk["ln1"][1])
        qkv = h @ blk["wqkv"] + blk["bqkv"]
        q, k, v = jnp.split(qkv, 3, axis=-1)
        q = q.reshape(BATCH, SEQ, HEADS, HEAD_DIM).transpose(0, 2, 1, 3)
        k = k.reshape(BATCH, SEQ, HEADS, HEAD_DIM).transpose(0, 2, 1, 3)
        v = v.reshape(BATCH, SEQ, HEADS, HEAD_DIM).transpose(0, 2, 1, 3)
        s = jnp.einsum("bhtd,bhsd->bhts", q, k) / jnp.sqrt(jnp.float32(HEAD_DIM))
        s = jnp.where(causal, s, -1e30)
        p = jax.nn.softmax(s, axis=-1)
        o = jnp.einsum("bhts,bhsd->bhtd", p, v)
        o = o.transpose(0, 2, 1, 3).reshape(BATCH, SEQ, EMBED)
        x = x + o @ blk["wo"] + blk["bo"]
        h2 = ln(x, blk["ln2"][0], blk["ln2"][1])
        x = x + _gelu(h2 @ blk["w1"] + blk["b1"]) @ blk["w2"] + blk["b2"]
    x = ln(x, params["ln_final"][0], params["ln_final"][1])
    return x @ params["tok_emb"].T


# ----------------------------------- main ------------------------------------
if __name__ == "__main__":
    key = jax.random.PRNGKey(0)
    k_params, k_tok = jax.random.split(key)

    params = init_params(k_params)
    packed = pack_params(params)
    tokens = jax.random.randint(k_tok, (BATCH, SEQ), 0, VOCAB, dtype=jnp.int32)

    logits = vfgpt_forward(tokens, params, packed)
    logits = jax.block_until_ready(logits)

    assert logits.shape == (BATCH, SEQ, VOCAB)
    assert logits.dtype == jnp.float32
    assert bool(jnp.all(jnp.isfinite(logits)))

    ref = reference_forward(tokens, params)
    assert bool(jnp.allclose(logits, ref, atol=5e-3, rtol=5e-3)), (
        "max abs err = %g" % float(jnp.max(jnp.abs(logits - ref))))

    print("KERNEL_OK")
</pallas_src>

<mosaic_0001>
module attributes {stable_mosaic.version = 11 : i64} {
  func.func @fused_gpt_kernel(%arg0: i32, %arg1: memref<1x8x128xf32, #tpu.memory_space<vmem>>, %arg2: memref<2x2x128xf32, #tpu.memory_space<vmem>>, %arg3: memref<2x128x384xf32, #tpu.memory_space<vmem>>, %arg4: memref<2x1x384xf32, #tpu.memory_space<vmem>>, %arg5: memref<2x128x128xf32, #tpu.memory_space<vmem>>, %arg6: memref<2x1x128xf32, #tpu.memory_space<vmem>>, %arg7: memref<2x2x128xf32, #tpu.memory_space<vmem>>, %arg8: memref<2x128x128xf32, #tpu.memory_space<vmem>>, %arg9: memref<2x1x128xf32, #tpu.memory_space<vmem>>, %arg10: memref<2x128x128xf32, #tpu.memory_space<vmem>>, %arg11: memref<2x1x128xf32, #tpu.memory_space<vmem>>, %arg12: memref<2x128xf32, #tpu.memory_space<vmem>>, %arg13: memref<128x128xf32, #tpu.memory_space<vmem>>, %arg14: memref<1x8x128xf32, #tpu.memory_space<vmem>>) attributes {dimension_semantics = [#tpu.dimension_semantics<parallel>], iteration_bounds = array<i64: 2>, scalar_prefetch = 0 : i64, scratch_operands = 0 : i64, tpu.core_type = #tpu.core_type<tc>, window_params = [{transform_indices = @transform_0, window_bounds = array<i64: 1, 8, 128>}, {pipeline_mode = #tpu.pipeline_mode<synchronous>, transform_indices = @transform_1, window_bounds = array<i64: 2, 2, 128>}, {pipeline_mode = #tpu.pipeline_mode<synchronous>, transform_indices = @transform_2, window_bounds = array<i64: 2, 128, 384>}, {pipeline_mode = #tpu.pipeline_mode<synchronous>, transform_indices = @transform_3, window_bounds = array<i64: 2, 1, 384>}, {pipeline_mode = #tpu.pipeline_mode<synchronous>, transform_indices = @transform_4, window_bounds = array<i64: 2, 128, 128>}, {pipeline_mode = #tpu.pipeline_mode<synchronous>, transform_indices = @transform_5, window_bounds = array<i64: 2, 1, 128>}, {pipeline_mode = #tpu.pipeline_mode<synchronous>, transform_indices = @transform_6, window_bounds = array<i64: 2, 2, 128>}, {pipeline_mode = #tpu.pipeline_mode<synchronous>, transform_indices = @transform_7, window_bounds = array<i64: 2, 128, 128>}, {pipeline_mode = #tpu.pipeline_mode<synchronous>, transform_indices = @transform_8, window_bounds = array<i64: 2, 1, 128>}, {pipeline_mode = #tpu.pipeline_mode<synchronous>, transform_indices = @transform_9, window_bounds = array<i64: 2, 128, 128>}, {pipeline_mode = #tpu.pipeline_mode<synchronous>, transform_indices = @transform_10, window_bounds = array<i64: 2, 1, 128>}, {pipeline_mode = #tpu.pipeline_mode<synchronous>, transform_indices = @transform_11, window_bounds = array<i64: 2, 128>}, {pipeline_mode = #tpu.pipeline_mode<synchronous>, transform_indices = @transform_12, window_bounds = array<i64: 128, 128>}, {transform_indices = @transform_13, window_bounds = array<i64: 1, 8, 128>}]} {
    %c0 = arith.constant 0 : index
    %c0_0 = arith.constant 0 : index
    %c0_1 = arith.constant 0 : index
    %0 = vector.load %arg1[%c0, %c0_0, %c0_1] : memref<1x8x128xf32, #tpu.memory_space<vmem>>, vector<1x8x128xf32>
    %1 = vector.shape_cast %0 : vector<1x8x128xf32> to vector<8x128xf32>
    %2 = tpu.iota {dimensions = array<i32: 0>} : vector<8x8xi32>
    %3 = tpu.iota {dimensions = array<i32: 1>} : vector<8x8xi32>
    %4 = arith.cmpi sle, %3, %2 : vector<8x8xi32>
    %cst = arith.constant 0.000000e+00 : f32
    %cst_2 = arith.constant -1.000000e+30 : f32
    %5 = vector.broadcast %cst : f32 to vector<8x8xf32>
    %6 = vector.broadcast %cst_2 : f32 to vector<8x8xf32>
    %7 = arith.select %4, %5, %6 : vector<8x8xi1>, vector<8x8xf32>
    %c0_3 = arith.constant 0 : index
    %c0_4 = arith.constant 0 : index
    %c0_5 = arith.constant 0 : index
    %8 = vector.load %arg2[%c0_3, %c0_4, %c0_5] : memref<2x2x128xf32, #tpu.memory_space<vmem>>, vector<1x2x128xf32>
    %9 = vector.shape_cast %8 : vector<1x2x128xf32> to vector<2x128xf32>
    %10 = vector.extract_strided_slice %9 {offsets = [0, 0], sizes = [1, 128], strides = [1, 1]} : vector<2x128xf32> to vector<1x128xf32>
    %11 = vector.extract_strided_slice %9 {offsets = [1, 0], sizes = [1, 128], strides = [1, 1]} : vector<2x128xf32> to vector<1x128xf32>
    %cst_6 = arith.constant dense<0.000000e+00> : vector<8xf32>
    %12 = vector.multi_reduction <add>, %1, %cst_6 [1] : vector<8x128xf32> to vector<8xf32>
    %13 = vector.shape_cast %12 : vector<8xf32> to vector<8x1xf32>
    %cst_7 = arith.constant 3.125000e-02 : f32
    %14 = vector.broadcast %cst_7 : f32 to vector<8x1xf32>
    %15 = arith.mulf %13, %14 : vector<8x1xf32>
    %16 = arith.mulf %1, %1 : vector<8x128xf32>
    %cst_8 = arith.constant dense<0.000000e+00> : vector<8xf32>
    %17 = vector.multi_reduction <add>, %16, %cst_8 [1] : vector<8x128xf32> to vector<8xf32>
    %18 = vector.shape_cast %17 : vector<8xf32> to vector<8x1xf32>
    %cst_9 = arith.constant 3.125000e-02 : f32
    %19 = vector.broadcast %cst_9 : f32 to vector<8x1xf32>
    %20 = arith.mulf %18, %19 : vector<8x1xf32>
    %21 = arith.mulf %15, %15 : vector<8x1xf32>
    %22 = arith.subf %20, %21 : vector<8x1xf32>
    %23 = vector.broadcast %15 : vector<8x1xf32> to vector<8x128xf32>
    %24 = arith.subf %1, %23 : vector<8x128xf32>
    %cst_10 = arith.constant 9.99999974E-6 : f32
    %25 = vector.broadcast %cst_10 : f32 to vector<8x1xf32>
    %26 = arith.addf %22, %25 : vector<8x1xf32>
    %27 = math.rsqrt %26 : vector<8x1xf32>
    %28 = vector.broadcast %27 : vector<8x1xf32> to vector<8x128xf32>
    %29 = arith.mulf %24, %28 : vector<8x128xf32>
    %30 = vector.broadcast %10 : vector<1x128xf32> to vector<8x128xf32>
    %31 = arith.mulf %29, %30 : vector<8x128xf32>
    %32 = vector.broadcast %11 : vector<1x128xf32> to vector<8x128xf32>
    %33 = arith.addf %31, %32 : vector<8x128xf32>
    %c0_11 = arith.constant 0 : index
    %c0_12 = arith.constant 0 : index
    %c0_13 = arith.constant 0 : index
    %34 = vector.load %arg3[%c0_11, %c0_12, %c0_13] : memref<2x128x384xf32, #tpu.memory_space<vmem>>, vector<1x128x384xf32>
    %35 = vector.shape_cast %34 : vector<1x128x384xf32> to vector<128x384xf32>
    %cst_14 = arith.constant dense<0.000000e+00> : vector<8x384xf32>
    %36 = tpu.matmul %33, %35, %cst_14 {dimension_numbers = #tpu.dot_dimension_numbers<[1], [0], [0], [1], [0, 0, 1, 1], [], []>} : vector<8x128xf32>, vector<128x384xf32>, vector<8x384xf32> -> vector<8x384xf32>
    %c0_15 = arith.constant 0 : index
    %c0_16 = arith.constant 0 : index
    %c0_17 = arith.constant 0 : index
    %37 = vector.load %arg4[%c0_15, %c0_16, %c0_17] : memref<2x1x384xf32, #tpu.memory_space<vmem>>, vector<1x1x384xf32>
    %38 = vector.shape_cast %37 : vector<1x1x384xf32> to vector<1x384xf32>
    %39 = vector.broadcast %38 : vector<1x384xf32> to vector<8x384xf32>
    %40 = arith.addf %36, %39 : vector<8x384xf32>
    %c0_18 = arith.constant 0 : index
    %c0_19 = arith.constant 0 : index
    %c0_20 = arith.constant 0 : index
    %41 = vector.load %arg5[%c0_18, %c0_19, %c0_20] : memref<2x128x128xf32, #tpu.memory_space<vmem>>, vector<1x128x128xf32>
    %42 = vector.shape_cast %41 : vector<1x128x128xf32> to vector<128x128xf32>
    %c0_21 = arith.constant 0 : index
    %c0_22 = arith.constant 0 : index
    %c0_23 = arith.constant 0 : index
    %43 = vector.load %arg6[%c0_21, %c0_22, %c0_23] : memref<2x1x128xf32, #tpu.memory_space<vmem>>, vector<1x1x128xf32>
    %44 = vector.shape_cast %43 : vector<1x1x128xf32> to vector<1x128xf32>
    %45 = vector.broadcast %44 : vector<1x128xf32> to vector<8x128xf32>
    %46 = arith.addf %1, %45 : vector<8x128xf32>
    %47 = vector.extract_strided_slice %40 {offsets = [0, 0], sizes = [8, 32], strides = [1, 1]} : vector<8x384xf32> to vector<8x32xf32>
    %48 = vector.extract_strided_slice %40 {offsets = [0, 128], sizes = [8, 32], strides = [1, 1]} : vector<8x384xf32> to vector<8x32xf32>
    %49 = vector.extract_strided_slice %40 {offsets = [0, 256], sizes = [8, 32], strides = [1, 1]} : vector<8x384xf32> to vector<8x32xf32>
    %50 = tpu.transpose %48, [1, 0] : vector<8x32xf32> -> vector<32x8xf32>
    %cst_24 = arith.constant dense<0.000000e+00> : vector<8x8xf32>
    %51 = tpu.matmul %47, %50, %cst_24 {dimension_numbers = #tpu.dot_dimension_numbers<[1], [0], [0], [1], [0, 0, 1, 1], [], []>} : vector<8x32xf32>, vector<32x8xf32>, vector<8x8xf32> -> vector<8x8xf32>
    %cst_25 = arith.constant 0.353553385 : f32
    %52 = vector.broadcast %cst_25 : f32 to vector<8x8xf32>
    %53 = arith.mulf %51, %52 : vector<8x8xf32>
    %54 = arith.addf %53, %7 : vector<8x8xf32>
    %cst_26 = arith.constant dense<0xFF800000> : vector<8xf32>
    %55 = vector.multi_reduction <maximumf>, %54, %cst_26 [1] : vector<8x8xf32> to vector<8xf32>
    %56 = vector.shape_cast %55 : vector<8xf32> to vector<8x1xf32>
    %57 = vector.broadcast %56 : vector<8x1xf32> to vector<8x8xf32>
    %58 = arith.subf %54, %57 : vector<8x8xf32>
    %59 = math.exp %58 : vector<8x8xf32>
    %cst_27 = arith.constant dense<0.000000e+00> : vector<8xf32>
    %60 = vector.multi_reduction <add>, %59, %cst_27 [1] : vector<8x8xf32> to vector<8xf32>
    %61 = vector.shape_cast %60 : vector<8xf32> to vector<8x1xf32>
    %62 = tpu.reciprocal %61 {approx = true} : vector<8x1xf32> -> vector<8x1xf32>
    %63 = vector.broadcast %62 : vector<8x1xf32> to vector<8x8xf32>
    %64 = arith.mulf %59, %63 : vector<8x8xf32>
    %cst_28 = arith.constant dense<0.000000e+00> : vector<8x32xf32>
    %65 = tpu.matmul %64, %49, %cst_28 {dimension_numbers = #tpu.dot_dimension_numbers<[1], [0], [0], [1], [0, 0, 1, 1], [], []>} : vector<8x8xf32>, vector<8x32xf32>, vector<8x32xf32> -> vector<8x32xf32>
    %66 = vector.extract_strided_slice %42 {offsets = [0, 0], sizes = [32, 128], strides = [1, 1]} : vector<128x128xf32> to vector<32x128xf32>
    %cst_29 = arith.constant dense<0.000000e+00> : vector<8x128xf32>
    %67 = tpu.matmul %65, %66, %cst_29 {dimension_numbers = #tpu.dot_dimension_numbers<[1], [0], [0], [1], [0, 0, 1, 1], [], []>} : vector<8x32xf32>, vector<32x128xf32>, vector<8x128xf32> -> vector<8x128xf32>
    %68 = arith.addf %46, %67 : vector<8x128xf32>
    %69 = vector.extract_strided_slice %40 {offsets = [0, 32], sizes = [8, 32], strides = [1, 1]} : vector<8x384xf32> to vector<8x32xf32>
    %70 = vector.extract_strided_slice %40 {offsets = [0, 160], sizes = [8, 32], strides = [1, 1]} : vector<8x384xf32> to vector<8x32xf32>
    %71 = vector.extract_strided_slice %40 {offsets = [0, 288], sizes = [8, 32], strides = [1, 1]} : vector<8x384xf32> to vector<8x32xf32>
    %72 = tpu.transpose %70, [1, 0] : vector<8x32xf32> -> vector<32x8xf32>
    %cst_30 = arith.constant dense<0.000000e+00> : vector<8x8xf32>
    %73 = tpu.matmul %69, %72, %cst_30 {dimension_numbers = #tpu.dot_dimension_numbers<[1], [0], [0], [1], [0, 0, 1, 1], [], []>} : vector<8x32xf32>, vector<32x8xf32>, vector<8x8xf32> -> vector<8x8xf32>
    %cst_31 = arith.constant 0.353553385 : f32
    %74 = vector.broadcast %cst_31 : f32 to vector<8x8xf32>
    %75 = arith.mulf %73, %74 : vector<8x8xf32>
    %76 = arith.addf %75, %7 : vector<8x8xf32>
    %cst_32 = arith.constant dense<0xFF800000> : vector<8xf32>
    %77 = vector.multi_reduction <maximumf>, %76, %cst_32 [1] : vector<8x8xf32> to vector<8xf32>
    %78 = vector.shape_cast %77 : vector<8xf32> to vector<8x1xf32>
    %79 = vector.broadcast %78 : vector<8x1xf32> to vector<8x8xf32>
    %80 = arith.subf %76, %79 : vector<8x8xf32>
    %81 = math.exp %80 : vector<8x8xf32>
    %cst_33 = arith.constant dense<0.000000e+00> : vector<8xf32>
    %82 = vector.multi_reduction <add>, %81, %cst_33 [1] : vector<8x8xf32> to vector<8xf32>
    %83 = vector.shape_cast %82 : vector<8xf32> to vector<8x1xf32>
    %84 = tpu.reciprocal %83 {approx = true} : vector<8x1xf32> -> vector<8x1xf32>
    %85 = vector.broadcast %84 : vector<8x1xf32> to vector<8x8xf32>
    %86 = arith.mulf %81, %85 : vector<8x8xf32>
    %cst_34 = arith.constant dense<0.000000e+00> : vector<8x32xf32>
    %87 = tpu.matmul %86, %71, %cst_34 {dimension_numbers = #tpu.dot_dimension_numbers<[1], [0], [0], [1], [0, 0, 1, 1], [], []>} : vector<8x8xf32>, vector<8x32xf32>, vector<8x32xf32> -> vector<8x32xf32>
    %88 = vector.extract_strided_slice %42 {offsets = [32, 0], sizes = [32, 128], strides = [1, 1]} : vector<128x128xf32> to vector<32x128xf32>
    %cst_35 = arith.constant dense<0.000000e+00> : vector<8x128xf32>
    %89 = tpu.matmul %87, %88, %cst_35 {dimension_numbers = #tpu.dot_dimension_numbers<[1], [0], [0], [1], [0, 0, 1, 1], [], []>} : vector<8x32xf32>, vector<32x128xf32>, vector<8x128xf32> -> vector<8x128xf32>
    %90 = arith.addf %68, %89 : vector<8x128xf32>
    %91 = vector.extract_strided_slice %40 {offsets = [0, 64], sizes = [8, 32], strides = [1, 1]} : vector<8x384xf32> to vector<8x32xf32>
    %92 = vector.extract_strided_slice %40 {offsets = [0, 192], sizes = [8, 32], strides = [1, 1]} : vector<8x384xf32> to vector<8x32xf32>
    %93 = vector.extract_strided_slice %40 {offsets = [0, 320], sizes = [8, 32], strides = [1, 1]} : vector<8x384xf32> to vector<8x32xf32>
    %94 = tpu.transpose %92, [1, 0] : vector<8x32xf32> -> vector<32x8xf32>
    %cst_36 = arith.constant dense<0.000000e+00> : vector<8x8xf32>
    %95 = tpu.matmul %91, %94, %cst_36 {dimension_numbers = #tpu.dot_dimension_numbers<[1], [0], [0], [1], [0, 0, 1, 1], [], []>} : vector<8x32xf32>, vector<32x8xf32>, vector<8x8xf32> -> vector<8x8xf32>
    %cst_37 = arith.constant 0.353553385 : f32
    %96 = vector.broadcast %cst_37 : f32 to vector<8x8xf32>
    %97 = arith.mulf %95, %96 : vector<8x8xf32>
    %98 = arith.addf %97, %7 : vector<8x8xf32>
    %cst_38 = arith.constant dense<0xFF800000> : vector<8xf32>
    %99 = vector.multi_reduction <maximumf>, %98, %cst_38 [1] : vector<8x8xf32> to vector<8xf32>
    %100 = vector.shape_cast %99 : vector<8xf32> to vector<8x1xf32>
    %101 = vector.broadcast %100 : vector<8x1xf32> to vector<8x8xf32>
    %102 = arith.subf %98, %101 : vector<8x8xf32>
    %103 = math.exp %102 : vector<8x8xf32>
    %cst_39 = arith.constant dense<0.000000e+00> : vector<8xf32>
    %104 = vector.multi_reduction <add>, %103, %cst_39 [1] : vector<8x8xf32> to vector<8xf32>
    %105 = vector.shape_cast %104 : vector<8xf32> to vector<8x1xf32>
    %106 = tpu.reciprocal %105 {approx = true} : vector<8x1xf32> -> vector<8x1xf32>
    %107 = vector.broadcast %106 : vector<8x1xf32> to vector<8x8xf32>
    %108 = arith.mulf %103, %107 : vector<8x8xf32>
    %cst_40 = arith.constant dense<0.000000e+00> : vector<8x32xf32>
    %109 = tpu.matmul %108, %93, %cst_40 {dimension_numbers = #tpu.dot_dimension_numbers<[1], [0], [0], [1], [0, 0, 1, 1], [], []>} : vector<8x8xf32>, vector<8x32xf32>, vector<8x32xf32> -> vector<8x32xf32>
    %110 = vector.extract_strided_slice %42 {offsets = [64, 0], sizes = [32, 128], strides = [1, 1]} : vector<128x128xf32> to vector<32x128xf32>
    %cst_41 = arith.constant dense<0.000000e+00> : vector<8x128xf32>
    %111 = tpu.matmul %109, %110, %cst_41 {dimension_numbers = #tpu.dot_dimension_numbers<[1], [0], [0], [1], [0, 0, 1, 1], [], []>} : vector<8x32xf32>, vector<32x128xf32>, vector<8x128xf32> -> vector<8x128xf32>
    %112 = arith.addf %90, %111 : vector<8x128xf32>
    %113 = vector.extract_strided_slice %40 {offsets = [0, 96], sizes = [8, 32], strides = [1, 1]} : vector<8x384xf32> to vector<8x32xf32>
    %114 = vector.extract_strided_slice %40 {offsets = [0, 224], sizes = [8, 32], strides = [1, 1]} : vector<8x384xf32> to vector<8x32xf32>
    %115 = vector.extract_strided_slice %40 {offsets = [0, 352], sizes = [8, 32], strides = [1, 1]} : vector<8x384xf32> to vector<8x32xf32>
    %116 = tpu.transpose %114, [1, 0] : vector<8x32xf32> -> vector<32x8xf32>
    %cst_42 = arith.constant dense<0.000000e+00> : vector<8x8xf32>
    %117 = tpu.matmul %113, %116, %cst_42 {dimension_numbers = #tpu.dot_dimension_numbers<[1], [0], [0], [1], [0, 0, 1, 1], [], []>} : vector<8x32xf32>, vector<32x8xf32>, vector<8x8xf32> -> vector<8x8xf32>
    %cst_43 = arith.constant 0.353553385 : f32
    %118 = vector.broadcast %cst_43 : f32 to vector<8x8xf32>
    %119 = arith.mulf %117, %118 : vector<8x8xf32>
    %120 = arith.addf %119, %7 : vector<8x8xf32>
    %cst_44 = arith.constant dense<0xFF800000> : vector<8xf32>
    %121 = vector.multi_reduction <maximumf>, %120, %cst_44 [1] : vector<8x8xf32> to vector<8xf32>
    %122 = vector.shape_cast %121 : vector<8xf32> to vector<8x1xf32>
    %123 = vector.broadcast %122 : vector<8x1xf32> to vector<8x8xf32>
    %124 = arith.subf %120, %123 : vector<8x8xf32>
    %125 = math.exp %124 : vector<8x8xf32>
    %cst_45 = arith.constant dense<0.000000e+00> : vector<8xf32>
    %126 = vector.multi_reduction <add>, %125, %cst_45 [1] : vector<8x8xf32> to vector<8xf32>
    %127 = vector.shape_cast %126 : vector<8xf32> to vector<8x1xf32>
    %128 = tpu.reciprocal %127 {approx = true} : vector<8x1xf32> -> vector<8x1xf32>
    %129 = vector.broadcast %128 : vector<8x1xf32> to vector<8x8xf32>
    %130 = arith.mulf %125, %129 : vector<8x8xf32>
    %cst_46 = arith.constant dense<0.000000e+00> : vector<8x32xf32>
    %131 = tpu.matmul %130, %115, %cst_46 {dimension_numbers = #tpu.dot_dimension_numbers<[1], [0], [0], [1], [0, 0, 1, 1], [], []>} : vector<8x8xf32>, vector<8x32xf32>, vector<8x32xf32> -> vector<8x32xf32>
    %132 = vector.extract_strided_slice %42 {offsets = [96, 0], sizes = [32, 128], strides = [1, 1]} : vector<128x128xf32> to vector<32x128xf32>
    %cst_47 = arith.constant dense<0.000000e+00> : vector<8x128xf32>
    %133 = tpu.matmul %131, %132, %cst_47 {dimension_numbers = #tpu.dot_dimension_numbers<[1], [0], [0], [1], [0, 0, 1, 1], [], []>} : vector<8x32xf32>, vector<32x128xf32>, vector<8x128xf32> -> vector<8x128xf32>
    %134 = arith.addf %112, %133 : vector<8x128xf32>
    %c0_48 = arith.constant 0 : index
    %c0_49 = arith.constant 0 : index
    %c0_50 = arith.constant 0 : index
    %135 = vector.load %arg7[%c0_48, %c0_49, %c0_50] : memref<2x2x128xf32, #tpu.memory_space<vmem>>, vector<1x2x128xf32>
    %136 = vector.shape_cast %135 : vector<1x2x128xf32> to vector<2x128xf32>
    %137 = vector.extract_strided_slice %136 {offsets = [0, 0], sizes = [1, 128], strides = [1, 1]} : vector<2x128xf32> to vector<1x128xf32>
    %138 = vector.extract_strided_slice %136 {offsets = [1, 0], sizes = [1, 128], strides = [1, 1]} : vector<2x128xf32> to vector<1x128xf32>
    %cst_51 = arith.constant dense<0.000000e+00> : vector<8xf32>
    %139 = vector.multi_reduction <add>, %134, %cst_51 [1] : vector<8x128xf32> to vector<8xf32>
    %140 = vector.shape_cast %139 : vector<8xf32> to vector<8x1xf32>
    %cst_52 = arith.constant 3.125000e-02 : f32
    %141 = vector.broadcast %cst_52 : f32 to vector<8x1xf32>
    %142 = arith.mulf %140, %141 : vector<8x1xf32>
    %143 = arith.mulf %134, %134 : vector<8x128xf32>
    %cst_53 = arith.constant dense<0.000000e+00> : vector<8xf32>
    %144 = vector.multi_reduction <add>, %143, %cst_53 [1] : vector<8x128xf32> to vector<8xf32>
    %145 = vector.shape_cast %144 : vector<8xf32> to vector<8x1xf32>
    %cst_54 = arith.constant 3.125000e-02 : f32
    %146 = vector.broadcast %cst_54 : f32 to vector<8x1xf32>
    %147 = arith.mulf %145, %146 : vector<8x1xf32>
    %148 = arith.mulf %142, %142 : vector<8x1xf32>
    %149 = arith.subf %147, %148 : vector<8x1xf32>
    %150 = vector.broadcast %142 : vector<8x1xf32> to vector<8x128xf32>
    %151 = arith.subf %134, %150 : vector<8x128xf32>
    %cst_55 = arith.constant 9.99999974E-6 : f32
    %152 = vector.broadcast %cst_55 : f32 to vector<8x1xf32>
    %153 = arith.addf %149, %152 : vector<8x1xf32>
    %154 = math.rsqrt %153 : vector<8x1xf32>
    %155 = vector.broadcast %154 : vector<8x1xf32> to vector<8x128xf32>
    %156 = arith.mulf %151, %155 : vector<8x128xf32>
    %157 = vector.broadcast %137 : vector<1x128xf32> to vector<8x128xf32>
    %158 = arith.mulf %156, %157 : vector<8x128xf32>
    %159 = vector.broadcast %138 : vector<1x128xf32> to vector<8x128xf32>
    %160 = arith.addf %158, %159 : vector<8x128xf32>
    %c0_56 = arith.constant 0 : index
    %c0_57 = arith.constant 0 : index
    %c0_58 = arith.constant 0 : index
    %161 = vector.load %arg8[%c0_56, %c0_57, %c0_58] : memref<2x128x128xf32, #tpu.memory_space<vmem>>, vector<1x128x128xf32>
    %162 = vector.shape_cast %161 : vector<1x128x128xf32> to vector<128x128xf32>
    %cst_59 = arith.constant dense<0.000000e+00> : vector<8x128xf32>
    %163 = tpu.matmul %160, %162, %cst_59 {dimension_numbers = #tpu.dot_dimension_numbers<[1], [0], [0], [1], [0, 0, 1, 1], [], []>} : vector<8x128xf32>, vector<128x128xf32>, vector<8x128xf32> -> vector<8x128xf32>
    %c0_60 = arith.constant 0 : index
    %c0_61 = arith.constant 0 : index
    %c0_62 = arith.constant 0 : index
    %164 = vector.load %arg9[%c0_60, %c0_61, %c0_62] : memref<2x1x128xf32, #tpu.memory_space<vmem>>, vector<1x1x128xf32>
    %165 = vector.shape_cast %164 : vector<1x1x128xf32> to vector<1x128xf32>
    %166 = vector.broadcast %165 : vector<1x128xf32> to vector<8x128xf32>
    %167 = arith.addf %163, %166 : vector<8x128xf32>
    %cst_63 = arith.constant 0.636619746 : f32
    %168 = math.sqrt %cst_63 : f32
    %cst_64 = arith.constant 5.000000e-01 : f32
    %169 = vector.broadcast %cst_64 : f32 to vector<8x128xf32>
    %170 = arith.mulf %169, %167 : vector<8x128xf32>
    %cst_65 = arith.constant 4.471500e-02 : f32
    %171 = vector.broadcast %cst_65 : f32 to vector<8x128xf32>
    %172 = arith.mulf %171, %167 : vector<8x128xf32>
    %173 = arith.mulf %172, %167 : vector<8x128xf32>
    %174 = arith.mulf %173, %167 : vector<8x128xf32>
    %175 = arith.addf %167, %174 : vector<8x128xf32>
    %176 = vector.broadcast %168 : f32 to vector<8x128xf32>
    %177 = arith.mulf %176, %175 : vector<8x128xf32>
    %178 = math.tanh %177 : vector<8x128xf32>
    %cst_66 = arith.constant 1.000000e+00 : f32
    %179 = vector.broadcast %cst_66 : f32 to vector<8x128xf32>
    %180 = arith.addf %179, %178 : vector<8x128xf32>
    %181 = arith.mulf %170, %180 : vector<8x128xf32>
    %c0_67 = arith.constant 0 : index
    %c0_68 = arith.constant 0 : index
    %c0_69 = arith.constant 0 : index
    %182 = vector.load %arg10[%c0_67, %c0_68, %c0_69] : memref<2x128x128xf32, #tpu.memory_space<vmem>>, vector<1x128x128xf32>
    %183 = vector.shape_cast %182 : vector<1x128x128xf32> to vector<128x128xf32>
    %cst_70 = arith.constant dense<0.000000e+00> : vector<8x128xf32>
    %184 = tpu.matmul %181, %183, %cst_70 {dimension_numbers = #tpu.dot_dimension_numbers<[1], [0], [0], [1], [0, 0, 1, 1], [], []>} : vector<8x128xf32>, vector<128x128xf32>, vector<8x128xf32> -> vector<8x128xf32>
    %185 = arith.addf %134, %184 : vector<8x128xf32>
    %c0_71 = arith.constant 0 : index
    %c0_72 = arith.constant 0 : index
    %c0_73 = arith.constant 0 : index
    %186 = vector.load %arg11[%c0_71, %c0_72, %c0_73] : memref<2x1x128xf32, #tpu.memory_space<vmem>>, vector<1x1x128xf32>
    %187 = vector.shape_cast %186 : vector<1x1x128xf32> to vector<1x128xf32>
    %188 = vector.broadcast %187 : vector<1x128xf32> to vector<8x128xf32>
    %189 = arith.addf %185, %188 : vector<8x128xf32>
    %c1 = arith.constant 1 : index
    %c0_74 = arith.constant 0 : index
    %c0_75 = arith.constant 0 : index
    %190 = vector.load %arg2[%c1, %c0_74, %c0_75] : memref<2x2x128xf32, #tpu.memory_space<vmem>>, vector<1x2x128xf32>
    %191 = vector.shape_cast %190 : vector<1x2x128xf32> to vector<2x128xf32>
    %192 = vector.extract_strided_slice %191 {offsets = [0, 0], sizes = [1, 128], strides = [1, 1]} : vector<2x128xf32> to vector<1x128xf32>
    %193 = vector.extract_strided_slice %191 {offsets = [1, 0], sizes = [1, 128], strides = [1, 1]} : vector<2x128xf32> to vector<1x128xf32>
    %cst_76 = arith.constant dense<0.000000e+00> : vector<8xf32>
    %194 = vector.multi_reduction <add>, %189, %cst_76 [1] : vector<8x128xf32> to vector<8xf32>
    %195 = vector.shape_cast %194 : vector<8xf32> to vector<8x1xf32>
    %cst_77 = arith.constant 3.125000e-02 : f32
    %196 = vector.broadcast %cst_77 : f32 to vector<8x1xf32>
    %197 = arith.mulf %195, %196 : vector<8x1xf32>
    %198 = arith.mulf %189, %189 : vector<8x128xf32>
    %cst_78 = arith.constant dense<0.000000e+00> : vector<8xf32>
    %199 = vector.multi_reduction <add>, %198, %cst_78 [1] : vector<8x128xf32> to vector<8xf32>
    %200 = vector.shape_cast %199 : vector<8xf32> to vector<8x1xf32>
    %cst_79 = arith.constant 3.125000e-02 : f32
    %201 = vector.broadcast %cst_79 : f32 to vector<8x1xf32>
    %202 = arith.mulf %200, %201 : vector<8x1xf32>
    %203 = arith.mulf %197, %197 : vector<8x1xf32>
    %204 = arith.subf %202, %203 : vector<8x1xf32>
    %205 = vector.broadcast %197 : vector<8x1xf32> to vector<8x128xf32>
    %206 = arith.subf %189, %205 : vector<8x128xf32>
    %cst_80 = arith.constant 9.99999974E-6 : f32
    %207 = vector.broadcast %cst_80 : f32 to vector<8x1xf32>
    %208 = arith.addf %204, %207 : vector<8x1xf32>
    %209 = math.rsqrt %208 : vector<8x1xf32>
    %210 = vector.broadcast %209 : vector<8x1xf32> to vector<8x128xf32>
    %211 = arith.mulf %206, %210 : vector<8x128xf32>
    %212 = vector.broadcast %192 : vector<1x128xf32> to vector<8x128xf32>
    %213 = arith.mulf %211, %212 : vector<8x128xf32>
    %214 = vector.broadcast %193 : vector<1x128xf32> to vector<8x128xf32>
    %215 = arith.addf %213, %214 : vector<8x128xf32>
    %c1_81 = arith.constant 1 : index
    %c0_82 = arith.constant 0 : index
    %c0_83 = arith.constant 0 : index
    %216 = vector.load %arg3[%c1_81, %c0_82, %c0_83] : memref<2x128x384xf32, #tpu.memory_space<vmem>>, vector<1x128x384xf32>
    %217 = vector.shape_cast %216 : vector<1x128x384xf32> to vector<128x384xf32>
    %cst_84 = arith.constant dense<0.000000e+00> : vector<8x384xf32>
    %218 = tpu.matmul %215, %217, %cst_84 {dimension_numbers = #tpu.dot_dimension_numbers<[1], [0], [0], [1], [0, 0, 1, 1], [], []>} : vector<8x128xf32>, vector<128x384xf32>, vector<8x384xf32> -> vector<8x384xf32>
    %c1_85 = arith.constant 1 : index
    %c0_86 = arith.constant 0 : index
    %c0_87 = arith.constant 0 : index
    %219 = vector.load %arg4[%c1_85, %c0_86, %c0_87] : memref<2x1x384xf32, #tpu.memory_space<vmem>>, vector<1x1x384xf32>
    %220 = vector.shape_cast %219 : vector<1x1x384xf32> to vector<1x384xf32>
    %221 = vector.broadcast %220 : vector<1x384xf32> to vector<8x384xf32>
    %222 = arith.addf %218, %221 : vector<8x384xf32>
    %c1_88 = arith.constant 1 : index
    %c0_89 = arith.constant 0 : index
    %c0_90 = arith.constant 0 : index
    %223 = vector.load %arg5[%c1_88, %c0_89, %c0_90] : memref<2x128x128xf32, #tpu.memory_space<vmem>>, vector<1x128x128xf32>
    %224 = vector.shape_cast %223 : vector<1x128x128xf32> to vector<128x128xf32>
    %c1_91 = arith.constant 1 : index
    %c0_92 = arith.constant 0 : index
    %c0_93 = arith.constant 0 : index
    %225 = vector.load %arg6[%c1_91, %c0_92, %c0_93] : memref<2x1x128xf32, #tpu.memory_space<vmem>>, vector<1x1x128xf32>
    %226 = vector.shape_cast %225 : vector<1x1x128xf32> to vector<1x128xf32>
    %227 = vector.broadcast %226 : vector<1x128xf32> to vector<8x128xf32>
    %228 = arith.addf %189, %227 : vector<8x128xf32>
    %229 = vector.extract_strided_slice %222 {offsets = [0, 0], sizes = [8, 32], strides = [1, 1]} : vector<8x384xf32> to vector<8x32xf32>
    %230 = vector.extract_strided_slice %222 {offsets = [0, 128], sizes = [8, 32], strides = [1, 1]} : vector<8x384xf32> to vector<8x32xf32>
    %231 = vector.extract_strided_slice %222 {offsets = [0, 256], sizes = [8, 32], strides = [1, 1]} : vector<8x384xf32> to vector<8x32xf32>
    %232 = tpu.transpose %230, [1, 0] : vector<8x32xf32> -> vector<32x8xf32>
    %cst_94 = arith.constant dense<0.000000e+00> : vector<8x8xf32>
    %233 = tpu.matmul %229, %232, %cst_94 {dimension_numbers = #tpu.dot_dimension_numbers<[1], [0], [0], [1], [0, 0, 1, 1], [], []>} : vector<8x32xf32>, vector<32x8xf32>, vector<8x8xf32> -> vector<8x8xf32>
    %cst_95 = arith.constant 0.353553385 : f32
    %234 = vector.broadcast %cst_95 : f32 to vector<8x8xf32>
    %235 = arith.mulf %233, %234 : vector<8x8xf32>
    %236 = arith.addf %235, %7 : vector<8x8xf32>
    %cst_96 = arith.constant dense<0xFF800000> : vector<8xf32>
    %237 = vector.multi_reduction <maximumf>, %236, %cst_96 [1] : vector<8x8xf32> to vector<8xf32>
    %238 = vector.shape_cast %237 : vector<8xf32> to vector<8x1xf32>
    %239 = vector.broadcast %238 : vector<8x1xf32> to vector<8x8xf32>
    %240 = arith.subf %236, %239 : vector<8x8xf32>
    %241 = math.exp %240 : vector<8x8xf32>
    %cst_97 = arith.constant dense<0.000000e+00> : vector<8xf32>
    %242 = vector.multi_reduction <add>, %241, %cst_97 [1] : vector<8x8xf32> to vector<8xf32>
    %243 = vector.shape_cast %242 : vector<8xf32> to vector<8x1xf32>
    %244 = tpu.reciprocal %243 {approx = true} : vector<8x1xf32> -> vector<8x1xf32>
    %245 = vector.broadcast %244 : vector<8x1xf32> to vector<8x8xf32>
    %246 = arith.mulf %241, %245 : vector<8x8xf32>
    %cst_98 = arith.constant dense<0.000000e+00> : vector<8x32xf32>
    %247 = tpu.matmul %246, %231, %cst_98 {dimension_numbers = #tpu.dot_dimension_numbers<[1], [0], [0], [1], [0, 0, 1, 1], [], []>} : vector<8x8xf32>, vector<8x32xf32>, vector<8x32xf32> -> vector<8x32xf32>
    %248 = vector.extract_strided_slice %224 {offsets = [0, 0], sizes = [32, 128], strides = [1, 1]} : vector<128x128xf32> to vector<32x128xf32>
    %cst_99 = arith.constant dense<0.000000e+00> : vector<8x128xf32>
    %249 = tpu.matmul %247, %248, %cst_99 {dimension_numbers = #tpu.dot_dimension_numbers<[1], [0], [0], [1], [0, 0, 1, 1], [], []>} : vector<8x32xf32>, vector<32x128xf32>, vector<8x128xf32> -> vector<8x128xf32>
    %250 = arith.addf %228, %249 : vector<8x128xf32>
    %251 = vector.extract_strided_slice %222 {offsets = [0, 32], sizes = [8, 32], strides = [1, 1]} : vector<8x384xf32> to vector<8x32xf32>
    %252 = vector.extract_strided_slice %222 {offsets = [0, 160], sizes = [8, 32], strides = [1, 1]} : vector<8x384xf32> to vector<8x32xf32>
    %253 = vector.extract_strided_slice %222 {offsets = [0, 288], sizes = [8, 32], strides = [1, 1]} : vector<8x384xf32> to vector<8x32xf32>
    %254 = tpu.transpose %252, [1, 0] : vector<8x32xf32> -> vector<32x8xf32>
    %cst_100 = arith.constant dense<0.000000e+00> : vector<8x8xf32>
    %255 = tpu.matmul %251, %254, %cst_100 {dimension_numbers = #tpu.dot_dimension_numbers<[1], [0], [0], [1], [0, 0, 1, 1], [], []>} : vector<8x32xf32>, vector<32x8xf32>, vector<8x8xf32> -> vector<8x8xf32>
    %cst_101 = arith.constant 0.353553385 : f32
    %256 = vector.broadcast %cst_101 : f32 to vector<8x8xf32>
    %257 = arith.mulf %255, %256 : vector<8x8xf32>
    %258 = arith.addf %257, %7 : vector<8x8xf32>
    %cst_102 = arith.constant dense<0xFF800000> : vector<8xf32>
    %259 = vector.multi_reduction <maximumf>, %258, %cst_102 [1] : vector<8x8xf32> to vector<8xf32>
    %260 = vector.shape_cast %259 : vector<8xf32> to vector<8x1xf32>
    %261 = vector.broadcast %260 : vector<8x1xf32> to vector<8x8xf32>
    %262 = arith.subf %258, %261 : vector<8x8xf32>
    %263 = math.exp %262 : vector<8x8xf32>
    %cst_103 = arith.constant dense<0.000000e+00> : vector<8xf32>
    %264 = vector.multi_reduction <add>, %263, %cst_103 [1] : vector<8x8xf32> to vector<8xf32>
    %265 = vector.shape_cast %264 : vector<8xf32> to vector<8x1xf32>
    %266 = tpu.reciprocal %265 {approx = true} : vector<8x1xf32> -> vector<8x1xf32>
    %267 = vector.broadcast %266 : vector<8x1xf32> to vector<8x8xf32>
    %268 = arith.mulf %263, %267 : vector<8x8xf32>
    %cst_104 = arith.constant dense<0.000000e+00> : vector<8x32xf32>
    %269 = tpu.matmul %268, %253, %cst_104 {dimension_numbers = #tpu.dot_dimension_numbers<[1], [0], [0], [1], [0, 0, 1, 1], [], []>} : vector<8x8xf32>, vector<8x32xf32>, vector<8x32xf32> -> vector<8x32xf32>
    %270 = vector.extract_strided_slice %224 {offsets = [32, 0], sizes = [32, 128], strides = [1, 1]} : vector<128x128xf32> to vector<32x128xf32>
    %cst_105 = arith.constant dense<0.000000e+00> : vector<8x128xf32>
    %271 = tpu.matmul %269, %270, %cst_105 {dimension_numbers = #tpu.dot_dimension_numbers<[1], [0], [0], [1], [0, 0, 1, 1], [], []>} : vector<8x32xf32>, vector<32x128xf32>, vector<8x128xf32> -> vector<8x128xf32>
    %272 = arith.addf %250, %271 : vector<8x128xf32>
    %273 = vector.extract_strided_slice %222 {offsets = [0, 64], sizes = [8, 32], strides = [1, 1]} : vector<8x384xf32> to vector<8x32xf32>
    %274 = vector.extract_strided_slice %222 {offsets = [0, 192], sizes = [8, 32], strides = [1, 1]} : vector<8x384xf32> to vector<8x32xf32>
    %275 = vector.extract_strided_slice %222 {offsets = [0, 320], sizes = [8, 32], strides = [1, 1]} : vector<8x384xf32> to vector<8x32xf32>
    %276 = tpu.transpose %274, [1, 0] : vector<8x32xf32> -> vector<32x8xf32>
    %cst_106 = arith.constant dense<0.000000e+00> : vector<8x8xf32>
    %277 = tpu.matmul %273, %276, %cst_106 {dimension_numbers = #tpu.dot_dimension_numbers<[1], [0], [0], [1], [0, 0, 1, 1], [], []>} : vector<8x32xf32>, vector<32x8xf32>, vector<8x8xf32> -> vector<8x8xf32>
    %cst_107 = arith.constant 0.353553385 : f32
    %278 = vector.broadcast %cst_107 : f32 to vector<8x8xf32>
    %279 = arith.mulf %277, %278 : vector<8x8xf32>
    %280 = arith.addf %279, %7 : vector<8x8xf32>
    %cst_108 = arith.constant dense<0xFF800000> : vector<8xf32>
    %281 = vector.multi_reduction <maximumf>, %280, %cst_108 [1] : vector<8x8xf32> to vector<8xf32>
    %282 = vector.shape_cast %281 : vector<8xf32> to vector<8x1xf32>
    %283 = vector.broadcast %282 : vector<8x1xf32> to vector<8x8xf32>
    %284 = arith.subf %280, %283 : vector<8x8xf32>
    %285 = math.exp %284 : vector<8x8xf32>
    %cst_109 = arith.constant dense<0.000000e+00> : vector<8xf32>
    %286 = vector.multi_reduction <add>, %285, %cst_109 [1] : vector<8x8xf32> to vector<8xf32>
    %287 = vector.shape_cast %286 : vector<8xf32> to vector<8x1xf32>
    %288 = tpu.reciprocal %287 {approx = true} : vector<8x1xf32> -> vector<8x1xf32>
    %289 = vector.broadcast %288 : vector<8x1xf32> to vector<8x8xf32>
    %290 = arith.mulf %285, %289 : vector<8x8xf32>
    %cst_110 = arith.constant dense<0.000000e+00> : vector<8x32xf32>
    %291 = tpu.matmul %290, %275, %cst_110 {dimension_numbers = #tpu.dot_dimension_numbers<[1], [0], [0], [1], [0, 0, 1, 1], [], []>} : vector<8x8xf32>, vector<8x32xf32>, vector<8x32xf32> -> vector<8x32xf32>
    %292 = vector.extract_strided_slice %224 {offsets = [64, 0], sizes = [32, 128], strides = [1, 1]} : vector<128x128xf32> to vector<32x128xf32>
    %cst_111 = arith.constant dense<0.000000e+00> : vector<8x128xf32>
    %293 = tpu.matmul %291, %292, %cst_111 {dimension_numbers = #tpu.dot_dimension_numbers<[1], [0], [0], [1], [0, 0, 1, 1], [], []>} : vector<8x32xf32>, vector<32x128xf32>, vector<8x128xf32> -> vector<8x128xf32>
    %294 = arith.addf %272, %293 : vector<8x128xf32>
    %295 = vector.extract_strided_slice %222 {offsets = [0, 96], sizes = [8, 32], strides = [1, 1]} : vector<8x384xf32> to vector<8x32xf32>
    %296 = vector.extract_strided_slice %222 {offsets = [0, 224], sizes = [8, 32], strides = [1, 1]} : vector<8x384xf32> to vector<8x32xf32>
    %297 = vector.extract_strided_slice %222 {offsets = [0, 352], sizes = [8, 32], strides = [1, 1]} : vector<8x384xf32> to vector<8x32xf32>
    %298 = tpu.transpose %296, [1, 0] : vector<8x32xf32> -> vector<32x8xf32>
    %cst_112 = arith.constant dense<0.000000e+00> : vector<8x8xf32>
    %299 = tpu.matmul %295, %298, %cst_112 {dimension_numbers = #tpu.dot_dimension_numbers<[1], [0], [0], [1], [0, 0, 1, 1], [], []>} : vector<8x32xf32>, vector<32x8xf32>, vector<8x8xf32> -> vector<8x8xf32>
    %cst_113 = arith.constant 0.353553385 : f32
    %300 = vector.broadcast %cst_113 : f32 to vector<8x8xf32>
    %301 = arith.mulf %299, %300 : vector<8x8xf32>
    %302 = arith.addf %301, %7 : vector<8x8xf32>
    %cst_114 = arith.constant dense<0xFF800000> : vector<8xf32>
    %303 = vector.multi_reduction <maximumf>, %302, %cst_114 [1] : vector<8x8xf32> to vector<8xf32>
    %304 = vector.shape_cast %303 : vector<8xf32> to vector<8x1xf32>
    %305 = vector.broadcast %304 : vector<8x1xf32> to vector<8x8xf32>
    %306 = arith.subf %302, %305 : vector<8x8xf32>
    %307 = math.exp %306 : vector<8x8xf32>
    %cst_115 = arith.constant dense<0.000000e+00> : vector<8xf32>
    %308 = vector.multi_reduction <add>, %307, %cst_115 [1] : vector<8x8xf32> to vector<8xf32>
    %309 = vector.shape_cast %308 : vector<8xf32> to vector<8x1xf32>
    %310 = tpu.reciprocal %309 {approx = true} : vector<8x1xf32> -> vector<8x1xf32>
    %311 = vector.broadcast %310 : vector<8x1xf32> to vector<8x8xf32>
    %312 = arith.mulf %307, %311 : vector<8x8xf32>
    %cst_116 = arith.constant dense<0.000000e+00> : vector<8x32xf32>
    %313 = tpu.matmul %312, %297, %cst_116 {dimension_numbers = #tpu.dot_dimension_numbers<[1], [0], [0], [1], [0, 0, 1, 1], [], []>} : vector<8x8xf32>, vector<8x32xf32>, vector<8x32xf32> -> vector<8x32xf32>
    %314 = vector.extract_strided_slice %224 {offsets = [96, 0], sizes = [32, 128], strides = [1, 1]} : vector<128x128xf32> to vector<32x128xf32>
    %cst_117 = arith.constant dense<0.000000e+00> : vector<8x128xf32>
    %315 = tpu.matmul %313, %314, %cst_117 {dimension_numbers = #tpu.dot_dimension_numbers<[1], [0], [0], [1], [0, 0, 1, 1], [], []>} : vector<8x32xf32>, vector<32x128xf32>, vector<8x128xf32> -> vector<8x128xf32>
    %316 = arith.addf %294, %315 : vector<8x128xf32>
    %c1_118 = arith.constant 1 : index
    %c0_119 = arith.constant 0 : index
    %c0_120 = arith.constant 0 : index
    %317 = vector.load %arg7[%c1_118, %c0_119, %c0_120] : memref<2x2x128xf32, #tpu.memory_space<vmem>>, vector<1x2x128xf32>
    %318 = vector.shape_cast %317 : vector<1x2x128xf32> to vector<2x128xf32>
    %319 = vector.extract_strided_slice %318 {offsets = [0, 0], sizes = [1, 128], strides = [1, 1]} : vector<2x128xf32> to vector<1x128xf32>
    %320 = vector.extract_strided_slice %318 {offsets = [1, 0], sizes = [1, 128], strides = [1, 1]} : vector<2x128xf32> to vector<1x128xf32>
    %cst_121 = arith.constant dense<0.000000e+00> : vector<8xf32>
    %321 = vector.multi_reduction <add>, %316, %cst_121 [1] : vector<8x128xf32> to vector<8xf32>
    %322 = vector.shape_cast %321 : vector<8xf32> to vector<8x1xf32>
    %cst_122 = arith.constant 3.125000e-02 : f32
    %323 = vector.broadcast %cst_122 : f32 to vector<8x1xf32>
    %324 = arith.mulf %322, %323 : vector<8x1xf32>
    %325 = arith.mulf %316, %316 : vector<8x128xf32>
    %cst_123 = arith.constant dense<0.000000e+00> : vector<8xf32>
    %326 = vector.multi_reduction <add>, %325, %cst_123 [1] : vector<8x128xf32> to vector<8xf32>
    %327 = vector.shape_cast %326 : vector<8xf32> to vector<8x1xf32>
    %cst_124 = arith.constant 3.125000e-02 : f32
    %328 = vector.broadcast %cst_124 : f32 to vector<8x1xf32>
    %329 = arith.mulf %327, %328 : vector<8x1xf32>
    %330 = arith.mulf %324, %324 : vector<8x1xf32>
    %331 = arith.subf %329, %330 : vector<8x1xf32>
    %332 = vector.broadcast %324 : vector<8x1xf32> to vector<8x128xf32>
    %333 = arith.subf %316, %332 : vector<8x128xf32>
    %cst_125 = arith.constant 9.99999974E-6 : f32
    %334 = vector.broadcast %cst_125 : f32 to vector<8x1xf32>
    %335 = arith.addf %331, %334 : vector<8x1xf32>
    %336 = math.rsqrt %335 : vector<8x1xf32>
    %337 = vector.broadcast %336 : vector<8x1xf32> to vector<8x128xf32>
    %338 = arith.mulf %333, %337 : vector<8x128xf32>
    %339 = vector.broadcast %319 : vector<1x128xf32> to vector<8x128xf32>
    %340 = arith.mulf %338, %339 : vector<8x128xf32>
    %341 = vector.broadcast %320 : vector<1x128xf32> to vector<8x128xf32>
    %342 = arith.addf %340, %341 : vector<8x128xf32>
    %c1_126 = arith.constant 1 : index
    %c0_127 = arith.constant 0 : index
    %c0_128 = arith.constant 0 : index
    %343 = vector.load %arg8[%c1_126, %c0_127, %c0_128] : memref<2x128x128xf32, #tpu.memory_space<vmem>>, vector<1x128x128xf32>
    %344 = vector.shape_cast %343 : vector<1x128x128xf32> to vector<128x128xf32>
    %cst_129 = arith.constant dense<0.000000e+00> : vector<8x128xf32>
    %345 = tpu.matmul %342, %344, %cst_129 {dimension_numbers = #tpu.dot_dimension_numbers<[1], [0], [0], [1], [0, 0, 1, 1], [], []>} : vector<8x128xf32>, vector<128x128xf32>, vector<8x128xf32> -> vector<8x128xf32>
    %c1_130 = arith.constant 1 : index
    %c0_131 = arith.constant 0 : index
    %c0_132 = arith.constant 0 : index
    %346 = vector.load %arg9[%c1_130, %c0_131, %c0_132] : memref<2x1x128xf32, #tpu.memory_space<vmem>>, vector<1x1x128xf32>
    %347 = vector.shape_cast %346 : vector<1x1x128xf32> to vector<1x128xf32>
    %348 = vector.broadcast %347 : vector<1x128xf32> to vector<8x128xf32>
    %349 = arith.addf %345, %348 : vector<8x128xf32>
    %cst_133 = arith.constant 0.636619746 : f32
    %350 = math.sqrt %cst_133 : f32
    %cst_134 = arith.constant 5.000000e-01 : f32
    %351 = vector.broadcast %cst_134 : f32 to vector<8x128xf32>
    %352 = arith.mulf %351, %349 : vector<8x128xf32>
    %cst_135 = arith.constant 4.471500e-02 : f32
    %353 = vector.broadcast %cst_135 : f32 to vector<8x128xf32>
    %354 = arith.mulf %353, %349 : vector<8x128xf32>
    %355 = arith.mulf %354, %349 : vector<8x128xf32>
    %356 = arith.mulf %355, %349 : vector<8x128xf32>
    %357 = arith.addf %349, %356 : vector<8x128xf32>
    %358 = vector.broadcast %350 : f32 to vector<8x128xf32>
    %359 = arith.mulf %358, %357 : vector<8x128xf32>
    %360 = math.tanh %359 : vector<8x128xf32>
    %cst_136 = arith.constant 1.000000e+00 : f32
    %361 = vector.broadcast %cst_136 : f32 to vector<8x128xf32>
    %362 = arith.addf %361, %360 : vector<8x128xf32>
    %363 = arith.mulf %352, %362 : vector<8x128xf32>
    %c1_137 = arith.constant 1 : index
    %c0_138 = arith.constant 0 : index
    %c0_139 = arith.constant 0 : index
    %364 = vector.load %arg10[%c1_137, %c0_138, %c0_139] : memref<2x128x128xf32, #tpu.memory_space<vmem>>, vector<1x128x128xf32>
    %365 = vector.shape_cast %364 : vector<1x128x128xf32> to vector<128x128xf32>
    %cst_140 = arith.constant dense<0.000000e+00> : vector<8x128xf32>
    %366 = tpu.matmul %363, %365, %cst_140 {dimension_numbers = #tpu.dot_dimension_numbers<[1], [0], [0], [1], [0, 0, 1, 1], [], []>} : vector<8x128xf32>, vector<128x128xf32>, vector<8x128xf32> -> vector<8x128xf32>
    %367 = arith.addf %316, %366 : vector<8x128xf32>
    %c1_141 = arith.constant 1 : index
    %c0_142 = arith.constant 0 : index
    %c0_143 = arith.constant 0 : index
    %368 = vector.load %arg11[%c1_141, %c0_142, %c0_143] : memref<2x1x128xf32, #tpu.memory_space<vmem>>, vector<1x1x128xf32>
    %369 = vector.shape_cast %368 : vector<1x1x128xf32> to vector<1x128xf32>
    %370 = vector.broadcast %369 : vector<1x128xf32> to vector<8x128xf32>
    %371 = arith.addf %367, %370 : vector<8x128xf32>
    %c0_144 = arith.constant 0 : index
    %c0_145 = arith.constant 0 : index
    %372 = vector.load %arg12[%c0_144, %c0_145] : memref<2x128xf32, #tpu.memory_space<vmem>>, vector<2x128xf32>
    %373 = vector.extract_strided_slice %372 {offsets = [0, 0], sizes = [1, 128], strides = [1, 1]} : vector<2x128xf32> to vector<1x128xf32>
    %374 = vector.extract_strided_slice %372 {offsets = [1, 0], sizes = [1, 128], strides = [1, 1]} : vector<2x128xf32> to vector<1x128xf32>
    %cst_146 = arith.constant dense<0.000000e+00> : vector<8xf32>
    %375 = vector.multi_reduction <add>, %371, %cst_146 [1] : vector<8x128xf32> to vector<8xf32>
    %376 = vector.shape_cast %375 : vector<8xf32> to vector<8x1xf32>
    %cst_147 = arith.constant 3.125000e-02 : f32
    %377 = vector.broadcast %cst_147 : f32 to vector<8x1xf32>
    %378 = arith.mulf %376, %377 : vector<8x1xf32>
    %379 = arith.mulf %371, %371 : vector<8x128xf32>
    %cst_148 = arith.constant dense<0.000000e+00> : vector<8xf32>
    %380 = vector.multi_reduction <add>, %379, %cst_148 [1] : vector<8x128xf32> to vector<8xf32>
    %381 = vector.shape_cast %380 : vector<8xf32> to vector<8x1xf32>
    %cst_149 = arith.constant 3.125000e-02 : f32
    %382 = vector.broadcast %cst_149 : f32 to vector<8x1xf32>
    %383 = arith.mulf %381, %382 : vector<8x1xf32>
    %384 = arith.mulf %378, %378 : vector<8x1xf32>
    %385 = arith.subf %383, %384 : vector<8x1xf32>
    %386 = vector.broadcast %378 : vector<8x1xf32> to vector<8x128xf32>
    %387 = arith.subf %371, %386 : vector<8x128xf32>
    %cst_150 = arith.constant 9.99999974E-6 : f32
    %388 = vector.broadcast %cst_150 : f32 to vector<8x1xf32>
    %389 = arith.addf %385, %388 : vector<8x1xf32>
    %390 = math.rsqrt %389 : vector<8x1xf32>
    %391 = vector.broadcast %390 : vector<8x1xf32> to vector<8x128xf32>
    %392 = arith.mulf %387, %391 : vector<8x128xf32>
    %393 = vector.broadcast %373 : vector<1x128xf32> to vector<8x128xf32>
    %394 = arith.mulf %392, %393 : vector<8x128xf32>
    %395 = vector.broadcast %374 : vector<1x128xf32> to vector<8x128xf32>
    %396 = arith.addf %394, %395 : vector<8x128xf32>
    %c0_151 = arith.constant 0 : index
    %c0_152 = arith.constant 0 : index
    %397 = vector.load %arg13[%c0_151, %c0_152] : memref<128x128xf32, #tpu.memory_space<vmem>>, vector<128x128xf32>
    %cst_153 = arith.constant dense<0.000000e+00> : vector<8x128xf32>
    %398 = tpu.matmul %396, %397, %cst_153 {dimension_numbers = #tpu.dot_dimension_numbers<[1], [0], [0], [1], [0, 0, 1, 1], [], []>} : vector<8x128xf32>, vector<128x128xf32>, vector<8x128xf32> -> vector<8x128xf32>
    %c0_154 = arith.constant 0 : index
    %c0_155 = arith.constant 0 : index
    %c0_156 = arith.constant 0 : index
    %399 = vector.load %arg14[%c0_154, %c0_155, %c0_156] : memref<1x8x128xf32, #tpu.memory_space<vmem>>, vector<1x8x128xf32>
    %400 = vector.shape_cast %399 : vector<1x8x128xf32> to vector<8x128xf32>
    %401 = vector.shape_cast %398 : vector<8x128xf32> to vector<1x8x128xf32>
    tpu.vector_store %arg14[%c0_154, %c0_155, %c0_156], %401 {strides = array<i32>} : memref<1x8x128xf32, #tpu.memory_space<vmem>>, vector<1x8x128xf32>,
    return
  }
  func.func @transform_0(%arg0: i32) -> (i32, i32, i32) {
    %c0_i32 = arith.constant 0 : i32
    %c0_i32_0 = arith.constant 0 : i32
    %c0_i32_1 = arith.constant 0 : i32
    return %arg0, %c0_i32, %c0_i32_0 : i32, i32, i32
  }
  func.func @transform_1(%arg0: i32) -> (i32, i32, i32) {
    %c0_i32 = arith.constant 0 : i32
    %c0_i32_0 = arith.constant 0 : i32
    %c0_i32_1 = arith.constant 0 : i32
    %c0_i32_2 = arith.constant 0 : i32
    return %c0_i32, %c0_i32_0, %c0_i32_1 : i32, i32, i32
  }
  func.func @transform_2(%arg0: i32) -> (i32, i32, i32) {
    %c0_i32 = arith.constant 0 : i32
    %c0_i32_0 = arith.constant 0 : i32
    %c0_i32_1 = arith.constant 0 : i32
    %c0_i32_2 = arith.constant 0 : i32
    return %c0_i32, %c0_i32_0, %c0_i32_1 : i32, i32, i32
  }
  func.func @transform_3(%arg0: i32) -> (i32, i32, i32) {
    %c0_i32 = arith.constant 0 : i32
    %c0_i32_0 = arith.constant 0 : i32
    %c0_i32_1 = arith.constant 0 : i32
    %c0_i32_2 = arith.constant 0 : i32
    return %c0_i32, %c0_i32_0, %c0_i32_1 : i32, i32, i32
  }
  func.func @transform_4(%arg0: i32) -> (i32, i32, i32) {
    %c0_i32 = arith.constant 0 : i32
    %c0_i32_0 = arith.constant 0 : i32
    %c0_i32_1 = arith.constant 0 : i32
    %c0_i32_2 = arith.constant 0 : i32
    return %c0_i32, %c0_i32_0, %c0_i32_1 : i32, i32, i32
  }
  func.func @transform_5(%arg0: i32) -> (i32, i32, i32) {
    %c0_i32 = arith.constant 0 : i32
    %c0_i32_0 = arith.constant 0 : i32
    %c0_i32_1 = arith.constant 0 : i32
    %c0_i32_2 = arith.constant 0 : i32
    return %c0_i32, %c0_i32_0, %c0_i32_1 : i32, i32, i32
  }
  func.func @transform_6(%arg0: i32) -> (i32, i32, i32) {
    %c0_i32 = arith.constant 0 : i32
    %c0_i32_0 = arith.constant 0 : i32
    %c0_i32_1 = arith.constant 0 : i32
    %c0_i32_2 = arith.constant 0 : i32
    return %c0_i32, %c0_i32_0, %c0_i32_1 : i32, i32, i32
  }
  func.func @transform_7(%arg0: i32) -> (i32, i32, i32) {
    %c0_i32 = arith.constant 0 : i32
    %c0_i32_0 = arith.constant 0 : i32
    %c0_i32_1 = arith.constant 0 : i32
    %c0_i32_2 = arith.constant 0 : i32
    return %c0_i32, %c0_i32_0, %c0_i32_1 : i32, i32, i32
  }
  func.func @transform_8(%arg0: i32) -> (i32, i32, i32) {
    %c0_i32 = arith.constant 0 : i32
    %c0_i32_0 = arith.constant 0 : i32
    %c0_i32_1 = arith.constant 0 : i32
    %c0_i32_2 = arith.constant 0 : i32
    return %c0_i32, %c0_i32_0, %c0_i32_1 : i32, i32, i32
  }
  func.func @transform_9(%arg0: i32) -> (i32, i32, i32) {
    %c0_i32 = arith.constant 0 : i32
    %c0_i32_0 = arith.constant 0 : i32
    %c0_i32_1 = arith.constant 0 : i32
    %c0_i32_2 = arith.constant 0 : i32
    return %c0_i32, %c0_i32_0, %c0_i32_1 : i32, i32, i32
  }
  func.func @transform_10(%arg0: i32) -> (i32, i32, i32) {
    %c0_i32 = arith.constant 0 : i32
    %c0_i32_0 = arith.constant 0 : i32
    %c0_i32_1 = arith.constant 0 : i32
    %c0_i32_2 = arith.constant 0 : i32
    return %c0_i32, %c0_i32_0, %c0_i32_1 : i32, i32, i32
  }
  func.func @transform_11(%arg0: i32) -> (i32, i32) {
    %c0_i32 = arith.constant 0 : i32
    %c0_i32_0 = arith.constant 0 : i32
    %c0_i32_1 = arith.constant 0 : i32
    return %c0_i32, %c0_i32_0 : i32, i32
  }
  func.func @transform_12(%arg0: i32) -> (i32, i32) {
    %c0_i32 = arith.constant 0 : i32
    %c0_i32_0 = arith.constant 0 : i32
    %c0_i32_1 = arith.constant 0 : i32
    return %c0_i32, %c0_i32_0 : i32, i32
  }
  func.func @transform_13(%arg0: i32) -> (i32, i32, i32) {
    %c0_i32 = arith.constant 0 : i32
    %c0_i32_0 = arith.constant 0 : i32
    %c0_i32_1 = arith.constant 0 : i32
    return %arg0, %c0_i32, %c0_i32_0 : i32, i32, i32
  }
}

</mosaic_0001>

<llo_original>
// kernel: tpu_custom_call.1
$region0: #{tpu_custom_call.1}
  #allocation0 [shape = 'u32[]', space=smem, size = 0x4, offset = 0x4, fixed_abs, tag = 'smem constant byte address 0x4 - core index']
  #allocation1 [shape = 'u32[144,128]{1,0:T(1,128)}', space=vmem, size = 0x12000, scoped, tag = 'internal scratch']
  %s0 = inlined_call_operand.hbm [shape: f32[2,8,128], index: 0, kind: input, shape index: {}]
  %s1 = inlined_call_operand.hbm [shape: f32[2,2,128], index: 1, kind: input, shape index: {}]
  %s2 = inlined_call_operand.hbm [shape: f32[2,128,384], index: 2, kind: input, shape index: {}]
  %s3 = inlined_call_operand.vmem [shape: f32[2,1,384], index: 3, kind: input, shape index: {}]
  %s4 = inlined_call_operand.hbm [shape: f32[2,128,128], index: 4, kind: input, shape index: {}]
  %s5 = inlined_call_operand.vmem [shape: f32[2,1,128], index: 5, kind: input, shape index: {}]
  %s6 = inlined_call_operand.vmem [shape: f32[2,2,128], index: 6, kind: input, shape index: {}]
  %s7 = inlined_call_operand.hbm [shape: f32[2,128,128], index: 7, kind: input, shape index: {}]
  %s8 = inlined_call_operand.vmem [shape: f32[2,1,128], index: 8, kind: input, shape index: {}]
  %s9 = inlined_call_operand.hbm [shape: f32[2,128,128], index: 9, kind: input, shape index: {}]
  %s10 = inlined_call_operand.vmem [shape: f32[2,1,128], index: 10, kind: input, shape index: {}]
  %s11 = inlined_call_operand.vmem [shape: f32[2,128], index: 11, kind: input, shape index: {}]
  %s12 = inlined_call_operand.hbm [shape: f32[128,128], index: 12, kind: input, shape index: {}]
  %s13 = inlined_call_operand.hbm [shape: f32[2,8,128], index: 13, kind: output, shape index: {}]
  %s14 = sld [smem:[#allocation0]]
  $region113: #{tpu_custom_call.1} parent=0
    _
  %s16 = ssub.s32 1, %s14
  %s17 = scalar_select 0, %s16, %s14
  $region1: #{tpu_custom_call.1} parent=0
    #allocation2 [shape = 'u8[8192]{0}', space=vmem, size = 0x2000, scoped, tag = 'input window, operand 0']
    #allocation3 [shape = 's32[2]{0}', space=sflag, size = 0x8, scoped, tag = 'scoped memory for tpu_custom_call.1']
    #allocation4 [shape = 's32[2]{0}', space=sflag, size = 0x8, scoped, tag = 'scoped memory for tpu_custom_call.1']
    #allocation5 [shape = 'u8[2048]{0}', space=vmem, size = 0x800, scoped, tag = 'input window, operand 1, single buffered']
    #allocation6 [shape = 's32[1]{0}', space=sflag, size = 0x4, scoped, tag = 'scoped memory for tpu_custom_call.1']
    #allocation7 [shape = 'u8[393216]{0}', space=vmem, size = 0x60000, scoped, tag = 'input window, operand 2, single buffered']
    #allocation8 [shape = 'u8[131072]{0}', space=vmem, size = 0x20000, scoped, tag = 'input window, operand 4, single buffered']
    #allocation9 [shape = 's32[1]{0}', space=sflag, size = 0x4, scoped, tag = 'scoped memory for tpu_custom_call.1']
    #allocation10 [shape = 'u8[131072]{0}', space=vmem, size = 0x20000, scoped, tag = 'input window, operand 7, single buffered']
    #allocation11 [shape = 'u8[131072]{0}', space=vmem, size = 0x20000, scoped, tag = 'input window, operand 9, single buffered']
    #allocation12 [shape = 's32[1]{0}', space=sflag, size = 0x4, scoped, tag = 'scoped memory for tpu_custom_call.1']
    #allocation13 [shape = 'u8[65536]{0}', space=vmem, size = 0x10000, scoped, tag = 'input window, operand 12, single buffered']
    #allocation14 [shape = 'u8[8192]{0}', space=vmem, size = 0x2000, scoped, tag = 'output window, operand 0']
    %18 = vsyncpa [#allocation3], 0
    %s19 = scalar_lea.sflag [#allocation3], 1
    %20 = vsyncpa %s19, 0
    %21 = vsyncpa [#allocation6], 0
    %22 = vsyncpa [#allocation9], 0
    %23 = vsyncpa [#allocation12], 0
    %24 = vsyncpa [#allocation4], 0
    %s25 = scalar_lea.sflag [#allocation4], 1
    %26 = vsyncpa %s25, 0
    loop: start=0, step=1, limit=4
    $region2: #{tpu_custom_call.1} parent=1 // loop_pre_header
      _
    $region3: #{tpu_custom_call.1} parent=1 // loop_header
      %s28 = sphi 0, %s32
      %p29 = scmp.ge.s32.totalorder %s28, 4
      %s38 = sphi 0, %s40
      %s41 = sphi 0, %s38
      %s42 = sphi 0, %s41
      %s58 = sphi 0, %s42
      %s62 = sphi 0, %s62
      %s64 = sphi 0, %s62
      %s65 = sphi 0, %s64
      %s79 = sphi 0, %s65
      %s83 = sphi 0, %s83
      %s85 = sphi 0, %s83
      %s86 = sphi 0, %s85
      %s100 = sphi 0, %s86
      %s104 = sphi 0, %s104
      %s106 = sphi 0, %s104
      %s107 = sphi 0, %s106
      %s121 = sphi 0, %s107
      %s125 = sphi 0, %s125
      %s127 = sphi 0, %s125
      %s128 = sphi 0, %s127
      %s142 = sphi 0, %s128
      %s146 = sphi 0, %s146
      %s148 = sphi 0, %s146
      %s149 = sphi 0, %s148
      %s163 = sphi 0, %s149
      %s167 = sphi 0, %s167
      %s169 = sphi 0, %s167
      %s170 = sphi 0, %s169
      %s184 = sphi 0, %s170
      %s188 = sphi 0, %s188
      %s190 = sphi 0, %s188
      %s191 = sphi 0, %s190
      %s205 = sphi 0, %s191
      %s209 = sphi 0, %s209
      %s211 = sphi 0, %s209
      %s212 = sphi 0, %s211
      %s226 = sphi 0, %s212
      %s230 = sphi 0, %s230
      %s232 = sphi 0, %s230
      %s233 = sphi 0, %s232
      %s247 = sphi 0, %s233
      %s251 = sphi 0, %s251
      %s253 = sphi 0, %s251
      %s254 = sphi 0, %s253
      %s268 = sphi 0, %s254
      %s272 = sphi 0, %s272
      %s274 = sphi 0, %s272
      %s275 = sphi 0, %s274
      %s289 = sphi 0, %s275
      %s293 = sphi 0, %s293
      %s295 = sphi 0, %s293
      %s296 = sphi 0, %s295
      %s310 = sphi 0, %s296
      %s316 = sphi 0, %s318
      %s319 = sphi 0, %s316
      %s320 = sphi 0, %s319
      %s336 = sphi 0, %s320
    $region4: #{tpu_custom_call.1} parent=1 // loop_header_branch
      %31 = sbr.rel (%p29) target = $region8
    $region5: #{tpu_custom_call.1} parent=1 // loop_body
      %s33 = ssub.s32 %s28, 1
      %s34 = ssub.s32 %s28, 2
      %s35 = sadd.s32 %s28, 1
      %s36 = ssub.s32 %s28, %s35
      %p37 = scmp.eq.s32.totalorder %s36, 0
      %s39 = sadd.s32 %s38, 1
      %s40 = scalar_select %p37, %s38, %s39
      %p43 = pneg %p37
      %p44 = scmp.eq.s32.totalorder %s28, 1
      %p45 = por %p43, %p44
      %p46 = scmp.ne.s32.totalorder %s38, %s41
      %p47 = scmp.eq.s32.totalorder %s28, 0
      %p48 = por %p46, %p47
      %p49 = scmp.ne.s32.totalorder %s38, %s41
      %p50 = scmp.eq.s32.totalorder %s33, 1
      %p51 = por %p49, %p50
      %p52 = scmp.ne.s32.totalorder %s41, %s42
      %p53 = scmp.eq.s32.totalorder %s33, 0
      %p54 = por %p52, %p53
      %p55 = scmp.ne.s32.totalorder %s41, %s42
      %p56 = scmp.eq.s32.totalorder %s34, 1
      %p57 = por %p55, %p56
      %p59 = scmp.ne.s32.totalorder %s42, %s58
      %p60 = scmp.eq.s32.totalorder %s34, 0
      %p61 = por %p59, %p60
      %s63 = sadd.s32 %s62, 1
      %p66 = scmp.eq.s32.totalorder %s28, 1
      %p67 = scmp.ne.s32.totalorder %s62, %s64
      %p68 = scmp.eq.s32.totalorder %s28, 0
      %p69 = por %p67, %p68
      %p70 = scmp.ne.s32.totalorder %s62, %s64
      %p71 = scmp.eq.s32.totalorder %s33, 1
      %p72 = por %p70, %p71
      %p73 = scmp.ne.s32.totalorder %s64, %s65
      %p74 = scmp.eq.s32.totalorder %s33, 0
      %p75 = por %p73, %p74
      %p76 = scmp.ne.s32.totalorder %s64, %s65
      %p77 = scmp.eq.s32.totalorder %s34, 1
      %p78 = por %p76, %p77
      %p80 = scmp.ne.s32.totalorder %s65, %s79
      %p81 = scmp.eq.s32.totalorder %s34, 0
      %p82 = por %p80, %p81
      %s84 = sadd.s32 %s83, 1
      %p87 = scmp.eq.s32.totalorder %s28, 1
      %p88 = scmp.ne.s32.totalorder %s83, %s85
      %p89 = scmp.eq.s32.totalorder %s28, 0
      %p90 = por %p88, %p89
      %p91 = scmp.ne.s32.totalorder %s83, %s85
      %p92 = scmp.eq.s32.totalorder %s33, 1
      %p93 = por %p91, %p92
      %p94 = scmp.ne.s32.totalorder %s85, %s86
      %p95 = scmp.eq.s32.totalorder %s33, 0
      %p96 = por %p94, %p95
      %p97 = scmp.ne.s32.totalorder %s85, %s86
      %p98 = scmp.eq.s32.totalorder %s34, 1
      %p99 = por %p97, %p98
      %p101 = scmp.ne.s32.totalorder %s86, %s100
      %p102 = scmp.eq.s32.totalorder %s34, 0
      %p103 = por %p101, %p102
      %s105 = sadd.s32 %s104, 1
      %p108 = scmp.eq.s32.totalorder %s28, 1
      %p109 = scmp.ne.s32.totalorder %s104, %s106
      %p110 = scmp.eq.s32.totalorder %s28, 0
      %p111 = por %p109, %p110
      %p112 = scmp.ne.s32.totalorder %s104, %s106
      %p113 = scmp.eq.s32.totalorder %s33, 1
      %p114 = por %p112, %p113
      %p115 = scmp.ne.s32.totalorder %s106, %s107
      %p116 = scmp.eq.s32.totalorder %s33, 0
      %p117 = por %p115, %p116
      %p118 = scmp.ne.s32.totalorder %s106, %s107
      %p119 = scmp.eq.s32.totalorder %s34, 1
      %p120 = por %p118, %p119
      %p122 = scmp.ne.s32.totalorder %s107, %s121
      %p123 = scmp.eq.s32.totalorder %s34, 0
      %p124 = por %p122, %p123
      %s126 = sadd.s32 %s125, 1
      %p129 = scmp.eq.s32.totalorder %s28, 1
      %p130 = scmp.ne.s32.totalorder %s125, %s127
      %p131 = scmp.eq.s32.totalorder %s28, 0
      %p132 = por %p130, %p131
      %p133 = scmp.ne.s32.totalorder %s125, %s127
      %p134 = scmp.eq.s32.totalorder %s33, 1
      %p135 = por %p133, %p134
      %p136 = scmp.ne.s32.totalorder %s127, %s128
      %p137 = scmp.eq.s32.totalorder %s33, 0
      %p138 = por %p136, %p137
      %p139 = scmp.ne.s32.totalorder %s127, %s128
      %p140 = scmp.eq.s32.totalorder %s34, 1
      %p141 = por %p139, %p140
      %p143 = scmp.ne.s32.totalorder %s128, %s142
      %p144 = scmp.eq.s32.totalorder %s34, 0
      %p145 = por %p143, %p144
      %s147 = sadd.s32 %s146, 1
      %p150 = scmp.eq.s32.totalorder %s28, 1
      %p151 = scmp.ne.s32.totalorder %s146, %s148
      %p152 = scmp.eq.s32.totalorder %s28, 0
      %p153 = por %p151, %p152
      %p154 = scmp.ne.s32.totalorder %s146, %s148
      %p155 = scmp.eq.s32.totalorder %s33, 1
      %p156 = por %p154, %p155
      %p157 = scmp.ne.s32.totalorder %s148, %s149
      %p158 = scmp.eq.s32.totalorder %s33, 0
      %p159 = por %p157, %p158
      %p160 = scmp.ne.s32.totalorder %s148, %s149
      %p161 = scmp.eq.s32.totalorder %s34, 1
      %p162 = por %p160, %p161
      %p164 = scmp.ne.s32.totalorder %s149, %s163
      %p165 = scmp.eq.s32.totalorder %s34, 0
      %p166 = por %p164, %p165
      %s168 = sadd.s32 %s167, 1
      %p171 = scmp.eq.s32.totalorder %s28, 1
      %p172 = scmp.ne.s32.totalorder %s167, %s169
      %p173 = scmp.eq.s32.totalorder %s28, 0
      %p174 = por %p172, %p173
      %p175 = scmp.ne.s32.totalorder %s167, %s169
      %p176 = scmp.eq.s32.totalorder %s33, 1
      %p177 = por %p175, %p176
      %p178 = scmp.ne.s32.totalorder %s169, %s170
      %p179 = scmp.eq.s32.totalorder %s33, 0
      %p180 = por %p178, %p179
      %p181 = scmp.ne.s32.totalorder %s169, %s170
      %p182 = scmp.eq.s32.totalorder %s34, 1
      %p183 = por %p181, %p182
      %p185 = scmp.ne.s32.totalorder %s170, %s184
      %p186 = scmp.eq.s32.totalorder %s34, 0
      %p187 = por %p185, %p186
      %s189 = sadd.s32 %s188, 1
      %p192 = scmp.eq.s32.totalorder %s28, 1
      %p193 = scmp.ne.s32.totalorder %s188, %s190
      %p194 = scmp.eq.s32.totalorder %s28, 0
      %p195 = por %p193, %p194
      %p196 = scmp.ne.s32.totalorder %s188, %s190
      %p197 = scmp.eq.s32.totalorder %s33, 1
      %p198 = por %p196, %p197
      %p199 = scmp.ne.s32.totalorder %s190, %s191
      %p200 = scmp.eq.s32.totalorder %s33, 0
      %p201 = por %p199, %p200
      %p202 = scmp.ne.s32.totalorder %s190, %s191
      %p203 = scmp.eq.s32.totalorder %s34, 1
      %p204 = por %p202, %p203
      %p206 = scmp.ne.s32.totalorder %s191, %s205
      %p207 = scmp.eq.s32.totalorder %s34, 0
      %p208 = por %p206, %p207
      %s210 = sadd.s32 %s209, 1
      %p213 = scmp.eq.s32.totalorder %s28, 1
      %p214 = scmp.ne.s32.totalorder %s209, %s211
      %p215 = scmp.eq.s32.totalorder %s28, 0
      %p216 = por %p214, %p215
      %p217 = scmp.ne.s32.totalorder %s209, %s211
      %p218 = scmp.eq.s32.totalorder %s33, 1
      %p219 = por %p217, %p218
      %p220 = scmp.ne.s32.totalorder %s211, %s212
      %p221 = scmp.eq.s32.totalorder %s33, 0
      %p222 = por %p220, %p221
      %p223 = scmp.ne.s32.totalorder %s211, %s212
      %p224 = scmp.eq.s32.totalorder %s34, 1
      %p225 = por %p223, %p224
      %p227 = scmp.ne.s32.totalorder %s212, %s226
      %p228 = scmp.eq.s32.totalorder %s34, 0
      %p229 = por %p227, %p228
      %s231 = sadd.s32 %s230, 1
      %p234 = scmp.eq.s32.totalorder %s28, 1
      %p235 = scmp.ne.s32.totalorder %s230, %s232
      %p236 = scmp.eq.s32.totalorder %s28, 0
      %p237 = por %p235, %p236
      %p238 = scmp.ne.s32.totalorder %s230, %s232
      %p239 = scmp.eq.s32.totalorder %s33, 1
      %p240 = por %p238, %p239
      %p241 = scmp.ne.s32.totalorder %s232, %s233
      %p242 = scmp.eq.s32.totalorder %s33, 0
      %p243 = por %p241, %p242
      %p244 = scmp.ne.s32.totalorder %s232, %s233
      %p245 = scmp.eq.s32.totalorder %s34, 1
      %p246 = por %p244, %p245
      %p248 = scmp.ne.s32.totalorder %s233, %s247
      %p249 = scmp.eq.s32.totalorder %s34, 0
      %p250 = por %p248, %p249
      %s252 = sadd.s32 %s251, 1
      %p255 = scmp.eq.s32.totalorder %s28, 1
      %p256 = scmp.ne.s32.totalorder %s251, %s253
      %p257 = scmp.eq.s32.totalorder %s28, 0
      %p258 = por %p256, %p257
      %p259 = scmp.ne.s32.totalorder %s251, %s253
      %p260 = scmp.eq.s32.totalorder %s33, 1
      %p261 = por %p259, %p260
      %p262 = scmp.ne.s32.totalorder %s253, %s254
      %p263 = scmp.eq.s32.totalorder %s33, 0
      %p264 = por %p262, %p263
      %p265 = scmp.ne.s32.totalorder %s253, %s254
      %p266 = scmp.eq.s32.totalorder %s34, 1
      %p267 = por %p265, %p266
      %p269 = scmp.ne.s32.totalorder %s254, %s268
      %p270 = scmp.eq.s32.totalorder %s34, 0
      %p271 = por %p269, %p270
      %s273 = sadd.s32 %s272, 1
      %p276 = scmp.eq.s32.totalorder %s28, 1
      %p277 = scmp.ne.s32.totalorder %s272, %s274
      %p278 = scmp.eq.s32.totalorder %s28, 0
      %p279 = por %p277, %p278
      %p280 = scmp.ne.s32.totalorder %s272, %s274
      %p281 = scmp.eq.s32.totalorder %s33, 1
      %p282 = por %p280, %p281
      %p283 = scmp.ne.s32.totalorder %s274, %s275
      %p284 = scmp.eq.s32.totalorder %s33, 0
      %p285 = por %p283, %p284
      %p286 = scmp.ne.s32.totalorder %s274, %s275
      %p287 = scmp.eq.s32.totalorder %s34, 1
      %p288 = por %p286, %p287
      %p290 = scmp.ne.s32.totalorder %s275, %s289
      %p291 = scmp.eq.s32.totalorder %s34, 0
      %p292 = por %p290, %p291
      %s294 = sadd.s32 %s293, 1
      %p297 = scmp.eq.s32.totalorder %s28, 1
      %p298 = scmp.ne.s32.totalorder %s293, %s295
      %p299 = scmp.eq.s32.totalorder %s28, 0
      %p300 = por %p298, %p299
      %p301 = scmp.ne.s32.totalorder %s293, %s295
      %p302 = scmp.eq.s32.totalorder %s33, 1
      %p303 = por %p301, %p302
      %p304 = scmp.ne.s32.totalorder %s295, %s296
      %p305 = scmp.eq.s32.totalorder %s33, 0
      %p306 = por %p304, %p305
      %p307 = scmp.ne.s32.totalorder %s295, %s296
      %p308 = scmp.eq.s32.totalorder %s34, 1
      %p309 = por %p307, %p308
      %p311 = scmp.ne.s32.totalorder %s296, %s310
      %p312 = scmp.eq.s32.totalorder %s34, 0
      %p313 = por %p311, %p312
      %s314 = ssub.s32 %s28, %s35
      %p315 = scmp.eq.s32.totalorder %s314, 0
      %s317 = sadd.s32 %s316, 1
      %s318 = scalar_select %p315, %s316, %s317
      %p321 = pneg %p315
      %p322 = scmp.eq.s32.totalorder %s28, 1
      %p323 = por %p321, %p322
      %p324 = scmp.ne.s32.totalorder %s316, %s319
      %p325 = scmp.eq.s32.totalorder %s28, 0
      %p326 = por %p324, %p325
      %p327 = scmp.ne.s32.totalorder %s316, %s319
      %p328 = scmp.eq.s32.totalorder %s33, 1
      %p329 = por %p327, %p328
      %p330 = scmp.ne.s32.totalorder %s319, %s320
      %p331 = scmp.eq.s32.totalorder %s33, 0
      %p332 = por %p330, %p331
      %p333 = scmp.ne.s32.totalorder %s319, %s320
      %p334 = scmp.eq.s32.totalorder %s34, 1
      %p335 = por %p333, %p334
      %p337 = scmp.ne.s32.totalorder %s320, %s336
      %p338 = scmp.eq.s32.totalorder %s34, 0
      %p339 = por %p337, %p338
      %p340 = scmp.le.s32.totalorder 1, %s28
      %p341 = scmp.lt.s32.totalorder %s28, 3
      %p342 = pnand %p340, %p341
      %p343 = pneg %p342
      // Predicated region
      $region9: #{tpu_custom_call.1} parent=5 // pred_check
        _
      $region10: #{tpu_custom_call.1} parent=5 // pred_check_branch
        %345 = sbr.rel (%p342) target = $region12
      $region11: #{tpu_custom_call.1} parent=5 // pred_region
        %s346 = ssub.s32 %s28, 1
        // Predicated region
        $region13: #{tpu_custom_call.1} parent=11 // pred_check
          %p347 = pneg %p75
        $region14: #{tpu_custom_call.1} parent=11 // pred_check_branch
          %349 = sbr.rel (%p347) target = $region16
        $region15: #{tpu_custom_call.1} parent=11 // pred_region
          %s351 = ssub.s32 64, 64
          %352 = vsyncadd [#allocation6], %s351
          %s353 = sshll.u32 [#allocation5], 4
          %s354 = int_to_ptr.vmem [resolvable:$true] %s353
          %359 = dma.hbm_to_vmem [thread:$0]  %s1, 64, %s354, [#allocation6], 32, 32, 2
        $region16: #{tpu_custom_call.1} parent=11 // pred_fallthru
          _
        // Predicated region
        $region17: #{tpu_custom_call.1} parent=11 // pred_check
          %p360 = pneg %p96
        $region18: #{tpu_custom_call.1} parent=11 // pred_check_branch
          %362 = sbr.rel (%p360) target = $region20
        $region19: #{tpu_custom_call.1} parent=11 // pred_region
          %s364 = ssub.s32 12288, 12288
          %365 = vsyncadd [#allocation6], %s364
          %s366 = sshll.u32 [#allocation7], 4
          %s367 = int_to_ptr.vmem [resolvable:$true] %s366
          %372 = dma.hbm_to_vmem [thread:$0]  %s2, 12288, %s367, [#allocation6], 384, 384, 24
        $region20: #{tpu_custom_call.1} parent=11 // pred_fallthru
          _
        // Predicated region
        $region21: #{tpu_custom_call.1} parent=11 // pred_check
          %p373 = pneg %p117
        $region22: #{tpu_custom_call.1} parent=11 // pred_check_branch
          %375 = sbr.rel (%p373) target = $region24
        $region23: #{tpu_custom_call.1} parent=11 // pred_region
          _
        $region24: #{tpu_custom_call.1} parent=11 // pred_fallthru
          _
        // Predicated region
        $region25: #{tpu_custom_call.1} parent=11 // pred_check
          %p376 = pneg %p138
        $region26: #{tpu_custom_call.1} parent=11 // pred_check_branch
          %378 = sbr.rel (%p376) target = $region28
        $region27: #{tpu_custom_call.1} parent=11 // pred_region
          %s380 = ssub.s32 4096, 4096
          %381 = vsyncadd [#allocation9], %s380
          %s382 = sshll.u32 [#allocation8], 4
          %s383 = int_to_ptr.vmem [resolvable:$true] %s382
          %388 = dma.hbm_to_vmem [thread:$0]  %s4, 4096, %s383, [#allocation9], 128, 128, 8
        $region28: #{tpu_custom_call.1} parent=11 // pred_fallthru
          _
        // Predicated region
        $region29: #{tpu_custom_call.1} parent=11 // pred_check
          %p389 = pneg %p159
        $region30: #{tpu_custom_call.1} parent=11 // pred_check_branch
          %391 = sbr.rel (%p389) target = $region32
        $region31: #{tpu_custom_call.1} parent=11 // pred_region
          _
        $region32: #{tpu_custom_call.1} parent=11 // pred_fallthru
          _
        // Predicated region
        $region33: #{tpu_custom_call.1} parent=11 // pred_check
          %p392 = pneg %p180
        $region34: #{tpu_custom_call.1} parent=11 // pred_check_branch
          %394 = sbr.rel (%p392) target = $region36
        $region35: #{tpu_custom_call.1} parent=11 // pred_region
          _
        $region36: #{tpu_custom_call.1} parent=11 // pred_fallthru
          _
        // Predicated region
        $region37: #{tpu_custom_call.1} parent=11 // pred_check
          %p395 = pneg %p201
        $region38: #{tpu_custom_call.1} parent=11 // pred_check_branch
          %397 = sbr.rel (%p395) target = $region40
        $region39: #{tpu_custom_call.1} parent=11 // pred_region
          %s399 = ssub.s32 4096, 4096
          %400 = vsyncadd [#allocation9], %s399
          %s401 = sshll.u32 [#allocation10], 4
          %s402 = int_to_ptr.vmem [resolvable:$true] %s401
          %407 = dma.hbm_to_vmem [thread:$0]  %s7, 4096, %s402, [#allocation9], 128, 128, 8
        $region40: #{tpu_custom_call.1} parent=11 // pred_fallthru
          _
        // Predicated region
        $region41: #{tpu_custom_call.1} parent=11 // pred_check
          %p408 = pneg %p222
        $region42: #{tpu_custom_call.1} parent=11 // pred_check_branch
          %410 = sbr.rel (%p408) target = $region44
        $region43: #{tpu_custom_call.1} parent=11 // pred_region
          _
        $region44: #{tpu_custom_call.1} parent=11 // pred_fallthru
          _
        // Predicated region
        $region45: #{tpu_custom_call.1} parent=11 // pred_check
          %p411 = pneg %p243
        $region46: #{tpu_custom_call.1} parent=11 // pred_check_branch
          %413 = sbr.rel (%p411) target = $region48
        $region47: #{tpu_custom_call.1} parent=11 // pred_region
          %s415 = ssub.s32 4096, 4096
          %416 = vsyncadd [#allocation12], %s415
          %s417 = sshll.u32 [#allocation11], 4
          %s418 = int_to_ptr.vmem [resolvable:$true] %s417
          %423 = dma.hbm_to_vmem [thread:$0]  %s9, 4096, %s418, [#allocation12], 128, 128, 8
        $region48: #{tpu_custom_call.1} parent=11 // pred_fallthru
          _
        // Predicated region
        $region49: #{tpu_custom_call.1} parent=11 // pred_check
          %p424 = pneg %p264
        $region50: #{tpu_custom_call.1} parent=11 // pred_check_branch
          %426 = sbr.rel (%p424) target = $region52
        $region51: #{tpu_custom_call.1} parent=11 // pred_region
          _
        $region52: #{tpu_custom_call.1} parent=11 // pred_fallthru
          _
        // Predicated region
        $region53: #{tpu_custom_call.1} parent=11 // pred_check
          %p427 = pneg %p285
        $region54: #{tpu_custom_call.1} parent=11 // pred_check_branch
          %429 = sbr.rel (%p427) target = $region56
        $region55: #{tpu_custom_call.1} parent=11 // pred_region
          _
        $region56: #{tpu_custom_call.1} parent=11 // pred_fallthru
          _
        // Predicated region
        $region57: #{tpu_custom_call.1} parent=11 // pred_check
          %p430 = pneg %p306
        $region58: #{tpu_custom_call.1} parent=11 // pred_check_branch
          %432 = sbr.rel (%p430) target = $region60
        $region59: #{tpu_custom_call.1} parent=11 // pred_region
          %s434 = ssub.s32 2048, 2048
          %435 = vsyncadd [#allocation12], %s434
          %s436 = sshll.u32 [#allocation13], 4
          %s437 = int_to_ptr.vmem [resolvable:$true] %s436
          %442 = dma.hbm_to_vmem [thread:$0]  %s12, 2048, %s437, [#allocation12], 128, 128, 8
        $region60: #{tpu_custom_call.1} parent=11 // pred_fallthru
          _
      $region12: #{tpu_custom_call.1} parent=5 // pred_fallthru
        _
      %p443 = scmp.lt.s32.totalorder %s28, 2
      // Predicated region
      $region61: #{tpu_custom_call.1} parent=5 // pred_check
        %p444 = pneg %p443
      $region62: #{tpu_custom_call.1} parent=5 // pred_check_branch
        %446 = sbr.rel (%p444) target = $region64
      $region63: #{tpu_custom_call.1} parent=5 // pred_region
        // Predicated region
        $region65: #{tpu_custom_call.1} parent=63 // pred_check
          %p447 = pneg %p48
        $region66: #{tpu_custom_call.1} parent=63 // pred_check_branch
          %449 = sbr.rel (%p447) target = $region68
        $region67: #{tpu_custom_call.1} parent=63 // pred_region
          %s450 = sand.u32 %s38, 1
          %s451 = scalar_lea.sflag [#allocation3], %s450
          %s452 = sand.u32 %s38, 1
          %s453 = smul.addr %s452, 8
          %s454 = scalar_lea.vmem [#allocation2], %s453
          %s456 = ssub.s32 128, 128
          %457 = vsyncadd %s451, %s456
          %s458 = smul.addr %s28, 128
          %s459 = scalar_lea.hbm %s0, %s458
          %s461 = sshll.u32 %s454, 4
          %s462 = int_to_ptr.vmem [resolvable:$true] %s461
          %464 = dma.hbm_to_vmem [thread:$0]  %s459, 128, %s462, %s451
        $region68: #{tpu_custom_call.1} parent=63 // pred_fallthru
          _
      $region64: #{tpu_custom_call.1} parent=5 // pred_fallthru
        _
      %p465 = scmp.le.s32.totalorder 1, %s28
      %p466 = scmp.lt.s32.totalorder %s28, 3
      %p467 = pnand %p465, %p466
      %p468 = pneg %p467
      // Predicated region
      $region69: #{tpu_custom_call.1} parent=5 // pred_check
        _
      $region70: #{tpu_custom_call.1} parent=5 // pred_check_branch
        %470 = sbr.rel (%p467) target = $region72
      $region71: #{tpu_custom_call.1} parent=5 // pred_region
        %s471 = ssub.s32 %s28, 1
        %s472 = sand.u32 %s41, 1
        %s473 = scalar_lea.sflag [#allocation3], %s472
        %s474 = sand.u32 %s41, 1
        %s475 = smul.addr %s474, 8
        %s476 = scalar_lea.vmem [#allocation2], %s475
        // Predicated region
        $region73: #{tpu_custom_call.1} parent=71 // pred_check
          %p477 = pneg %p54
        $region74: #{tpu_custom_call.1} parent=71 // pred_check_branch
          %479 = sbr.rel (%p477) target = $region76
        $region75: #{tpu_custom_call.1} parent=71 // pred_region
          %480 = dma.done %s473, 128
        $region76: #{tpu_custom_call.1} parent=71 // pred_fallthru
          _
        // Predicated region
        $region77: #{tpu_custom_call.1} parent=71 // pred_check
          %p481 = pneg %p75
        $region78: #{tpu_custom_call.1} parent=71 // pred_check_branch
          %483 = sbr.rel (%p481) target = $region80
        $region79: #{tpu_custom_call.1} parent=71 // pred_region
          %484 = dma.done [#allocation6], 64
        $region80: #{tpu_custom_call.1} parent=71 // pred_fallthru
          _
        // Predicated region
        $region81: #{tpu_custom_call.1} parent=71 // pred_check
          %p485 = pneg %p96
        $region82: #{tpu_custom_call.1} parent=71 // pred_check_branch
          %487 = sbr.rel (%p485) target = $region84
        $region83: #{tpu_custom_call.1} parent=71 // pred_region
          %488 = dma.done [#allocation6], 12288
        $region84: #{tpu_custom_call.1} parent=71 // pred_fallthru
          _
        // Predicated region
        $region85: #{tpu_custom_call.1} parent=71 // pred_check
          %p489 = pneg %p138
        $region86: #{tpu_custom_call.1} parent=71 // pred_check_branch
          %491 = sbr.rel (%p489) target = $region88
        $region87: #{tpu_custom_call.1} parent=71 // pred_region
          %492 = dma.done [#allocation9], 4096
        $region88: #{tpu_custom_call.1} parent=71 // pred_fallthru
          _
        // Predicated region
        $region89: #{tpu_custom_call.1} parent=71 // pred_check
          %p493 = pneg %p201
        $region90: #{tpu_custom_call.1} parent=71 // pred_check_branch
          %495 = sbr.rel (%p493) target = $region92
        $region91: #{tpu_custom_call.1} parent=71 // pred_region
          %496 = dma.done [#allocation9], 4096
        $region92: #{tpu_custom_call.1} parent=71 // pred_fallthru
          _
        // Predicated region
        $region93: #{tpu_custom_call.1} parent=71 // pred_check
          %p497 = pneg %p243
        $region94: #{tpu_custom_call.1} parent=71 // pred_check_branch
          %499 = sbr.rel (%p497) target = $region96
        $region95: #{tpu_custom_call.1} parent=71 // pred_region
          %500 = dma.done [#allocation12], 4096
        $region96: #{tpu_custom_call.1} parent=71 // pred_fallthru
          _
        // Predicated region
        $region97: #{tpu_custom_call.1} parent=71 // pred_check
          %p501 = pneg %p306
        $region98: #{tpu_custom_call.1} parent=71 // pred_check_branch
          %503 = sbr.rel (%p501) target = $region100
        $region99: #{tpu_custom_call.1} parent=71 // pred_region
          %504 = dma.done [#allocation12], 2048
        $region100: #{tpu_custom_call.1} parent=71 // pred_fallthru
          _
        %s505 = sand.u32 %s41, 1
        %s506 = scalar_lea.sflag [#allocation3], %s505
        %s507 = sand.u32 %s41, 1
        %s508 = smul.addr %s507, 8
        %s509 = scalar_lea.vmem [#allocation2], %s508
        %p510 = pneg %p54
        %p511 = pneg %p51
        %p512 = pneg %p75
        %p513 = pneg %p72
        %p514 = pneg %p96
        %p515 = pneg %p93
        %p516 = pneg %p117
        %p517 = pneg %p114
        %p518 = pneg %p138
        %p519 = pneg %p135
        %p520 = pneg %p159
        %p521 = pneg %p156
        %p522 = pneg %p180
        %p523 = pneg %p177
        %p524 = pneg %p201
        %p525 = pneg %p198
        %p526 = pneg %p222
        %p527 = pneg %p219
        %p528 = pneg %p243
        %p529 = pneg %p240
        %p530 = pneg %p264
        %p531 = pneg %p261
        %p532 = pneg %p285
        %p533 = pneg %p282
        %p534 = pneg %p306
        %p535 = pneg %p303
        %p536 = pneg %p332
        %p537 = pneg %p329
        %s538 = sand.u32 %s319, 1
        %s539 = scalar_lea.sflag [#allocation4], %s538
        %s540 = sand.u32 %s319, 1
        %s541 = smul.addr %s540, 8
        %s542 = scalar_lea.vmem [#allocation14], %s541
        %v543 = vld [vmem:[%s476] sm:$0xff]
        %v544 = vlaneseq
        %v545 = vshrl.u32 %v544, 7
        %v546 = vlaneseq
        %v547 = vand.u32 %v546, 127
        %vm548 = vcmp.le.s32.totalorder %v547, %v545
        %v549 = vsel %vm548, 0.0, -1e+30
        %v550 = vld [vmem:[#allocation5] sm:$0x3]
        %551 = vadd.xlane.f32.xlu0 %v543
        %v552 = vpop.xlane.xlu0 %551
        %v553 = vmul.f32 %v552, 0.03125
        %v554 = vmul.f32 %v543, %v543
        %555 = vadd.xlane.f32.xlu0 %v554
        %v556 = vpop.xlane.xlu0 %555
        %v557 = vmul.f32 %v556, 0.03125
        %v558 = vmul.f32 %v553, %v553
        %v559 = vsub.f32 %v557, %v558
        %v560 = vsub.f32 %v543, %v553
        %v561 = vadd.f32 %v559, 1e-05
        %v562 = vrsqrt.pop %v561
        %v563 = vmul.f32 %v560, %v562
        %v564 = vlaneseq
        %v565 = vshrl.u32 %v564, 7
        %v566 = vsub.s32 0, %v565
        %v567 = vrot.slane %v550, %v566
        %v568 = vmul.f32 %v563, %v567
        %v569 = vlaneseq
        %v570 = vshrl.u32 %v569, 7
        %v571 = vsub.s32 1, %v570
        %v572 = vrot.slane %v550, %v571
        %v573 = vadd.f32 %v568, %v572
        %v574 = vld [vmem:[#allocation7] sm:$0xff]
        %v575 = vld [vmem:[#allocation7 + $0x8] sm:$0xff]
        %v576 = vld [vmem:[#allocation7 + $0x10] sm:$0xff]
        %v577 = vld [vmem:[#allocation7 + $0x18] sm:$0xff]
        %v578 = vld [vmem:[#allocation7 + $0x20] sm:$0xff]
        %v579 = vld [vmem:[#allocation7 + $0x28] sm:$0xff]
        %v580 = vld [vmem:[#allocation7 + $0x30] sm:$0xff]
        %v581 = vld [vmem:[#allocation7 + $0x38] sm:$0xff]
        %v582 = vld [vmem:[#allocation7 + $0x40] sm:$0xff]
        %v583 = vld [vmem:[#allocation7 + $0x48] sm:$0xff]
        %v584 = vld [vmem:[#allocation7 + $0x50] sm:$0xff]
        %v585 = vld [vmem:[#allocation7 + $0x58] sm:$0xff]
        %v586 = vld [vmem:[#allocation7 + $0x60] sm:$0xff]
        %v587 = vld [vmem:[#allocation7 + $0x68] sm:$0xff]
        %v588 = vld [vmem:[#allocation7 + $0x70] sm:$0xff]
        %v589 = vld [vmem:[#allocation7 + $0x78] sm:$0xff]
        %v590 = vld [vmem:[#allocation7 + $0x80] sm:$0xff]
        %v591 = vld [vmem:[#allocation7 + $0x88] sm:$0xff]
        %v592 = vld [vmem:[#allocation7 + $0x90] sm:$0xff]
        %v593 = vld [vmem:[#allocation7 + $0x98] sm:$0xff]
        %v594 = vld [vmem:[#allocation7 + $0xa0] sm:$0xff]
        %v595 = vld [vmem:[#allocation7 + $0xa8] sm:$0xff]
        %v596 = vld [vmem:[#allocation7 + $0xb0] sm:$0xff]
        %v597 = vld [vmem:[#allocation7 + $0xb8] sm:$0xff]
        %v598 = vld [vmem:[#allocation7 + $0xc0] sm:$0xff]
        %v599 = vld [vmem:[#allocation7 + $0xc8] sm:$0xff]
        %v600 = vld [vmem:[#allocation7 + $0xd0] sm:$0xff]
        %v601 = vld [vmem:[#allocation7 + $0xd8] sm:$0xff]
        %v602 = vld [vmem:[#allocation7 + $0xe0] sm:$0xff]
        %v603 = vld [vmem:[#allocation7 + $0xe8] sm:$0xff]
        %v604 = vld [vmem:[#allocation7 + $0xf0] sm:$0xff]
        %v605 = vld [vmem:[#allocation7 + $0xf8] sm:$0xff]
        %v606 = vld [vmem:[#allocation7 + $0x100] sm:$0xff]
        %v607 = vld [vmem:[#allocation7 + $0x108] sm:$0xff]
        %v608 = vld [vmem:[#allocation7 + $0x110] sm:$0xff]
        %v609 = vld [vmem:[#allocation7 + $0x118] sm:$0xff]
        %v610 = vld [vmem:[#allocation7 + $0x120] sm:$0xff]
        %v611 = vld [vmem:[#allocation7 + $0x128] sm:$0xff]
        %v612 = vld [vmem:[#allocation7 + $0x130] sm:$0xff]
        %v613 = vld [vmem:[#allocation7 + $0x138] sm:$0xff]
        %v614 = vld [vmem:[#allocation7 + $0x140] sm:$0xff]
        %v615 = vld [vmem:[#allocation7 + $0x148] sm:$0xff]
        %v616 = vld [vmem:[#allocation7 + $0x150] sm:$0xff]
        %v617 = vld [vmem:[#allocation7 + $0x158] sm:$0xff]
        %v618 = vld [vmem:[#allocation7 + $0x160] sm:$0xff]
        %v619 = vld [vmem:[#allocation7 + $0x168] sm:$0xff]
        %v620 = vld [vmem:[#allocation7 + $0x170] sm:$0xff]
        %v621 = vld [vmem:[#allocation7 + $0x178] sm:$0xff]
        %v622 = vld [vmem:[%s3] sm:$0x7]
        %v624 = vlaneseq
        %v625 = vshrl.u32 %v624, 7
        %v626 = vsub.s32 0, %v625
        %v627 = vrot.slane %v622, %v626
        %v628 = vlaneseq
        %v629 = vshrl.u32 %v628, 7
        %v630 = vsub.s32 1, %v629
        %v631 = vrot.slane %v622, %v630
        %v632 = vlaneseq
        %v633 = vshrl.u32 %v632, 7
        %v634 = vsub.s32 2, %v633
        %v635 = vrot.slane %v622, %v634
        %639 = vmatprep.subr.mxu0 %v575
        %640 = vmatpush1.msra.mxu0 %v574
        %641 = vmatprep.subr.mxu0 %v578
        %642 = vmatpush1.msra.mxu0 %v577
        %643 = vmatprep.subr.mxu0 %v581
        %644 = vmatpush1.msra.mxu0 %v580
        %645 = vmatprep.subr.mxu0 %v584
        %646 = vmatpush1.msra.mxu0 %v583
        %647 = vmatprep.subr.mxu0 %v587
        %648 = vmatpush1.msra.mxu0 %v586
        %649 = vmatprep.subr.mxu0 %v590
        %650 = vmatpush1.msra.mxu0 %v589
        %651 = vmatprep.subr.mxu0 %v593
        %652 = vmatpush1.msra.mxu0 %v592
        %653 = vmatprep.subr.mxu0 %v596
        %654 = vmatpush1.msra.mxu0 %v595
        %655 = vmatprep.subr.mxu0 %v599
        %656 = vmatpush1.msra.mxu0 %v598
        %657 = vmatprep.subr.mxu0 %v602
        %658 = vmatpush1.msra.mxu0 %v601
        %659 = vmatprep.subr.mxu0 %v605
        %660 = vmatpush1.msra.mxu0 %v604
        %661 = vmatprep.subr.mxu0 %v608
        %662 = vmatpush1.msra.mxu0 %v607
        %663 = vmatprep.subr.mxu0 %v611
        %664 = vmatpush1.msra.mxu0 %v610
        %665 = vmatprep.subr.mxu0 %v614
        %666 = vmatpush1.msra.mxu0 %v613
        %667 = vmatprep.subr.mxu0 %v617
        %668 = vmatpush1.msra.mxu0 %v616
        %669 = vmatprep.subr.mxu0 %v620
        %670 = vmatpush1.msra.mxu0 %v619
        %671 = vmatprep.subr.mxu0 0.0
        %672 = vmatpush1.msra.mxu0 0.0
        %673 = vmatprep.subr.mxu0 0.0
        %674 = vmatpush1.msra.mxu0 0.0
        %675 = vmatprep.subr.mxu0 0.0
        %676 = vmatpush1.msra.mxu0 0.0
        %677 = vmatprep.subr.mxu0 0.0
        %678 = vmatpush1.msra.mxu0 0.0
        %679 = vmatprep.subr.mxu0 0.0
        %680 = vmatpush1.msra.mxu0 0.0
        %681 = vmatprep.subr.mxu0 0.0
        %682 = vmatpush1.msra.mxu0 0.0
        %683 = vmatprep.subr.mxu0 0.0
        %684 = vmatpush1.msra.mxu0 0.0
        %685 = vmatprep.subr.mxu0 0.0
        %686 = vmatpush1.msra.mxu0 0.0
        %687 = vmatprep.subr.mxu0 0.0
        %688 = vmatpush1.msra.mxu0 0.0
        %689 = vmatprep.subr.mxu0 0.0
        %690 = vmatpush1.msra.mxu0 0.0
        %691 = vmatprep.subr.mxu0 0.0
        %692 = vmatpush1.msra.mxu0 0.0
        %693 = vmatprep.subr.mxu0 0.0
        %694 = vmatpush1.msra.mxu0 0.0
        %695 = vmatprep.subr.mxu0 0.0
        %696 = vmatpush1.msra.mxu0 0.0
        %697 = vmatprep.subr.mxu0 0.0
        %698 = vmatpush1.msra.mxu0 0.0
        %699 = vmatprep.subr.mxu0 0.0
        %700 = vmatpush1.msra.mxu0 0.0
        %701 = vmatprep.subr.mxu0 0.0
        %702 = vmatpush1.msra.mxu0 0.0
        %703 = vmatprep.mubr.f32.mxu0 0.0
        %704 = vmatmul.mubr.f32.gmra.mrb[0].mxu0 %v573
        %v705 = vpop.f32.mrb[0].mxu0
        %v706 = vadd.f32 %v627, %v705
        %v707 = vpop.f32.mrb[0].mxu0
        %v708 = vadd.f32 %v631, %v707
        %709 = vdwg.mxu0
        %710 = vmatprep.subr.mxu0 0.0
        %711 = vmatpush1.msra.mxu0 %v576
        %712 = vmatprep.subr.mxu0 0.0
        %713 = vmatpush1.msra.mxu0 %v579
        %714 = vmatprep.subr.mxu0 0.0
        %715 = vmatpush1.msra.mxu0 %v582
        %716 = vmatprep.subr.mxu0 0.0
        %717 = vmatpush1.msra.mxu0 %v585
        %718 = vmatprep.subr.mxu0 0.0
        %719 = vmatpush1.msra.mxu0 %v588
        %720 = vmatprep.subr.mxu0 0.0
        %721 = vmatpush1.msra.mxu0 %v591
        %722 = vmatprep.subr.mxu0 0.0
        %723 = vmatpush1.msra.mxu0 %v594
        %724 = vmatprep.subr.mxu0 0.0
        %725 = vmatpush1.msra.mxu0 %v597
        %726 = vmatprep.subr.mxu0 0.0
        %727 = vmatpush1.msra.mxu0 %v600
        %728 = vmatprep.subr.mxu0 0.0
        %729 = vmatpush1.msra.mxu0 %v603
        %730 = vmatprep.subr.mxu0 0.0
        %731 = vmatpush1.msra.mxu0 %v606
        %732 = vmatprep.subr.mxu0 0.0
        %733 = vmatpush1.msra.mxu0 %v609
        %734 = vmatprep.subr.mxu0 0.0
        %735 = vmatpush1.msra.mxu0 %v612
        %736 = vmatprep.subr.mxu0 0.0
        %737 = vmatpush1.msra.mxu0 %v615
        %738 = vmatprep.subr.mxu0 0.0
        %739 = vmatpush1.msra.mxu0 %v618
        %740 = vmatprep.subr.mxu0 0.0
        %741 = vmatpush1.msra.mxu0 %v621
        %742 = vmatprep.subr.mxu0 0.0
        %743 = vmatpush1.msra.mxu0 0.0
        %744 = vmatprep.subr.mxu0 0.0
        %745 = vmatpush1.msra.mxu0 0.0
        %746 = vmatprep.subr.mxu0 0.0
        %747 = vmatpush1.msra.mxu0 0.0
        %748 = vmatprep.subr.mxu0 0.0
        %749 = vmatpush1.msra.mxu0 0.0
        %750 = vmatprep.subr.mxu0 0.0
        %751 = vmatpush1.msra.mxu0 0.0
        %752 = vmatprep.subr.mxu0 0.0
        %753 = vmatpush1.msra.mxu0 0.0
        %754 = vmatprep.subr.mxu0 0.0
        %755 = vmatpush1.msra.mxu0 0.0
        %756 = vmatprep.subr.mxu0 0.0
        %757 = vmatpush1.msra.mxu0 0.0
        %758 = vmatprep.subr.mxu0 0.0
        %759 = vmatpush1.msra.mxu0 0.0
        %760 = vmatprep.subr.mxu0 0.0
        %761 = vmatpush1.msra.mxu0 0.0
        %762 = vmatprep.subr.mxu0 0.0
        %763 = vmatpush1.msra.mxu0 0.0
        %764 = vmatprep.subr.mxu0 0.0
        %765 = vmatpush1.msra.mxu0 0.0
        %766 = vmatprep.subr.mxu0 0.0
        %767 = vmatpush1.msra.mxu0 0.0
        %768 = vmatprep.subr.mxu0 0.0
        %769 = vmatpush1.msra.mxu0 0.0
        %770 = vmatprep.subr.mxu0 0.0
        %771 = vmatpush1.msra.mxu0 0.0
        %772 = vmatprep.subr.mxu0 0.0
        %773 = vmatpush1.msra.mxu0 0.0
        %774 = vmatprep.mubr.f32.mxu0 0.0
        %775 = vmatmul.mubr.f32.gmra.mrb[0].mxu0 %v573
        %v776 = vpop.f32.mrb[0].mxu0
        %v777 = vadd.f32 %v635, %v776
        %v778 = vpop.f32.mrb[0].mxu0
        %779 = vdwg.mxu0
        %v780 = vld [vmem:[#allocation8] sm:$0xff]
        %v781 = vld [vmem:[#allocation8 + $0x8] sm:$0xff]
        %v782 = vld [vmem:[#allocation8 + $0x10] sm:$0xff]
        %v783 = vld [vmem:[#allocation8 + $0x18] sm:$0xff]
        %v784 = vld [vmem:[#allocation8 + $0x20] sm:$0xff]
        %v785 = vld [vmem:[#allocation8 + $0x28] sm:$0xff]
        %v786 = vld [vmem:[#allocation8 + $0x30] sm:$0xff]
        %v787 = vld [vmem:[#allocation8 + $0x38] sm:$0xff]
        %v788 = vld [vmem:[#allocation8 + $0x40] sm:$0xff]
        %v789 = vld [vmem:[#allocation8 + $0x48] sm:$0xff]
        %v790 = vld [vmem:[#allocation8 + $0x50] sm:$0xff]
        %v791 = vld [vmem:[#allocation8 + $0x58] sm:$0xff]
        %v792 = vld [vmem:[#allocation8 + $0x60] sm:$0xff]
        %v793 = vld [vmem:[#allocation8 + $0x68] sm:$0xff]
        %v794 = vld [vmem:[#allocation8 + $0x70] sm:$0xff]
        %v795 = vld [vmem:[#allocation8 + $0x78] sm:$0xff]
        %v796 = vld [vmem:[%s5] sm:$0x1]
        %v798 = vlaneseq
        %v799 = vshrl.u32 %v798, 7
        %v800 = vsub.s32 0, %v799
        %v801 = vrot.slane %v796, %v800
        %v803 = vadd.f32 %v543, %v801
        %vm804 = vcmask 261120
        %v806 = vsel %vm804, %v706, 0
        %v809 = vsel %vm804, %v708, 0
        %811 = vmatprep.subr.mxu0 0.0
        %812 = vmatpush1.xpose.msra.mxu0 %v809
        %813 = vmatprep.subr.mxu0 0.0
        %814 = vmatpush1.xpose.msra.mxu0 0.0
        %815 = vmatprep.subr.mxu0 0.0
        %816 = vmatpush1.xpose.msra.mxu0 0.0
        %817 = vmatprep.subr.mxu0 0.0
        %818 = vmatpush1.xpose.msra.mxu0 0.0
        %819 = vmatprep.subr.mxu0 0.0
        %820 = vmatpush1.xpose.msra.mxu0 0.0
        %821 = vmatprep.subr.mxu0 0.0
        %822 = vmatpush1.xpose.msra.mxu0 0.0
        %823 = vmatprep.subr.mxu0 0.0
        %824 = vmatpush1.xpose.msra.mxu0 0.0
        %825 = vmatprep.subr.mxu0 0.0
        %826 = vmatpush1.xpose.msra.mxu0 0.0
        %827 = vmatprep.subr.mxu0 0.0
        %828 = vmatpush1.xpose.msra.mxu0 0.0
        %829 = vmatprep.subr.mxu0 0.0
        %830 = vmatpush1.xpose.msra.mxu0 0.0
        %831 = vmatprep.subr.mxu0 0.0
        %832 = vmatpush1.xpose.msra.mxu0 0.0
        %833 = vmatprep.subr.mxu0 0.0
        %834 = vmatpush1.xpose.msra.mxu0 0.0
        %835 = vmatprep.subr.mxu0 0.0
        %836 = vmatpush1.xpose.msra.mxu0 0.0
        %837 = vmatprep.subr.mxu0 0.0
        %838 = vmatpush1.xpose.msra.mxu0 0.0
        %839 = vmatprep.subr.mxu0 0.0
        %840 = vmatpush1.xpose.msra.mxu0 0.0
        %841 = vmatprep.subr.mxu0 0.0
        %842 = vmatpush1.xpose.msra.mxu0 0.0
        %843 = vmatprep.subr.mxu0 0.0
        %844 = vmatpush1.xpose.msra.mxu0 0.0
        %845 = vmatprep.subr.mxu0 0.0
        %846 = vmatpush1.xpose.msra.mxu0 0.0
        %847 = vmatprep.subr.mxu0 0.0
        %848 = vmatpush1.xpose.msra.mxu0 0.0
        %849 = vmatprep.subr.mxu0 0.0
        %850 = vmatpush1.xpose.msra.mxu0 0.0
        %851 = vmatprep.subr.mxu0 0.0
        %852 = vmatpush1.xpose.msra.mxu0 0.0
        %853 = vmatprep.subr.mxu0 0.0
        %854 = vmatpush1.xpose.msra.mxu0 0.0
        %855 = vmatprep.subr.mxu0 0.0
        %856 = vmatpush1.xpose.msra.mxu0 0.0
        %857 = vmatprep.subr.mxu0 0.0
        %858 = vmatpush1.xpose.msra.mxu0 0.0
        %859 = vmatprep.subr.mxu0 0.0
        %860 = vmatpush1.xpose.msra.mxu0 0.0
        %861 = vmatprep.subr.mxu0 0.0
        %862 = vmatpush1.xpose.msra.mxu0 0.0
        %863 = vmatprep.subr.mxu0 0.0
        %864 = vmatpush1.xpose.msra.mxu0 0.0
        %865 = vmatprep.subr.mxu0 0.0
        %866 = vmatpush1.xpose.msra.mxu0 0.0
        %867 = vmatprep.subr.mxu0 0.0
        %868 = vmatpush1.xpose.msra.mxu0 0.0
        %869 = vmatprep.subr.mxu0 0.0
        %870 = vmatpush1.xpose.msra.mxu0 0.0
        %871 = vmatprep.subr.mxu0 0.0
        %872 = vmatpush1.xpose.msra.mxu0 0.0
        %873 = vmatprep.subr.mxu0 0.0
        %874 = vmatpush1.xpose.msra.mxu0 0.0
        %875 = vmatprep.mubr.f32.mxu0 0.0
        %876 = vmatmul.mubr.f32.gmra.mrb[0].mxu0 %v806
        %v877 = vpop.f32.mrb[0].mxu0
        %v878 = vadd.f32 0.0, %v877
        %v879 = vpop.f32.mrb[0].mxu0
        %880 = vdwg.mxu0
        %v881 = vmul.f32 %v878, 0.35355338
        %v882 = vadd.f32 %v881, %v549
        %vm883 = vcmask 64512
        %v884 = vsel %vm883, %v882, -inf
        %885 = vmax.xlane.f32.xlu0 %v884
        %v886 = vpop.xlane.xlu0 %885
        %v887 = vsub.f32 %v882, %v886
        %v888 = vmul.f32 %v887, 1.442695
        %v889 = vpow.pop %v888
        %v890 = vsel %vm883, %v889, 0.0
        %891 = vadd.xlane.f32.xlu0 %v890
        %v892 = vpop.xlane.xlu0 %891
        %v893 = vrcp.pop %v892
        %v894 = vmul.f32 %v889, %v893
        %v896 = vsel %vm883, %v894, 0
        %898 = vmatprep.subr.mxu0 0.0
        %899 = vmatpush1.msra.mxu0 %v777
        %900 = vmatprep.subr.mxu0 0.0
        %901 = vmatpush1.msra.mxu0 0.0
        %902 = vmatprep.subr.mxu0 0.0
        %903 = vmatpush1.msra.mxu0 0.0
        %904 = vmatprep.subr.mxu0 0.0
        %905 = vmatpush1.msra.mxu0 0.0
        %906 = vmatprep.subr.mxu0 0.0
        %907 = vmatpush1.msra.mxu0 0.0
        %908 = vmatprep.subr.mxu0 0.0
        %909 = vmatpush1.msra.mxu0 0.0
        %910 = vmatprep.subr.mxu0 0.0
        %911 = vmatpush1.msra.mxu0 0.0
        %912 = vmatprep.subr.mxu0 0.0
        %913 = vmatpush1.msra.mxu0 0.0
        %914 = vmatprep.subr.mxu0 0.0
        %915 = vmatpush1.msra.mxu0 0.0
        %916 = vmatprep.subr.mxu0 0.0
        %917 = vmatpush1.msra.mxu0 0.0
        %918 = vmatprep.subr.mxu0 0.0
        %919 = vmatpush1.msra.mxu0 0.0
        %920 = vmatprep.subr.mxu0 0.0
        %921 = vmatpush1.msra.mxu0 0.0
        %922 = vmatprep.subr.mxu0 0.0
        %923 = vmatpush1.msra.mxu0 0.0
        %924 = vmatprep.subr.mxu0 0.0
        %925 = vmatpush1.msra.mxu0 0.0
        %926 = vmatprep.subr.mxu0 0.0
        %927 = vmatpush1.msra.mxu0 0.0
        %928 = vmatprep.subr.mxu0 0.0
        %929 = vmatpush1.msra.mxu0 0.0
        %930 = vmatprep.subr.mxu0 0.0
        %931 = vmatpush1.msra.mxu0 0.0
        %932 = vmatprep.subr.mxu0 0.0
        %933 = vmatpush1.msra.mxu0 0.0
        %934 = vmatprep.subr.mxu0 0.0
        %935 = vmatpush1.msra.mxu0 0.0
        %936 = vmatprep.subr.mxu0 0.0
        %937 = vmatpush1.msra.mxu0 0.0
        %938 = vmatprep.subr.mxu0 0.0
        %939 = vmatpush1.msra.mxu0 0.0
        %940 = vmatprep.subr.mxu0 0.0
        %941 = vmatpush1.msra.mxu0 0.0
        %942 = vmatprep.subr.mxu0 0.0
        %943 = vmatpush1.msra.mxu0 0.0
        %944 = vmatprep.subr.mxu0 0.0
        %945 = vmatpush1.msra.mxu0 0.0
        %946 = vmatprep.subr.mxu0 0.0
        %947 = vmatpush1.msra.mxu0 0.0
        %948 = vmatprep.subr.mxu0 0.0
        %949 = vmatpush1.msra.mxu0 0.0
        %950 = vmatprep.subr.mxu0 0.0
        %951 = vmatpush1.msra.mxu0 0.0
        %952 = vmatprep.subr.mxu0 0.0
        %953 = vmatpush1.msra.mxu0 0.0
        %954 = vmatprep.subr.mxu0 0.0
        %955 = vmatpush1.msra.mxu0 0.0
        %956 = vmatprep.subr.mxu0 0.0
        %957 = vmatpush1.msra.mxu0 0.0
        %958 = vmatprep.subr.mxu0 0.0
        %959 = vmatpush1.msra.mxu0 0.0
        %960 = vmatprep.subr.mxu0 0.0
        %961 = vmatpush1.msra.mxu0 0.0
        %962 = vmatprep.mubr.f32.mxu0 0.0
        %963 = vmatmul.mubr.f32.gmra.mrb[0].mxu0 %v896
        %v964 = vpop.f32.mrb[0].mxu0
        %v965 = vadd.f32 0.0, %v964
        %v966 = vpop.f32.mrb[0].mxu0
        %967 = vdwg.mxu0
        %v969 = vsel %vm804, %v965, 0
        %971 = vmatprep.subr.mxu0 0.0
        %972 = vmatpush1.msra.mxu0 %v780
        %973 = vmatprep.subr.mxu0 0.0
        %974 = vmatpush1.msra.mxu0 %v781
        %975 = vmatprep.subr.mxu0 0.0
        %976 = vmatpush1.msra.mxu0 %v782
        %977 = vmatprep.subr.mxu0 0.0
        %978 = vmatpush1.msra.mxu0 %v783
        %979 = vmatprep.subr.mxu0 0.0
        %980 = vmatpush1.msra.mxu0 0.0
        %981 = vmatprep.subr.mxu0 0.0
        %982 = vmatpush1.msra.mxu0 0.0
        %983 = vmatprep.subr.mxu0 0.0
        %984 = vmatpush1.msra.mxu0 0.0
        %985 = vmatprep.subr.mxu0 0.0
        %986 = vmatpush1.msra.mxu0 0.0
        %987 = vmatprep.subr.mxu0 0.0
        %988 = vmatpush1.msra.mxu0 0.0
        %989 = vmatprep.subr.mxu0 0.0
        %990 = vmatpush1.msra.mxu0 0.0
        %991 = vmatprep.subr.mxu0 0.0
        %992 = vmatpush1.msra.mxu0 0.0
        %993 = vmatprep.subr.mxu0 0.0
        %994 = vmatpush1.msra.mxu0 0.0
        %995 = vmatprep.subr.mxu0 0.0
        %996 = vmatpush1.msra.mxu0 0.0
        %997 = vmatprep.subr.mxu0 0.0
        %998 = vmatpush1.msra.mxu0 0.0
        %999 = vmatprep.subr.mxu0 0.0
        %1000 = vmatpush1.msra.mxu0 0.0
        %1001 = vmatprep.subr.mxu0 0.0
        %1002 = vmatpush1.msra.mxu0 0.0
        %1003 = vmatprep.subr.mxu0 0.0
        %1004 = vmatpush1.msra.mxu0 0.0
        %1005 = vmatprep.subr.mxu0 0.0
        %1006 = vmatpush1.msra.mxu0 0.0
        %1007 = vmatprep.subr.mxu0 0.0
        %1008 = vmatpush1.msra.mxu0 0.0
        %1009 = vmatprep.subr.mxu0 0.0
        %1010 = vmatpush1.msra.mxu0 0.0
        %1011 = vmatprep.subr.mxu0 0.0
        %1012 = vmatpush1.msra.mxu0 0.0
        %1013 = vmatprep.subr.mxu0 0.0
        %1014 = vmatpush1.msra.mxu0 0.0
        %1015 = vmatprep.subr.mxu0 0.0
        %1016 = vmatpush1.msra.mxu0 0.0
        %1017 = vmatprep.subr.mxu0 0.0
        %1018 = vmatpush1.msra.mxu0 0.0
        %1019 = vmatprep.subr.mxu0 0.0
        %1020 = vmatpush1.msra.mxu0 0.0
        %1021 = vmatprep.subr.mxu0 0.0
        %1022 = vmatpush1.msra.mxu0 0.0
        %1023 = vmatprep.subr.mxu0 0.0
        %1024 = vmatpush1.msra.mxu0 0.0
        %1025 = vmatprep.subr.mxu0 0.0
        %1026 = vmatpush1.msra.mxu0 0.0
        %1027 = vmatprep.subr.mxu0 0.0
        %1028 = vmatpush1.msra.mxu0 0.0
        %1029 = vmatprep.subr.mxu0 0.0
        %1030 = vmatpush1.msra.mxu0 0.0
        %1031 = vmatprep.subr.mxu0 0.0
        %1032 = vmatpush1.msra.mxu0 0.0
        %1033 = vmatprep.subr.mxu0 0.0
        %1034 = vmatpush1.msra.mxu0 0.0
        %1035 = vmatprep.mubr.f32.mxu0 0.0
        %1036 = vmatmul.mubr.f32.gmra.mrb[0].mxu0 %v969
        %v1037 = vpop.f32.mrb[0].mxu0
        %v1038 = vadd.f32 0.0, %v1037
        %v1039 = vpop.f32.mrb[0].mxu0
        %1040 = vdwg.mxu0
        %v1041 = vadd.f32 %v803, %v1038
        %1042 = vrot.lane.b32.xlu0 %v706, 96
        %v1043 = vpop.permute.xlu0 %1042
        %1044 = vrot.lane.b32.xlu0 %v708, 96
        %v1045 = vpop.permute.xlu0 %1044
        %v1046 = vsel %vm804, %v1043, 0
        %v1048 = vsel %vm804, %v1045, 0
        %1050 = vmatprep.subr.mxu0 0.0
        %1051 = vmatpush1.xpose.msra.mxu0 %v1048
        %1052 = vmatprep.subr.mxu0 0.0
        %1053 = vmatpush1.xpose.msra.mxu0 0.0
        %1054 = vmatprep.subr.mxu0 0.0
        %1055 = vmatpush1.xpose.msra.mxu0 0.0
        %1056 = vmatprep.subr.mxu0 0.0
        %1057 = vmatpush1.xpose.msra.mxu0 0.0
        %1058 = vmatprep.subr.mxu0 0.0
        %1059 = vmatpush1.xpose.msra.mxu0 0.0
        %1060 = vmatprep.subr.mxu0 0.0
        %1061 = vmatpush1.xpose.msra.mxu0 0.0
        %1062 = vmatprep.subr.mxu0 0.0
        %1063 = vmatpush1.xpose.msra.mxu0 0.0
        %1064 = vmatprep.subr.mxu0 0.0
        %1065 = vmatpush1.xpose.msra.mxu0 0.0
        %1066 = vmatprep.subr.mxu0 0.0
        %1067 = vmatpush1.xpose.msra.mxu0 0.0
        %1068 = vmatprep.subr.mxu0 0.0
        %1069 = vmatpush1.xpose.msra.mxu0 0.0
        %1070 = vmatprep.subr.mxu0 0.0
        %1071 = vmatpush1.xpose.msra.mxu0 0.0
        %1072 = vmatprep.subr.mxu0 0.0
        %1073 = vmatpush1.xpose.msra.mxu0 0.0
        %1074 = vmatprep.subr.mxu0 0.0
        %1075 = vmatpush1.xpose.msra.mxu0 0.0
        %1076 = vmatprep.subr.mxu0 0.0
        %1077 = vmatpush1.xpose.msra.mxu0 0.0
        %1078 = vmatprep.subr.mxu0 0.0
        %1079 = vmatpush1.xpose.msra.mxu0 0.0
        %1080 = vmatprep.subr.mxu0 0.0
        %1081 = vmatpush1.xpose.msra.mxu0 0.0
        %1082 = vmatprep.subr.mxu0 0.0
        %1083 = vmatpush1.xpose.msra.mxu0 0.0
        %1084 = vmatprep.subr.mxu0 0.0
        %1085 = vmatpush1.xpose.msra.mxu0 0.0
        %1086 = vmatprep.subr.mxu0 0.0
        %1087 = vmatpush1.xpose.msra.mxu0 0.0
        %1088 = vmatprep.subr.mxu0 0.0
        %1089 = vmatpush1.xpose.msra.mxu0 0.0
        %1090 = vmatprep.subr.mxu0 0.0
        %1091 = vmatpush1.xpose.msra.mxu0 0.0
        %1092 = vmatprep.subr.mxu0 0.0
        %1093 = vmatpush1.xpose.msra.mxu0 0.0
        %1094 = vmatprep.subr.mxu0 0.0
        %1095 = vmatpush1.xpose.msra.mxu0 0.0
        %1096 = vmatprep.subr.mxu0 0.0
        %1097 = vmatpush1.xpose.msra.mxu0 0.0
        %1098 = vmatprep.subr.mxu0 0.0
        %1099 = vmatpush1.xpose.msra.mxu0 0.0
        %1100 = vmatprep.subr.mxu0 0.0
        %1101 = vmatpush1.xpose.msra.mxu0 0.0
        %1102 = vmatprep.subr.mxu0 0.0
        %1103 = vmatpush1.xpose.msra.mxu0 0.0
        %1104 = vmatprep.subr.mxu0 0.0
        %1105 = vmatpush1.xpose.msra.mxu0 0.0
        %1106 = vmatprep.subr.mxu0 0.0
        %1107 = vmatpush1.xpose.msra.mxu0 0.0
        %1108 = vmatprep.subr.mxu0 0.0
        %1109 = vmatpush1.xpose.msra.mxu0 0.0
        %1110 = vmatprep.subr.mxu0 0.0
        %1111 = vmatpush1.xpose.msra.mxu0 0.0
        %1112 = vmatprep.subr.mxu0 0.0
        %1113 = vmatpush1.xpose.msra.mxu0 0.0
        %1114 = vmatprep.mubr.f32.mxu0 0.0
        %1115 = vmatmul.mubr.f32.gmra.mrb[0].mxu0 %v1046
        %v1116 = vpop.f32.mrb[0].mxu0
        %v1117 = vadd.f32 0.0, %v1116
        %v1118 = vpop.f32.mrb[0].mxu0
        %1119 = vdwg.mxu0
        %v1120 = vmul.f32 %v1117, 0.35355338
        %v1121 = vadd.f32 %v1120, %v549
        %v1122 = vsel %vm883, %v1121, -inf
        %1123 = vmax.xlane.f32.xlu0 %v1122
        %v1124 = vpop.xlane.xlu0 %1123
        %v1125 = vsub.f32 %v1121, %v1124
        %v1126 = vmul.f32 %v1125, 1.442695
        %v1127 = vpow.pop %v1126
        %v1128 = vsel %vm883, %v1127, 0.0
        %1129 = vadd.xlane.f32.xlu0 %v1128
        %v1130 = vpop.xlane.xlu0 %1129
        %v1131 = vrcp.pop %v1130
        %v1132 = vmul.f32 %v1127, %v1131
        %1134 = vrot.lane.b32.xlu0 %v777, 96
        %v1135 = vpop.permute.xlu0 %1134
        %v1138 = vsel %vm883, %v1132, 0
        %1140 = vmatprep.subr.mxu0 0.0
        %1141 = vmatpush1.msra.mxu0 %v1135
        %1142 = vmatprep.subr.mxu0 0.0
        %1143 = vmatpush1.msra.mxu0 0.0
        %1144 = vmatprep.subr.mxu0 0.0
        %1145 = vmatpush1.msra.mxu0 0.0
        %1146 = vmatprep.subr.mxu0 0.0
        %1147 = vmatpush1.msra.mxu0 0.0
        %1148 = vmatprep.subr.mxu0 0.0
        %1149 = vmatpush1.msra.mxu0 0.0
        %1150 = vmatprep.subr.mxu0 0.0
        %1151 = vmatpush1.msra.mxu0 0.0
        %1152 = vmatprep.subr.mxu0 0.0
        %1153 = vmatpush1.msra.mxu0 0.0
        %1154 = vmatprep.subr.mxu0 0.0
        %1155 = vmatpush1.msra.mxu0 0.0
        %1156 = vmatprep.subr.mxu0 0.0
        %1157 = vmatpush1.msra.mxu0 0.0
        %1158 = vmatprep.subr.mxu0 0.0
        %1159 = vmatpush1.msra.mxu0 0.0
        %1160 = vmatprep.subr.mxu0 0.0
        %1161 = vmatpush1.msra.mxu0 0.0
        %1162 = vmatprep.subr.mxu0 0.0
        %1163 = vmatpush1.msra.mxu0 0.0
        %1164 = vmatprep.subr.mxu0 0.0
        %1165 = vmatpush1.msra.mxu0 0.0
        %1166 = vmatprep.subr.mxu0 0.0
        %1167 = vmatpush1.msra.mxu0 0.0
        %1168 = vmatprep.subr.mxu0 0.0
        %1169 = vmatpush1.msra.mxu0 0.0
        %1170 = vmatprep.subr.mxu0 0.0
        %1171 = vmatpush1.msra.mxu0 0.0
        %1172 = vmatprep.subr.mxu0 0.0
        %1173 = vmatpush1.msra.mxu0 0.0
        %1174 = vmatprep.subr.mxu0 0.0
        %1175 = vmatpush1.msra.mxu0 0.0
        %1176 = vmatprep.subr.mxu0 0.0
        %1177 = vmatpush1.msra.mxu0 0.0
        %1178 = vmatprep.subr.mxu0 0.0
        %1179 = vmatpush1.msra.mxu0 0.0
        %1180 = vmatprep.subr.mxu0 0.0
        %1181 = vmatpush1.msra.mxu0 0.0
        %1182 = vmatprep.subr.mxu0 0.0
        %1183 = vmatpush1.msra.mxu0 0.0
        %1184 = vmatprep.subr.mxu0 0.0
        %1185 = vmatpush1.msra.mxu0 0.0
        %1186 = vmatprep.subr.mxu0 0.0
        %1187 = vmatpush1.msra.mxu0 0.0
        %1188 = vmatprep.subr.mxu0 0.0
        %1189 = vmatpush1.msra.mxu0 0.0
        %1190 = vmatprep.subr.mxu0 0.0
        %1191 = vmatpush1.msra.mxu0 0.0
        %1192 = vmatprep.subr.mxu0 0.0
        %1193 = vmatpush1.msra.mxu0 0.0
        %1194 = vmatprep.subr.mxu0 0.0
        %1195 = vmatpush1.msra.mxu0 0.0
        %1196 = vmatprep.subr.mxu0 0.0
        %1197 = vmatpush1.msra.mxu0 0.0
        %1198 = vmatprep.subr.mxu0 0.0
        %1199 = vmatpush1.msra.mxu0 0.0
        %1200 = vmatprep.subr.mxu0 0.0
        %1201 = vmatpush1.msra.mxu0 0.0
        %1202 = vmatprep.subr.mxu0 0.0
        %1203 = vmatpush1.msra.mxu0 0.0
        %1204 = vmatprep.mubr.f32.mxu0 0.0
        %1205 = vmatmul.mubr.f32.gmra.mrb[0].mxu0 %v1138
        %v1206 = vpop.f32.mrb[0].mxu0
        %v1207 = vadd.f32 0.0, %v1206
        %v1208 = vpop.f32.mrb[0].mxu0
        %1209 = vdwg.mxu0
        %v1211 = vsel %vm804, %v1207, 0
        %1213 = vmatprep.subr.mxu0 0.0
        %1214 = vmatpush1.msra.mxu0 %v784
        %1215 = vmatprep.subr.mxu0 0.0
        %1216 = vmatpush1.msra.mxu0 %v785
        %1217 = vmatprep.subr.mxu0 0.0
        %1218 = vmatpush1.msra.mxu0 %v786
        %1219 = vmatprep.subr.mxu0 0.0
        %1220 = vmatpush1.msra.mxu0 %v787
        %1221 = vmatprep.subr.mxu0 0.0
        %1222 = vmatpush1.msra.mxu0 0.0
        %1223 = vmatprep.subr.mxu0 0.0
        %1224 = vmatpush1.msra.mxu0 0.0
        %1225 = vmatprep.subr.mxu0 0.0
        %1226 = vmatpush1.msra.mxu0 0.0
        %1227 = vmatprep.subr.mxu0 0.0
        %1228 = vmatpush1.msra.mxu0 0.0
        %1229 = vmatprep.subr.mxu0 0.0
        %1230 = vmatpush1.msra.mxu0 0.0
        %1231 = vmatprep.subr.mxu0 0.0
        %1232 = vmatpush1.msra.mxu0 0.0
        %1233 = vmatprep.subr.mxu0 0.0
        %1234 = vmatpush1.msra.mxu0 0.0
        %1235 = vmatprep.subr.mxu0 0.0
        %1236 = vmatpush1.msra.mxu0 0.0
        %1237 = vmatprep.subr.mxu0 0.0
        %1238 = vmatpush1.msra.mxu0 0.0
        %1239 = vmatprep.subr.mxu0 0.0
        %1240 = vmatpush1.msra.mxu0 0.0
        %1241 = vmatprep.subr.mxu0 0.0
        %1242 = vmatpush1.msra.mxu0 0.0
        %1243 = vmatprep.subr.mxu0 0.0
        %1244 = vmatpush1.msra.mxu0 0.0
        %1245 = vmatprep.subr.mxu0 0.0
        %1246 = vmatpush1.msra.mxu0 0.0
        %1247 = vmatprep.subr.mxu0 0.0
        %1248 = vmatpush1.msra.mxu0 0.0
        %1249 = vmatprep.subr.mxu0 0.0
        %1250 = vmatpush1.msra.mxu0 0.0
        %1251 = vmatprep.subr.mxu0 0.0
        %1252 = vmatpush1.msra.mxu0 0.0
        %1253 = vmatprep.subr.mxu0 0.0
        %1254 = vmatpush1.msra.mxu0 0.0
        %1255 = vmatprep.subr.mxu0 0.0
        %1256 = vmatpush1.msra.mxu0 0.0
        %1257 = vmatprep.subr.mxu0 0.0
        %1258 = vmatpush1.msra.mxu0 0.0
        %1259 = vmatprep.subr.mxu0 0.0
        %1260 = vmatpush1.msra.mxu0 0.0
        %1261 = vmatprep.subr.mxu0 0.0
        %1262 = vmatpush1.msra.mxu0 0.0
        %1263 = vmatprep.subr.mxu0 0.0
        %1264 = vmatpush1.msra.mxu0 0.0
        %1265 = vmatprep.subr.mxu0 0.0
        %1266 = vmatpush1.msra.mxu0 0.0
        %1267 = vmatprep.subr.mxu0 0.0
        %1268 = vmatpush1.msra.mxu0 0.0
        %1269 = vmatprep.subr.mxu0 0.0
        %1270 = vmatpush1.msra.mxu0 0.0
        %1271 = vmatprep.subr.mxu0 0.0
        %1272 = vmatpush1.msra.mxu0 0.0
        %1273 = vmatprep.subr.mxu0 0.0
        %1274 = vmatpush1.msra.mxu0 0.0
        %1275 = vmatprep.subr.mxu0 0.0
        %1276 = vmatpush1.msra.mxu0 0.0
        %1277 = vmatprep.mubr.f32.mxu0 0.0
        %1278 = vmatmul.mubr.f32.gmra.mrb[0].mxu0 %v1211
        %v1279 = vpop.f32.mrb[0].mxu0
        %v1280 = vadd.f32 0.0, %v1279
        %v1281 = vpop.f32.mrb[0].mxu0
        %1282 = vdwg.mxu0
        %v1283 = vadd.f32 %v1041, %v1280
        %1284 = vrot.lane.b32.xlu0 %v706, 64
        %v1285 = vpop.permute.xlu0 %1284
        %1286 = vrot.lane.b32.xlu0 %v708, 64
        %v1287 = vpop.permute.xlu0 %1286
        %v1288 = vsel %vm804, %v1285, 0
        %v1290 = vsel %vm804, %v1287, 0
        %1292 = vmatprep.subr.mxu0 0.0
        %1293 = vmatpush1.xpose.msra.mxu0 %v1290
        %1294 = vmatprep.subr.mxu0 0.0
        %1295 = vmatpush1.xpose.msra.mxu0 0.0
        %1296 = vmatprep.subr.mxu0 0.0
        %1297 = vmatpush1.xpose.msra.mxu0 0.0
        %1298 = vmatprep.subr.mxu0 0.0
        %1299 = vmatpush1.xpose.msra.mxu0 0.0
        %1300 = vmatprep.subr.mxu0 0.0
        %1301 = vmatpush1.xpose.msra.mxu0 0.0
        %1302 = vmatprep.subr.mxu0 0.0
        %1303 = vmatpush1.xpose.msra.mxu0 0.0
        %1304 = vmatprep.subr.mxu0 0.0
        %1305 = vmatpush1.xpose.msra.mxu0 0.0
        %1306 = vmatprep.subr.mxu0 0.0
        %1307 = vmatpush1.xpose.msra.mxu0 0.0
        %1308 = vmatprep.subr.mxu0 0.0
        %1309 = vmatpush1.xpose.msra.mxu0 0.0
        %1310 = vmatprep.subr.mxu0 0.0
        %1311 = vmatpush1.xpose.msra.mxu0 0.0
        %1312 = vmatprep.subr.mxu0 0.0
        %1313 = vmatpush1.xpose.msra.mxu0 0.0
        %1314 = vmatprep.subr.mxu0 0.0
        %1315 = vmatpush1.xpose.msra.mxu0 0.0
        %1316 = vmatprep.subr.mxu0 0.0
        %1317 = vmatpush1.xpose.msra.mxu0 0.0
        %1318 = vmatprep.subr.mxu0 0.0
        %1319 = vmatpush1.xpose.msra.mxu0 0.0
        %1320 = vmatprep.subr.mxu0 0.0
        %1321 = vmatpush1.xpose.msra.mxu0 0.0
        %1322 = vmatprep.subr.mxu0 0.0
        %1323 = vmatpush1.xpose.msra.mxu0 0.0
        %1324 = vmatprep.subr.mxu0 0.0
        %1325 = vmatpush1.xpose.msra.mxu0 0.0
        %1326 = vmatprep.subr.mxu0 0.0
        %1327 = vmatpush1.xpose.msra.mxu0 0.0
        %1328 = vmatprep.subr.mxu0 0.0
        %1329 = vmatpush1.xpose.msra.mxu0 0.0
        %1330 = vmatprep.subr.mxu0 0.0
        %1331 = vmatpush1.xpose.msra.mxu0 0.0
        %1332 = vmatprep.subr.mxu0 0.0
        %1333 = vmatpush1.xpose.msra.mxu0 0.0
        %1334 = vmatprep.subr.mxu0 0.0
        %1335 = vmatpush1.xpose.msra.mxu0 0.0
        %1336 = vmatprep.subr.mxu0 0.0
        %1337 = vmatpush1.xpose.msra.mxu0 0.0
        %1338 = vmatprep.subr.mxu0 0.0
        %1339 = vmatpush1.xpose.msra.mxu0 0.0
        %1340 = vmatprep.subr.mxu0 0.0
        %1341 = vmatpush1.xpose.msra.mxu0 0.0
        %1342 = vmatprep.subr.mxu0 0.0
        %1343 = vmatpush1.xpose.msra.mxu0 0.0
        %1344 = vmatprep.subr.mxu0 0.0
        %1345 = vmatpush1.xpose.msra.mxu0 0.0
        %1346 = vmatprep.subr.mxu0 0.0
        %1347 = vmatpush1.xpose.msra.mxu0 0.0
        %1348 = vmatprep.subr.mxu0 0.0
        %1349 = vmatpush1.xpose.msra.mxu0 0.0
        %1350 = vmatprep.subr.mxu0 0.0
        %1351 = vmatpush1.xpose.msra.mxu0 0.0
        %1352 = vmatprep.subr.mxu0 0.0
        %1353 = vmatpush1.xpose.msra.mxu0 0.0
        %1354 = vmatprep.subr.mxu0 0.0
        %1355 = vmatpush1.xpose.msra.mxu0 0.0
        %1356 = vmatprep.mubr.f32.mxu0 0.0
        %1357 = vmatmul.mubr.f32.gmra.mrb[0].mxu0 %v1288
        %v1358 = vpop.f32.mrb[0].mxu0
        %v1359 = vadd.f32 0.0, %v1358
        %v1360 = vpop.f32.mrb[0].mxu0
        %1361 = vdwg.mxu0
        %v1362 = vmul.f32 %v1359, 0.35355338
        %v1363 = vadd.f32 %v1362, %v549
        %v1364 = vsel %vm883, %v1363, -inf
        %1365 = vmax.xlane.f32.xlu0 %v1364
        %v1366 = vpop.xlane.xlu0 %1365
        %v1367 = vsub.f32 %v1363, %v1366
        %v1368 = vmul.f32 %v1367, 1.442695
        %v1369 = vpow.pop %v1368
        %v1370 = vsel %vm883, %v1369, 0.0
        %1371 = vadd.xlane.f32.xlu0 %v1370
        %v1372 = vpop.xlane.xlu0 %1371
        %v1373 = vrcp.pop %v1372
        %v1374 = vmul.f32 %v1369, %v1373
        %1375 = vrot.lane.b32.xlu0 %v777, 64
        %v1376 = vpop.permute.xlu0 %1375
        %v1379 = vsel %vm883, %v1374, 0
        %1381 = vmatprep.subr.mxu0 0.0
        %1382 = vmatpush1.msra.mxu0 %v1376
        %1383 = vmatprep.subr.mxu0 0.0
        %1384 = vmatpush1.msra.mxu0 0.0
        %1385 = vmatprep.subr.mxu0 0.0
        %1386 = vmatpush1.msra.mxu0 0.0
        %1387 = vmatprep.subr.mxu0 0.0
        %1388 = vmatpush1.msra.mxu0 0.0
        %1389 = vmatprep.subr.mxu0 0.0
        %1390 = vmatpush1.msra.mxu0 0.0
        %1391 = vmatprep.subr.mxu0 0.0
        %1392 = vmatpush1.msra.mxu0 0.0
        %1393 = vmatprep.subr.mxu0 0.0
        %1394 = vmatpush1.msra.mxu0 0.0
        %1395 = vmatprep.subr.mxu0 0.0
        %1396 = vmatpush1.msra.mxu0 0.0
        %1397 = vmatprep.subr.mxu0 0.0
        %1398 = vmatpush1.msra.mxu0 0.0
        %1399 = vmatprep.subr.mxu0 0.0
        %1400 = vmatpush1.msra.mxu0 0.0
        %1401 = vmatprep.subr.mxu0 0.0
        %1402 = vmatpush1.msra.mxu0 0.0
        %1403 = vmatprep.subr.mxu0 0.0
        %1404 = vmatpush1.msra.mxu0 0.0
        %1405 = vmatprep.subr.mxu0 0.0
        %1406 = vmatpush1.msra.mxu0 0.0
        %1407 = vmatprep.subr.mxu0 0.0
        %1408 = vmatpush1.msra.mxu0 0.0
        %1409 = vmatprep.subr.mxu0 0.0
        %1410 = vmatpush1.msra.mxu0 0.0
        %1411 = vmatprep.subr.mxu0 0.0
        %1412 = vmatpush1.msra.mxu0 0.0
        %1413 = vmatprep.subr.mxu0 0.0
        %1414 = vmatpush1.msra.mxu0 0.0
        %1415 = vmatprep.subr.mxu0 0.0
        %1416 = vmatpush1.msra.mxu0 0.0
        %1417 = vmatprep.subr.mxu0 0.0
        %1418 = vmatpush1.msra.mxu0 0.0
        %1419 = vmatprep.subr.mxu0 0.0
        %1420 = vmatpush1.msra.mxu0 0.0
        %1421 = vmatprep.subr.mxu0 0.0
        %1422 = vmatpush1.msra.mxu0 0.0
        %1423 = vmatprep.subr.mxu0 0.0
        %1424 = vmatpush1.msra.mxu0 0.0
        %1425 = vmatprep.subr.mxu0 0.0
        %1426 = vmatpush1.msra.mxu0 0.0
        %1427 = vmatprep.subr.mxu0 0.0
        %1428 = vmatpush1.msra.mxu0 0.0
        %1429 = vmatprep.subr.mxu0 0.0
        %1430 = vmatpush1.msra.mxu0 0.0
        %1431 = vmatprep.subr.mxu0 0.0
        %1432 = vmatpush1.msra.mxu0 0.0
        %1433 = vmatprep.subr.mxu0 0.0
        %1434 = vmatpush1.msra.mxu0 0.0
        %1435 = vmatprep.subr.mxu0 0.0
        %1436 = vmatpush1.msra.mxu0 0.0
        %1437 = vmatprep.subr.mxu0 0.0
        %1438 = vmatpush1.msra.mxu0 0.0
        %1439 = vmatprep.subr.mxu0 0.0
        %1440 = vmatpush1.msra.mxu0 0.0
        %1441 = vmatprep.subr.mxu0 0.0
        %1442 = vmatpush1.msra.mxu0 0.0
        %1443 = vmatprep.subr.mxu0 0.0
        %1444 = vmatpush1.msra.mxu0 0.0
        %1445 = vmatprep.mubr.f32.mxu0 0.0
        %1446 = vmatmul.mubr.f32.gmra.mrb[0].mxu0 %v1379
        %v1447 = vpop.f32.mrb[0].mxu0
        %v1448 = vadd.f32 0.0, %v1447
        %v1449 = vpop.f32.mrb[0].mxu0
        %1450 = vdwg.mxu0
        %v1452 = vsel %vm804, %v1448, 0
        %1454 = vmatprep.subr.mxu0 0.0
        %1455 = vmatpush1.msra.mxu0 %v788
        %1456 = vmatprep.subr.mxu0 0.0
        %1457 = vmatpush1.msra.mxu0 %v789
        %1458 = vmatprep.subr.mxu0 0.0
        %1459 = vmatpush1.msra.mxu0 %v790
        %1460 = vmatprep.subr.mxu0 0.0
        %1461 = vmatpush1.msra.mxu0 %v791
        %1462 = vmatprep.subr.mxu0 0.0
        %1463 = vmatpush1.msra.mxu0 0.0
        %1464 = vmatprep.subr.mxu0 0.0
        %1465 = vmatpush1.msra.mxu0 0.0
        %1466 = vmatprep.subr.mxu0 0.0
        %1467 = vmatpush1.msra.mxu0 0.0
        %1468 = vmatprep.subr.mxu0 0.0
        %1469 = vmatpush1.msra.mxu0 0.0
        %1470 = vmatprep.subr.mxu0 0.0
        %1471 = vmatpush1.msra.mxu0 0.0
        %1472 = vmatprep.subr.mxu0 0.0
        %1473 = vmatpush1.msra.mxu0 0.0
        %1474 = vmatprep.subr.mxu0 0.0
        %1475 = vmatpush1.msra.mxu0 0.0
        %1476 = vmatprep.subr.mxu0 0.0
        %1477 = vmatpush1.msra.mxu0 0.0
        %1478 = vmatprep.subr.mxu0 0.0
        %1479 = vmatpush1.msra.mxu0 0.0
        %1480 = vmatprep.subr.mxu0 0.0
        %1481 = vmatpush1.msra.mxu0 0.0
        %1482 = vmatprep.subr.mxu0 0.0
        %1483 = vmatpush1.msra.mxu0 0.0
        %1484 = vmatprep.subr.mxu0 0.0
        %1485 = vmatpush1.msra.mxu0 0.0
        %1486 = vmatprep.subr.mxu0 0.0
        %1487 = vmatpush1.msra.mxu0 0.0
        %1488 = vmatprep.subr.mxu0 0.0
        %1489 = vmatpush1.msra.mxu0 0.0
        %1490 = vmatprep.subr.mxu0 0.0
        %1491 = vmatpush1.msra.mxu0 0.0
        %1492 = vmatprep.subr.mxu0 0.0
        %1493 = vmatpush1.msra.mxu0 0.0
        %1494 = vmatprep.subr.mxu0 0.0
        %1495 = vmatpush1.msra.mxu0 0.0
        %1496 = vmatprep.subr.mxu0 0.0
        %1497 = vmatpush1.msra.mxu0 0.0
        %1498 = vmatprep.subr.mxu0 0.0
        %1499 = vmatpush1.msra.mxu0 0.0
        %1500 = vmatprep.subr.mxu0 0.0
        %1501 = vmatpush1.msra.mxu0 0.0
        %1502 = vmatprep.subr.mxu0 0.0
        %1503 = vmatpush1.msra.mxu0 0.0
        %1504 = vmatprep.subr.mxu0 0.0
        %1505 = vmatpush1.msra.mxu0 0.0
        %1506 = vmatprep.subr.mxu0 0.0
        %1507 = vmatpush1.msra.mxu0 0.0
        %1508 = vmatprep.subr.mxu0 0.0
        %1509 = vmatpush1.msra.mxu0 0.0
        %1510 = vmatprep.subr.mxu0 0.0
        %1511 = vmatpush1.msra.mxu0 0.0
        %1512 = vmatprep.subr.mxu0 0.0
        %1513 = vmatpush1.msra.mxu0 0.0
        %1514 = vmatprep.subr.mxu0 0.0
        %1515 = vmatpush1.msra.mxu0 0.0
        %1516 = vmatprep.subr.mxu0 0.0
        %1517 = vmatpush1.msra.mxu0 0.0
        %1518 = vmatprep.mubr.f32.mxu0 0.0
        %1519 = vmatmul.mubr.f32.gmra.mrb[0].mxu0 %v1452
        %v1520 = vpop.f32.mrb[0].mxu0
        %v1521 = vadd.f32 0.0, %v1520
        %v1522 = vpop.f32.mrb[0].mxu0
        %1523 = vdwg.mxu0
        %v1524 = vadd.f32 %v1283, %v1521
        %1525 = vrot.lane.b32.xlu0 %v706, 32
        %v1526 = vpop.permute.xlu0 %1525
        %1527 = vrot.lane.b32.xlu0 %v708, 32
        %v1528 = vpop.permute.xlu0 %1527
        %v1529 = vsel %vm804, %v1526, 0
        %v1531 = vsel %vm804, %v1528, 0
        %1533 = vmatprep.subr.mxu0 0.0
        %1534 = vmatpush1.xpose.msra.mxu0 %v1531
        %1535 = vmatprep.subr.mxu0 0.0
        %1536 = vmatpush1.xpose.msra.mxu0 0.0
        %1537 = vmatprep.subr.mxu0 0.0
        %1538 = vmatpush1.xpose.msra.mxu0 0.0
        %1539 = vmatprep.subr.mxu0 0.0
        %1540 = vmatpush1.xpose.msra.mxu0 0.0
        %1541 = vmatprep.subr.mxu0 0.0
        %1542 = vmatpush1.xpose.msra.mxu0 0.0
        %1543 = vmatprep.subr.mxu0 0.0
        %1544 = vmatpush1.xpose.msra.mxu0 0.0
        %1545 = vmatprep.subr.mxu0 0.0
        %1546 = vmatpush1.xpose.msra.mxu0 0.0
        %1547 = vmatprep.subr.mxu0 0.0
        %1548 = vmatpush1.xpose.msra.mxu0 0.0
        %1549 = vmatprep.subr.mxu0 0.0
        %1550 = vmatpush1.xpose.msra.mxu0 0.0
        %1551 = vmatprep.subr.mxu0 0.0
        %1552 = vmatpush1.xpose.msra.mxu0 0.0
        %1553 = vmatprep.subr.mxu0 0.0
        %1554 = vmatpush1.xpose.msra.mxu0 0.0
        %1555 = vmatprep.subr.mxu0 0.0
        %1556 = vmatpush1.xpose.msra.mxu0 0.0
        %1557 = vmatprep.subr.mxu0 0.0
        %1558 = vmatpush1.xpose.msra.mxu0 0.0
        %1559 = vmatprep.subr.mxu0 0.0
        %1560 = vmatpush1.xpose.msra.mxu0 0.0
        %1561 = vmatprep.subr.mxu0 0.0
        %1562 = vmatpush1.xpose.msra.mxu0 0.0
        %1563 = vmatprep.subr.mxu0 0.0
        %1564 = vmatpush1.xpose.msra.mxu0 0.0
        %1565 = vmatprep.subr.mxu0 0.0
        %1566 = vmatpush1.xpose.msra.mxu0 0.0
        %1567 = vmatprep.subr.mxu0 0.0
        %1568 = vmatpush1.xpose.msra.mxu0 0.0
        %1569 = vmatprep.subr.mxu0 0.0
        %1570 = vmatpush1.xpose.msra.mxu0 0.0
        %1571 = vmatprep.subr.mxu0 0.0
        %1572 = vmatpush1.xpose.msra.mxu0 0.0
        %1573 = vmatprep.subr.mxu0 0.0
        %1574 = vmatpush1.xpose.msra.mxu0 0.0
        %1575 = vmatprep.subr.mxu0 0.0
        %1576 = vmatpush1.xpose.msra.mxu0 0.0
        %1577 = vmatprep.subr.mxu0 0.0
        %1578 = vmatpush1.xpose.msra.mxu0 0.0
        %1579 = vmatprep.subr.mxu0 0.0
        %1580 = vmatpush1.xpose.msra.mxu0 0.0
        %1581 = vmatprep.subr.mxu0 0.0
        %1582 = vmatpush1.xpose.msra.mxu0 0.0
        %1583 = vmatprep.subr.mxu0 0.0
        %1584 = vmatpush1.xpose.msra.mxu0 0.0
        %1585 = vmatprep.subr.mxu0 0.0
        %1586 = vmatpush1.xpose.msra.mxu0 0.0
        %1587 = vmatprep.subr.mxu0 0.0
        %1588 = vmatpush1.xpose.msra.mxu0 0.0
        %1589 = vmatprep.subr.mxu0 0.0
        %1590 = vmatpush1.xpose.msra.mxu0 0.0
        %1591 = vmatprep.subr.mxu0 0.0
        %1592 = vmatpush1.xpose.msra.mxu0 0.0
        %1593 = vmatprep.subr.mxu0 0.0
        %1594 = vmatpush1.xpose.msra.mxu0 0.0
        %1595 = vmatprep.subr.mxu0 0.0
        %1596 = vmatpush1.xpose.msra.mxu0 0.0
        %1597 = vmatprep.mubr.f32.mxu0 0.0
        %1598 = vmatmul.mubr.f32.gmra.mrb[0].mxu0 %v1529
        %v1599 = vpop.f32.mrb[0].mxu0
        %v1600 = vadd.f32 0.0, %v1599
        %v1601 = vpop.f32.mrb[0].mxu0
        %1602 = vdwg.mxu0
        %v1603 = vmul.f32 %v1600, 0.35355338
        %v1604 = vadd.f32 %v1603, %v549
        %v1605 = vsel %vm883, %v1604, -inf
        %1606 = vmax.xlane.f32.xlu0 %v1605
        %v1607 = vpop.xlane.xlu0 %1606
        %v1608 = vsub.f32 %v1604, %v1607
        %v1609 = vmul.f32 %v1608, 1.442695
        %v1610 = vpow.pop %v1609
        %v1611 = vsel %vm883, %v1610, 0.0
        %1612 = vadd.xlane.f32.xlu0 %v1611
        %v1613 = vpop.xlane.xlu0 %1612
        %v1614 = vrcp.pop %v1613
        %v1615 = vmul.f32 %v1610, %v1614
        %1616 = vrot.lane.b32.xlu0 %v777, 32
        %v1617 = vpop.permute.xlu0 %1616
        %v1620 = vsel %vm883, %v1615, 0
        %1622 = vmatprep.subr.mxu0 0.0
        %1623 = vmatpush1.msra.mxu0 %v1617
        %1624 = vmatprep.subr.mxu0 0.0
        %1625 = vmatpush1.msra.mxu0 0.0
        %1626 = vmatprep.subr.mxu0 0.0
        %1627 = vmatpush1.msra.mxu0 0.0
        %1628 = vmatprep.subr.mxu0 0.0
        %1629 = vmatpush1.msra.mxu0 0.0
        %1630 = vmatprep.subr.mxu0 0.0
        %1631 = vmatpush1.msra.mxu0 0.0
        %1632 = vmatprep.subr.mxu0 0.0
        %1633 = vmatpush1.msra.mxu0 0.0
        %1634 = vmatprep.subr.mxu0 0.0
        %1635 = vmatpush1.msra.mxu0 0.0
        %1636 = vmatprep.subr.mxu0 0.0
        %1637 = vmatpush1.msra.mxu0 0.0
        %1638 = vmatprep.subr.mxu0 0.0
        %1639 = vmatpush1.msra.mxu0 0.0
        %1640 = vmatprep.subr.mxu0 0.0
        %1641 = vmatpush1.msra.mxu0 0.0
        %1642 = vmatprep.subr.mxu0 0.0
        %1643 = vmatpush1.msra.mxu0 0.0
        %1644 = vmatprep.subr.mxu0 0.0
        %1645 = vmatpush1.msra.mxu0 0.0
        %1646 = vmatprep.subr.mxu0 0.0
        %1647 = vmatpush1.msra.mxu0 0.0
        %1648 = vmatprep.subr.mxu0 0.0
        %1649 = vmatpush1.msra.mxu0 0.0
        %1650 = vmatprep.subr.mxu0 0.0
        %1651 = vmatpush1.msra.mxu0 0.0
        %1652 = vmatprep.subr.mxu0 0.0
        %1653 = vmatpush1.msra.mxu0 0.0
        %1654 = vmatprep.subr.mxu0 0.0
        %1655 = vmatpush1.msra.mxu0 0.0
        %1656 = vmatprep.subr.mxu0 0.0
        %1657 = vmatpush1.msra.mxu0 0.0
        %1658 = vmatprep.subr.mxu0 0.0
        %1659 = vmatpush1.msra.mxu0 0.0
        %1660 = vmatprep.subr.mxu0 0.0
        %1661 = vmatpush1.msra.mxu0 0.0
        %1662 = vmatprep.subr.mxu0 0.0
        %1663 = vmatpush1.msra.mxu0 0.0
        %1664 = vmatprep.subr.mxu0 0.0
        %1665 = vmatpush1.msra.mxu0 0.0
        %1666 = vmatprep.subr.mxu0 0.0
        %1667 = vmatpush1.msra.mxu0 0.0
        %1668 = vmatprep.subr.mxu0 0.0
        %1669 = vmatpush1.msra.mxu0 0.0
        %1670 = vmatprep.subr.mxu0 0.0
        %1671 = vmatpush1.msra.mxu0 0.0
        %1672 = vmatprep.subr.mxu0 0.0
        %1673 = vmatpush1.msra.mxu0 0.0
        %1674 = vmatprep.subr.mxu0 0.0
        %1675 = vmatpush1.msra.mxu0 0.0
        %1676 = vmatprep.subr.mxu0 0.0
        %1677 = vmatpush1.msra.mxu0 0.0
        %1678 = vmatprep.subr.mxu0 0.0
        %1679 = vmatpush1.msra.mxu0 0.0
        %1680 = vmatprep.subr.mxu0 0.0
        %1681 = vmatpush1.msra.mxu0 0.0
        %1682 = vmatprep.subr.mxu0 0.0
        %1683 = vmatpush1.msra.mxu0 0.0
        %1684 = vmatprep.subr.mxu0 0.0
        %1685 = vmatpush1.msra.mxu0 0.0
        %1686 = vmatprep.mubr.f32.mxu0 0.0
        %1687 = vmatmul.mubr.f32.gmra.mrb[0].mxu0 %v1620
        %v1688 = vpop.f32.mrb[0].mxu0
        %v1689 = vadd.f32 0.0, %v1688
        %v1690 = vpop.f32.mrb[0].mxu0
        %1691 = vdwg.mxu0
        %v1693 = vsel %vm804, %v1689, 0
        %1695 = vmatprep.subr.mxu0 0.0
        %1696 = vmatpush1.msra.mxu0 %v792
        %1697 = vmatprep.subr.mxu0 0.0
        %1698 = vmatpush1.msra.mxu0 %v793
        %1699 = vmatprep.subr.mxu0 0.0
        %1700 = vmatpush1.msra.mxu0 %v794
        %1701 = vmatprep.subr.mxu0 0.0
        %1702 = vmatpush1.msra.mxu0 %v795
        %1703 = vmatprep.subr.mxu0 0.0
        %1704 = vmatpush1.msra.mxu0 0.0
        %1705 = vmatprep.subr.mxu0 0.0
        %1706 = vmatpush1.msra.mxu0 0.0
        %1707 = vmatprep.subr.mxu0 0.0
        %1708 = vmatpush1.msra.mxu0 0.0
        %1709 = vmatprep.subr.mxu0 0.0
        %1710 = vmatpush1.msra.mxu0 0.0
        %1711 = vmatprep.subr.mxu0 0.0
        %1712 = vmatpush1.msra.mxu0 0.0
        %1713 = vmatprep.subr.mxu0 0.0
        %1714 = vmatpush1.msra.mxu0 0.0
        %1715 = vmatprep.subr.mxu0 0.0
        %1716 = vmatpush1.msra.mxu0 0.0
        %1717 = vmatprep.subr.mxu0 0.0
        %1718 = vmatpush1.msra.mxu0 0.0
        %1719 = vmatprep.subr.mxu0 0.0
        %1720 = vmatpush1.msra.mxu0 0.0
        %1721 = vmatprep.subr.mxu0 0.0
        %1722 = vmatpush1.msra.mxu0 0.0
        %1723 = vmatprep.subr.mxu0 0.0
        %1724 = vmatpush1.msra.mxu0 0.0
        %1725 = vmatprep.subr.mxu0 0.0
        %1726 = vmatpush1.msra.mxu0 0.0
        %1727 = vmatprep.subr.mxu0 0.0
        %1728 = vmatpush1.msra.mxu0 0.0
        %1729 = vmatprep.subr.mxu0 0.0
        %1730 = vmatpush1.msra.mxu0 0.0
        %1731 = vmatprep.subr.mxu0 0.0
        %1732 = vmatpush1.msra.mxu0 0.0
        %1733 = vmatprep.subr.mxu0 0.0
        %1734 = vmatpush1.msra.mxu0 0.0
        %1735 = vmatprep.subr.mxu0 0.0
        %1736 = vmatpush1.msra.mxu0 0.0
        %1737 = vmatprep.subr.mxu0 0.0
        %1738 = vmatpush1.msra.mxu0 0.0
        %1739 = vmatprep.subr.mxu0 0.0
        %1740 = vmatpush1.msra.mxu0 0.0
        %1741 = vmatprep.subr.mxu0 0.0
        %1742 = vmatpush1.msra.mxu0 0.0
        %1743 = vmatprep.subr.mxu0 0.0
        %1744 = vmatpush1.msra.mxu0 0.0
        %1745 = vmatprep.subr.mxu0 0.0
        %1746 = vmatpush1.msra.mxu0 0.0
        %1747 = vmatprep.subr.mxu0 0.0
        %1748 = vmatpush1.msra.mxu0 0.0
        %1749 = vmatprep.subr.mxu0 0.0
        %1750 = vmatpush1.msra.mxu0 0.0
        %1751 = vmatprep.subr.mxu0 0.0
        %1752 = vmatpush1.msra.mxu0 0.0
        %1753 = vmatprep.subr.mxu0 0.0
        %1754 = vmatpush1.msra.mxu0 0.0
        %1755 = vmatprep.subr.mxu0 0.0
        %1756 = vmatpush1.msra.mxu0 0.0
        %1757 = vmatprep.subr.mxu0 0.0
        %1758 = vmatpush1.msra.mxu0 0.0
        %1759 = vmatprep.mubr.f32.mxu0 0.0
        %1760 = vmatmul.mubr.f32.gmra.mrb[0].mxu0 %v1693
        %v1761 = vpop.f32.mrb[0].mxu0
        %v1762 = vadd.f32 0.0, %v1761
        %v1763 = vpop.f32.mrb[0].mxu0
        %1764 = vdwg.mxu0
        %v1765 = vadd.f32 %v1524, %v1762
        %v1766 = vld [vmem:[%s6] sm:$0x3]
        %1767 = vadd.xlane.f32.xlu0 %v1765
        %v1768 = vpop.xlane.xlu0 %1767
        %v1769 = vmul.f32 %v1768, 0.03125
        %v1770 = vmul.f32 %v1765, %v1765
        %1771 = vadd.xlane.f32.xlu0 %v1770
        %v1772 = vpop.xlane.xlu0 %1771
        %v1773 = vmul.f32 %v1772, 0.03125
        %v1774 = vmul.f32 %v1769, %v1769
        %v1775 = vsub.f32 %v1773, %v1774
        %v1776 = vsub.f32 %v1765, %v1769
        %v1777 = vadd.f32 %v1775, 1e-05
        %v1778 = vrsqrt.pop %v1777
        %v1779 = vmul.f32 %v1776, %v1778
        %v1780 = vlaneseq
        %v1781 = vshrl.u32 %v1780, 7
        %v1782 = vsub.s32 0, %v1781
        %v1783 = vrot.slane %v1766, %v1782
        %v1784 = vmul.f32 %v1779, %v1783
        %v1785 = vlaneseq
        %v1786 = vshrl.u32 %v1785, 7
        %v1787 = vsub.s32 1, %v1786
        %v1788 = vrot.slane %v1766, %v1787
        %v1789 = vadd.f32 %v1784, %v1788
        %v1790 = vld [vmem:[#allocation10] sm:$0xff]
        %v1791 = vld [vmem:[#allocation10 + $0x8] sm:$0xff]
        %v1792 = vld [vmem:[#allocation10 + $0x10] sm:$0xff]
        %v1793 = vld [vmem:[#allocation10 + $0x18] sm:$0xff]
        %v1794 = vld [vmem:[#allocation10 + $0x20] sm:$0xff]
        %v1795 = vld [vmem:[#allocation10 + $0x28] sm:$0xff]
        %v1796 = vld [vmem:[#allocation10 + $0x30] sm:$0xff]
        %v1797 = vld [vmem:[#allocation10 + $0x38] sm:$0xff]
        %v1798 = vld [vmem:[#allocation10 + $0x40] sm:$0xff]
        %v1799 = vld [vmem:[#allocation10 + $0x48] sm:$0xff]
        %v1800 = vld [vmem:[#allocation10 + $0x50] sm:$0xff]
        %v1801 = vld [vmem:[#allocation10 + $0x58] sm:$0xff]
        %v1802 = vld [vmem:[#allocation10 + $0x60] sm:$0xff]
        %v1803 = vld [vmem:[#allocation10 + $0x68] sm:$0xff]
        %v1804 = vld [vmem:[#allocation10 + $0x70] sm:$0xff]
        %v1805 = vld [vmem:[#allocation10 + $0x78] sm:$0xff]
        %v1806 = vld [vmem:[%s8] sm:$0x1]
        %v1808 = vlaneseq
        %v1809 = vshrl.u32 %v1808, 7
        %v1810 = vsub.s32 0, %v1809
        %v1811 = vrot.slane %v1806, %v1810
        %1813 = vmatprep.subr.mxu0 0.0
        %1814 = vmatpush1.msra.mxu0 %v1790
        %1815 = vmatprep.subr.mxu0 0.0
        %1816 = vmatpush1.msra.mxu0 %v1791
        %1817 = vmatprep.subr.mxu0 0.0
        %1818 = vmatpush1.msra.mxu0 %v1792
        %1819 = vmatprep.subr.mxu0 0.0
        %1820 = vmatpush1.msra.mxu0 %v1793
        %1821 = vmatprep.subr.mxu0 0.0
        %1822 = vmatpush1.msra.mxu0 %v1794
        %1823 = vmatprep.subr.mxu0 0.0
        %1824 = vmatpush1.msra.mxu0 %v1795
        %1825 = vmatprep.subr.mxu0 0.0
        %1826 = vmatpush1.msra.mxu0 %v1796
        %1827 = vmatprep.subr.mxu0 0.0
        %1828 = vmatpush1.msra.mxu0 %v1797
        %1829 = vmatprep.subr.mxu0 0.0
        %1830 = vmatpush1.msra.mxu0 %v1798
        %1831 = vmatprep.subr.mxu0 0.0
        %1832 = vmatpush1.msra.mxu0 %v1799
        %1833 = vmatprep.subr.mxu0 0.0
        %1834 = vmatpush1.msra.mxu0 %v1800
        %1835 = vmatprep.subr.mxu0 0.0
        %1836 = vmatpush1.msra.mxu0 %v1801
        %1837 = vmatprep.subr.mxu0 0.0
        %1838 = vmatpush1.msra.mxu0 %v1802
        %1839 = vmatprep.subr.mxu0 0.0
        %1840 = vmatpush1.msra.mxu0 %v1803
        %1841 = vmatprep.subr.mxu0 0.0
        %1842 = vmatpush1.msra.mxu0 %v1804
        %1843 = vmatprep.subr.mxu0 0.0
        %1844 = vmatpush1.msra.mxu0 %v1805
        %1845 = vmatprep.subr.mxu0 0.0
        %1846 = vmatpush1.msra.mxu0 0.0
        %1847 = vmatprep.subr.mxu0 0.0
        %1848 = vmatpush1.msra.mxu0 0.0
        %1849 = vmatprep.subr.mxu0 0.0
        %1850 = vmatpush1.msra.mxu0 0.0
        %1851 = vmatprep.subr.mxu0 0.0
        %1852 = vmatpush1.msra.mxu0 0.0
        %1853 = vmatprep.subr.mxu0 0.0
        %1854 = vmatpush1.msra.mxu0 0.0
        %1855 = vmatprep.subr.mxu0 0.0
        %1856 = vmatpush1.msra.mxu0 0.0
        %1857 = vmatprep.subr.mxu0 0.0
        %1858 = vmatpush1.msra.mxu0 0.0
        %1859 = vmatprep.subr.mxu0 0.0
        %1860 = vmatpush1.msra.mxu0 0.0
        %1861 = vmatprep.subr.mxu0 0.0
        %1862 = vmatpush1.msra.mxu0 0.0
        %1863 = vmatprep.subr.mxu0 0.0
        %1864 = vmatpush1.msra.mxu0 0.0
        %1865 = vmatprep.subr.mxu0 0.0
        %1866 = vmatpush1.msra.mxu0 0.0
        %1867 = vmatprep.subr.mxu0 0.0
        %1868 = vmatpush1.msra.mxu0 0.0
        %1869 = vmatprep.subr.mxu0 0.0
        %1870 = vmatpush1.msra.mxu0 0.0
        %1871 = vmatprep.subr.mxu0 0.0
        %1872 = vmatpush1.msra.mxu0 0.0
        %1873 = vmatprep.subr.mxu0 0.0
        %1874 = vmatpush1.msra.mxu0 0.0
        %1875 = vmatprep.subr.mxu0 0.0
        %1876 = vmatpush1.msra.mxu0 0.0
        %1877 = vmatprep.mubr.f32.mxu0 0.0
        %1878 = vmatmul.mubr.f32.gmra.mrb[0].mxu0 %v1789
        %v1879 = vpop.f32.mrb[0].mxu0
        %v1880 = vadd.f32 %v1811, %v1879
        %v1881 = vpop.f32.mrb[0].mxu0
        %1882 = vdwg.mxu0
        %v1883 = vmul.f32 %v1880, 0.5
        %v1884 = vmul.f32 %v1880, 0.044715
        %v1885 = vmul.f32 %v1884, %v1880
        %v1886 = vmul.f32 %v1885, %v1880
        %v1887 = vadd.f32 %v1880, %v1886
        %v1888 = vmul.f32 %v1887, 0.7978845
        %v1889 = vtanh.pop %v1888
        %v1890 = vadd.f32 %v1889, 1.0
        %v1891 = vmul.f32 %v1883, %v1890
        %v1892 = vld [vmem:[#allocation11] sm:$0xff]
        %v1893 = vld [vmem:[#allocation11 + $0x8] sm:$0xff]
        %v1894 = vld [vmem:[#allocation11 + $0x10] sm:$0xff]
        %v1895 = vld [vmem:[#allocation11 + $0x18] sm:$0xff]
        %v1896 = vld [vmem:[#allocation11 + $0x20] sm:$0xff]
        %v1897 = vld [vmem:[#allocation11 + $0x28] sm:$0xff]
        %v1898 = vld [vmem:[#allocation11 + $0x30] sm:$0xff]
        %v1899 = vld [vmem:[#allocation11 + $0x38] sm:$0xff]
        %v1900 = vld [vmem:[#allocation11 + $0x40] sm:$0xff]
        %v1901 = vld [vmem:[#allocation11 + $0x48] sm:$0xff]
        %v1902 = vld [vmem:[#allocation11 + $0x50] sm:$0xff]
        %v1903 = vld [vmem:[#allocation11 + $0x58] sm:$0xff]
        %v1904 = vld [vmem:[#allocation11 + $0x60] sm:$0xff]
        %v1905 = vld [vmem:[#allocation11 + $0x68] sm:$0xff]
        %v1906 = vld [vmem:[#allocation11 + $0x70] sm:$0xff]
        %v1907 = vld [vmem:[#allocation11 + $0x78] sm:$0xff]
        %1908 = vmatprep.subr.mxu0 0.0
        %1909 = vmatpush1.msra.mxu0 %v1892
        %1910 = vmatprep.subr.mxu0 0.0
        %1911 = vmatpush1.msra.mxu0 %v1893
        %1912 = vmatprep.subr.mxu0 0.0
        %1913 = vmatpush1.msra.mxu0 %v1894
        %1914 = vmatprep.subr.mxu0 0.0
        %1915 = vmatpush1.msra.mxu0 %v1895
        %1916 = vmatprep.subr.mxu0 0.0
        %1917 = vmatpush1.msra.mxu0 %v1896
        %1918 = vmatprep.subr.mxu0 0.0
        %1919 = vmatpush1.msra.mxu0 %v1897
        %1920 = vmatprep.subr.mxu0 0.0
        %1921 = vmatpush1.msra.mxu0 %v1898
        %1922 = vmatprep.subr.mxu0 0.0
        %1923 = vmatpush1.msra.mxu0 %v1899
        %1924 = vmatprep.subr.mxu0 0.0
        %1925 = vmatpush1.msra.mxu0 %v1900
        %1926 = vmatprep.subr.mxu0 0.0
        %1927 = vmatpush1.msra.mxu0 %v1901
        %1928 = vmatprep.subr.mxu0 0.0
        %1929 = vmatpush1.msra.mxu0 %v1902
        %1930 = vmatprep.subr.mxu0 0.0
        %1931 = vmatpush1.msra.mxu0 %v1903
        %1932 = vmatprep.subr.mxu0 0.0
        %1933 = vmatpush1.msra.mxu0 %v1904
        %1934 = vmatprep.subr.mxu0 0.0
        %1935 = vmatpush1.msra.mxu0 %v1905
        %1936 = vmatprep.subr.mxu0 0.0
        %1937 = vmatpush1.msra.mxu0 %v1906
        %1938 = vmatprep.subr.mxu0 0.0
        %1939 = vmatpush1.msra.mxu0 %v1907
        %1940 = vmatprep.subr.mxu0 0.0
        %1941 = vmatpush1.msra.mxu0 0.0
        %1942 = vmatprep.subr.mxu0 0.0
        %1943 = vmatpush1.msra.mxu0 0.0
        %1944 = vmatprep.subr.mxu0 0.0
        %1945 = vmatpush1.msra.mxu0 0.0
        %1946 = vmatprep.subr.mxu0 0.0
        %1947 = vmatpush1.msra.mxu0 0.0
        %1948 = vmatprep.subr.mxu0 0.0
        %1949 = vmatpush1.msra.mxu0 0.0
        %1950 = vmatprep.subr.mxu0 0.0
        %1951 = vmatpush1.msra.mxu0 0.0
        %1952 = vmatprep.subr.mxu0 0.0
        %1953 = vmatpush1.msra.mxu0 0.0
        %1954 = vmatprep.subr.mxu0 0.0
        %1955 = vmatpush1.msra.mxu0 0.0
        %1956 = vmatprep.subr.mxu0 0.0
        %1957 = vmatpush1.msra.mxu0 0.0
        %1958 = vmatprep.subr.mxu0 0.0
        %1959 = vmatpush1.msra.mxu0 0.0
        %1960 = vmatprep.subr.mxu0 0.0
        %1961 = vmatpush1.msra.mxu0 0.0
        %1962 = vmatprep.subr.mxu0 0.0
        %1963 = vmatpush1.msra.mxu0 0.0
        %1964 = vmatprep.subr.mxu0 0.0
        %1965 = vmatpush1.msra.mxu0 0.0
        %1966 = vmatprep.subr.mxu0 0.0
        %1967 = vmatpush1.msra.mxu0 0.0
        %1968 = vmatprep.subr.mxu0 0.0
        %1969 = vmatpush1.msra.mxu0 0.0
        %1970 = vmatprep.subr.mxu0 0.0
        %1971 = vmatpush1.msra.mxu0 0.0
        %1972 = vmatprep.mubr.f32.mxu0 0.0
        %1973 = vmatmul.mubr.f32.gmra.mrb[0].mxu0 %v1891
        %v1974 = vpop.f32.mrb[0].mxu0
        %v1975 = vadd.f32 0.0, %v1974
        %v1976 = vpop.f32.mrb[0].mxu0
        %1977 = vdwg.mxu0
        %v1978 = vadd.f32 %v1765, %v1975
        %v1979 = vld [vmem:[%s10] sm:$0x1]
        %v1981 = vlaneseq
        %v1982 = vshrl.u32 %v1981, 7
        %v1983 = vsub.s32 0, %v1982
        %v1984 = vrot.slane %v1979, %v1983
        %v1986 = vadd.f32 %v1978, %v1984
        %s1987 = scalar_lea.vmem [#allocation5], 2
        %v1988 = vld [vmem:[%s1987] sm:$0x3]
        %1989 = vadd.xlane.f32.xlu0 %v1986
        %v1990 = vpop.xlane.xlu0 %1989
        %v1991 = vmul.f32 %v1990, 0.03125
        %v1992 = vmul.f32 %v1986, %v1986
        %1993 = vadd.xlane.f32.xlu0 %v1992
        %v1994 = vpop.xlane.xlu0 %1993
        %v1995 = vmul.f32 %v1994, 0.03125
        %v1996 = vmul.f32 %v1991, %v1991
        %v1997 = vsub.f32 %v1995, %v1996
        %v1998 = vsub.f32 %v1986, %v1991
        %v1999 = vadd.f32 %v1997, 1e-05
        %v2000 = vrsqrt.pop %v1999
        %v2001 = vmul.f32 %v1998, %v2000
        %v2002 = vlaneseq
        %v2003 = vshrl.u32 %v2002, 7
        %v2004 = vsub.s32 0, %v2003
        %v2005 = vrot.slane %v1988, %v2004
        %v2006 = vmul.f32 %v2001, %v2005
        %v2007 = vlaneseq
        %v2008 = vshrl.u32 %v2007, 7
        %v2009 = vsub.s32 1, %v2008
        %v2010 = vrot.slane %v1988, %v2009
        %v2011 = vadd.f32 %v2006, %v2010
        %s2012 = scalar_lea.vmem [#allocation7], 384
        %v2013 = vld [vmem:[%s2012] sm:$0xff]
        %v2014 = vld [vmem:[%s2012 + $0x8] sm:$0xff]
        %v2015 = vld [vmem:[%s2012 + $0x10] sm:$0xff]
        %v2016 = vld [vmem:[%s2012 + $0x18] sm:$0xff]
        %v2017 = vld [vmem:[%s2012 + $0x20] sm:$0xff]
        %v2018 = vld [vmem:[%s2012 + $0x28] sm:$0xff]
        %v2019 = vld [vmem:[%s2012 + $0x30] sm:$0xff]
        %v2020 = vld [vmem:[%s2012 + $0x38] sm:$0xff]
        %v2021 = vld [vmem:[%s2012 + $0x40] sm:$0xff]
        %v2022 = vld [vmem:[%s2012 + $0x48] sm:$0xff]
        %v2023 = vld [vmem:[%s2012 + $0x50] sm:$0xff]
        %v2024 = vld [vmem:[%s2012 + $0x58] sm:$0xff]
        %v2025 = vld [vmem:[%s2012 + $0x60] sm:$0xff]
        %v2026 = vld [vmem:[%s2012 + $0x68] sm:$0xff]
        %v2027 = vld [vmem:[%s2012 + $0x70] sm:$0xff]
        %v2028 = vld [vmem:[%s2012 + $0x78] sm:$0xff]
        %v2029 = vld [vmem:[%s2012 + $0x80] sm:$0xff]
        %v2030 = vld [vmem:[%s2012 + $0x88] sm:$0xff]
        %v2031 = vld [vmem:[%s2012 + $0x90] sm:$0xff]
        %v2032 = vld [vmem:[%s2012 + $0x98] sm:$0xff]
        %v2033 = vld [vmem:[%s2012 + $0xa0] sm:$0xff]
        %v2034 = vld [vmem:[%s2012 + $0xa8] sm:$0xff]
        %v2035 = vld [vmem:[%s2012 + $0xb0] sm:$0xff]
        %v2036 = vld [vmem:[%s2012 + $0xb8] sm:$0xff]
        %v2037 = vld [vmem:[%s2012 + $0xc0] sm:$0xff]
        %v2038 = vld [vmem:[%s2012 + $0xc8] sm:$0xff]
        %v2039 = vld [vmem:[%s2012 + $0xd0] sm:$0xff]
        %v2040 = vld [vmem:[%s2012 + $0xd8] sm:$0xff]
        %v2041 = vld [vmem:[%s2012 + $0xe0] sm:$0xff]
        %v2042 = vld [vmem:[%s2012 + $0xe8] sm:$0xff]
        %v2043 = vld [vmem:[%s2012 + $0xf0] sm:$0xff]
        %v2044 = vld [vmem:[%s2012 + $0xf8] sm:$0xff]
        %v2045 = vld [vmem:[%s2012 + $0x100] sm:$0xff]
        %v2046 = vld [vmem:[%s2012 + $0x108] sm:$0xff]
        %v2047 = vld [vmem:[%s2012 + $0x110] sm:$0xff]
        %v2048 = vld [vmem:[%s2012 + $0x118] sm:$0xff]
        %v2049 = vld [vmem:[%s2012 + $0x120] sm:$0xff]
        %v2050 = vld [vmem:[%s2012 + $0x128] sm:$0xff]
        %v2051 = vld [vmem:[%s2012 + $0x130] sm:$0xff]
        %v2052 = vld [vmem:[%s2012 + $0x138] sm:$0xff]
        %v2053 = vld [vmem:[%s2012 + $0x140] sm:$0xff]
        %v2054 = vld [vmem:[%s2012 + $0x148] sm:$0xff]
        %v2055 = vld [vmem:[%s2012 + $0x150] sm:$0xff]
        %v2056 = vld [vmem:[%s2012 + $0x158] sm:$0xff]
        %v2057 = vld [vmem:[%s2012 + $0x160] sm:$0xff]
        %v2058 = vld [vmem:[%s2012 + $0x168] sm:$0xff]
        %v2059 = vld [vmem:[%s2012 + $0x170] sm:$0xff]
        %v2060 = vld [vmem:[%s2012 + $0x178] sm:$0xff]
        %s2061 = scalar_lea.vmem %s3, 3
        %v2062 = vld [vmem:[%s2061] sm:$0x7]
        %v2064 = vlaneseq
        %v2065 = vshrl.u32 %v2064, 7
        %v2066 = vsub.s32 0, %v2065
        %v2067 = vrot.slane %v2062, %v2066
        %v2068 = vlaneseq
        %v2069 = vshrl.u32 %v2068, 7
        %v2070 = vsub.s32 1, %v2069
        %v2071 = vrot.slane %v2062, %v2070
        %v2072 = vlaneseq
        %v2073 = vshrl.u32 %v2072, 7
        %v2074 = vsub.s32 2, %v2073
        %v2075 = vrot.slane %v2062, %v2074
        %2079 = vmatprep.subr.mxu0 %v2014
        %2080 = vmatpush1.msra.mxu0 %v2013
        %2081 = vmatprep.subr.mxu0 %v2017
        %2082 = vmatpush1.msra.mxu0 %v2016
        %2083 = vmatprep.subr.mxu0 %v2020
        %2084 = vmatpush1.msra.mxu0 %v2019
        %2085 = vmatprep.subr.mxu0 %v2023
        %2086 = vmatpush1.msra.mxu0 %v2022
        %2087 = vmatprep.subr.mxu0 %v2026
        %2088 = vmatpush1.msra.mxu0 %v2025
        %2089 = vmatprep.subr.mxu0 %v2029
        %2090 = vmatpush1.msra.mxu0 %v2028
        %2091 = vmatprep.subr.mxu0 %v2032
        %2092 = vmatpush1.msra.mxu0 %v2031
        %2093 = vmatprep.subr.mxu0 %v2035
        %2094 = vmatpush1.msra.mxu0 %v2034
        %2095 = vmatprep.subr.mxu0 %v2038
        %2096 = vmatpush1.msra.mxu0 %v2037
        %2097 = vmatprep.subr.mxu0 %v2041
        %2098 = vmatpush1.msra.mxu0 %v2040
        %2099 = vmatprep.subr.mxu0 %v2044
        %2100 = vmatpush1.msra.mxu0 %v2043
        %2101 = vmatprep.subr.mxu0 %v2047
        %2102 = vmatpush1.msra.mxu0 %v2046
        %2103 = vmatprep.subr.mxu0 %v2050
        %2104 = vmatpush1.msra.mxu0 %v2049
        %2105 = vmatprep.subr.mxu0 %v2053
        %2106 = vmatpush1.msra.mxu0 %v2052
        %2107 = vmatprep.subr.mxu0 %v2056
        %2108 = vmatpush1.msra.mxu0 %v2055
        %2109 = vmatprep.subr.mxu0 %v2059
        %2110 = vmatpush1.msra.mxu0 %v2058
        %2111 = vmatprep.subr.mxu0 0.0
        %2112 = vmatpush1.msra.mxu0 0.0
        %2113 = vmatprep.subr.mxu0 0.0
        %2114 = vmatpush1.msra.mxu0 0.0
        %2115 = vmatprep.subr.mxu0 0.0
        %2116 = vmatpush1.msra.mxu0 0.0
        %2117 = vmatprep.subr.mxu0 0.0
        %2118 = vmatpush1.msra.mxu0 0.0
        %2119 = vmatprep.subr.mxu0 0.0
        %2120 = vmatpush1.msra.mxu0 0.0
        %2121 = vmatprep.subr.mxu0 0.0
        %2122 = vmatpush1.msra.mxu0 0.0
        %2123 = vmatprep.subr.mxu0 0.0
        %2124 = vmatpush1.msra.mxu0 0.0
        %2125 = vmatprep.subr.mxu0 0.0
        %2126 = vmatpush1.msra.mxu0 0.0
        %2127 = vmatprep.subr.mxu0 0.0
        %2128 = vmatpush1.msra.mxu0 0.0
        %2129 = vmatprep.subr.mxu0 0.0
        %2130 = vmatpush1.msra.mxu0 0.0
        %2131 = vmatprep.subr.mxu0 0.0
        %2132 = vmatpush1.msra.mxu0 0.0
        %2133 = vmatprep.subr.mxu0 0.0
        %2134 = vmatpush1.msra.mxu0 0.0
        %2135 = vmatprep.subr.mxu0 0.0
        %2136 = vmatpush1.msra.mxu0 0.0
        %2137 = vmatprep.subr.mxu0 0.0
        %2138 = vmatpush1.msra.mxu0 0.0
        %2139 = vmatprep.subr.mxu0 0.0
        %2140 = vmatpush1.msra.mxu0 0.0
        %2141 = vmatprep.subr.mxu0 0.0
        %2142 = vmatpush1.msra.mxu0 0.0
        %2143 = vmatprep.mubr.f32.mxu0 0.0
        %2144 = vmatmul.mubr.f32.gmra.mrb[0].mxu0 %v2011
        %v2145 = vpop.f32.mrb[0].mxu0
        %v2146 = vadd.f32 %v2067, %v2145
        %v2147 = vpop.f32.mrb[0].mxu0
        %v2148 = vadd.f32 %v2071, %v2147
        %2149 = vdwg.mxu0
        %2150 = vmatprep.subr.mxu0 0.0
        %2151 = vmatpush1.msra.mxu0 %v2015
        %2152 = vmatprep.subr.mxu0 0.0
        %2153 = vmatpush1.msra.mxu0 %v2018
        %2154 = vmatprep.subr.mxu0 0.0
        %2155 = vmatpush1.msra.mxu0 %v2021
        %2156 = vmatprep.subr.mxu0 0.0
        %2157 = vmatpush1.msra.mxu0 %v2024
        %2158 = vmatprep.subr.mxu0 0.0
        %2159 = vmatpush1.msra.mxu0 %v2027
        %2160 = vmatprep.subr.mxu0 0.0
        %2161 = vmatpush1.msra.mxu0 %v2030
        %2162 = vmatprep.subr.mxu0 0.0
        %2163 = vmatpush1.msra.mxu0 %v2033
        %2164 = vmatprep.subr.mxu0 0.0
        %2165 = vmatpush1.msra.mxu0 %v2036
        %2166 = vmatprep.subr.mxu0 0.0
        %2167 = vmatpush1.msra.mxu0 %v2039
        %2168 = vmatprep.subr.mxu0 0.0
        %2169 = vmatpush1.msra.mxu0 %v2042
        %2170 = vmatprep.subr.mxu0 0.0
        %2171 = vmatpush1.msra.mxu0 %v2045
        %2172 = vmatprep.subr.mxu0 0.0
        %2173 = vmatpush1.msra.mxu0 %v2048
        %2174 = vmatprep.subr.mxu0 0.0
        %2175 = vmatpush1.msra.mxu0 %v2051
        %2176 = vmatprep.subr.mxu0 0.0
        %2177 = vmatpush1.msra.mxu0 %v2054
        %2178 = vmatprep.subr.mxu0 0.0
        %2179 = vmatpush1.msra.mxu0 %v2057
        %2180 = vmatprep.subr.mxu0 0.0
        %2181 = vmatpush1.msra.mxu0 %v2060
        %2182 = vmatprep.subr.mxu0 0.0
        %2183 = vmatpush1.msra.mxu0 0.0
        %2184 = vmatprep.subr.mxu0 0.0
        %2185 = vmatpush1.msra.mxu0 0.0
        %2186 = vmatprep.subr.mxu0 0.0
        %2187 = vmatpush1.msra.mxu0 0.0
        %2188 = vmatprep.subr.mxu0 0.0
        %2189 = vmatpush1.msra.mxu0 0.0
        %2190 = vmatprep.subr.mxu0 0.0
        %2191 = vmatpush1.msra.mxu0 0.0
        %2192 = vmatprep.subr.mxu0 0.0
        %2193 = vmatpush1.msra.mxu0 0.0
        %2194 = vmatprep.subr.mxu0 0.0
        %2195 = vmatpush1.msra.mxu0 0.0
        %2196 = vmatprep.subr.mxu0 0.0
        %2197 = vmatpush1.msra.mxu0 0.0
        %2198 = vmatprep.subr.mxu0 0.0
        %2199 = vmatpush1.msra.mxu0 0.0
        %2200 = vmatprep.subr.mxu0 0.0
        %2201 = vmatpush1.msra.mxu0 0.0
        %2202 = vmatprep.subr.mxu0 0.0
        %2203 = vmatpush1.msra.mxu0 0.0
        %2204 = vmatprep.subr.mxu0 0.0
        %2205 = vmatpush1.msra.mxu0 0.0
        %2206 = vmatprep.subr.mxu0 0.0
        %2207 = vmatpush1.msra.mxu0 0.0
        %2208 = vmatprep.subr.mxu0 0.0
        %2209 = vmatpush1.msra.mxu0 0.0
        %2210 = vmatprep.subr.mxu0 0.0
        %2211 = vmatpush1.msra.mxu0 0.0
        %2212 = vmatprep.subr.mxu0 0.0
        %2213 = vmatpush1.msra.mxu0 0.0
        %2214 = vmatprep.mubr.f32.mxu0 0.0
        %2215 = vmatmul.mubr.f32.gmra.mrb[0].mxu0 %v2011
        %v2216 = vpop.f32.mrb[0].mxu0
        %v2217 = vadd.f32 %v2075, %v2216
        %v2218 = vpop.f32.mrb[0].mxu0
        %2219 = vdwg.mxu0
        %s2220 = scalar_lea.vmem [#allocation8], 128
        %v2221 = vld [vmem:[%s2220] sm:$0xff]
        %v2222 = vld [vmem:[%s2220 + $0x8] sm:$0xff]
        %v2223 = vld [vmem:[%s2220 + $0x10] sm:$0xff]
        %v2224 = vld [vmem:[%s2220 + $0x18] sm:$0xff]
        %v2225 = vld [vmem:[%s2220 + $0x20] sm:$0xff]
        %v2226 = vld [vmem:[%s2220 + $0x28] sm:$0xff]
        %v2227 = vld [vmem:[%s2220 + $0x30] sm:$0xff]
        %v2228 = vld [vmem:[%s2220 + $0x38] sm:$0xff]
        %v2229 = vld [vmem:[%s2220 + $0x40] sm:$0xff]
        %v2230 = vld [vmem:[%s2220 + $0x48] sm:$0xff]
        %v2231 = vld [vmem:[%s2220 + $0x50] sm:$0xff]
        %v2232 = vld [vmem:[%s2220 + $0x58] sm:$0xff]
        %v2233 = vld [vmem:[%s2220 + $0x60] sm:$0xff]
        %v2234 = vld [vmem:[%s2220 + $0x68] sm:$0xff]
        %v2235 = vld [vmem:[%s2220 + $0x70] sm:$0xff]
        %v2236 = vld [vmem:[%s2220 + $0x78] sm:$0xff]
        %s2237 = scalar_lea.vmem %s5, 1
        %v2238 = vld [vmem:[%s2237] sm:$0x1]
        %v2240 = vlaneseq
        %v2241 = vshrl.u32 %v2240, 7
        %v2242 = vsub.s32 0, %v2241
        %v2243 = vrot.slane %v2238, %v2242
        %v2245 = vadd.f32 %v1986, %v2243
        %v2247 = vsel %vm804, %v2146, 0
        %v2250 = vsel %vm804, %v2148, 0
        %2252 = vmatprep.subr.mxu0 0.0
        %2253 = vmatpush1.xpose.msra.mxu0 %v2250
        %2254 = vmatprep.subr.mxu0 0.0
        %2255 = vmatpush1.xpose.msra.mxu0 0.0
        %2256 = vmatprep.subr.mxu0 0.0
        %2257 = vmatpush1.xpose.msra.mxu0 0.0
        %2258 = vmatprep.subr.mxu0 0.0
        %2259 = vmatpush1.xpose.msra.mxu0 0.0
        %2260 = vmatprep.subr.mxu0 0.0
        %2261 = vmatpush1.xpose.msra.mxu0 0.0
        %2262 = vmatprep.subr.mxu0 0.0
        %2263 = vmatpush1.xpose.msra.mxu0 0.0
        %2264 = vmatprep.subr.mxu0 0.0
        %2265 = vmatpush1.xpose.msra.mxu0 0.0
        %2266 = vmatprep.subr.mxu0 0.0
        %2267 = vmatpush1.xpose.msra.mxu0 0.0
        %2268 = vmatprep.subr.mxu0 0.0
        %2269 = vmatpush1.xpose.msra.mxu0 0.0
        %2270 = vmatprep.subr.mxu0 0.0
        %2271 = vmatpush1.xpose.msra.mxu0 0.0
        %2272 = vmatprep.subr.mxu0 0.0
        %2273 = vmatpush1.xpose.msra.mxu0 0.0
        %2274 = vmatprep.subr.mxu0 0.0
        %2275 = vmatpush1.xpose.msra.mxu0 0.0
        %2276 = vmatprep.subr.mxu0 0.0
        %2277 = vmatpush1.xpose.msra.mxu0 0.0
        %2278 = vmatprep.subr.mxu0 0.0
        %2279 = vmatpush1.xpose.msra.mxu0 0.0
        %2280 = vmatprep.subr.mxu0 0.0
        %2281 = vmatpush1.xpose.msra.mxu0 0.0
        %2282 = vmatprep.subr.mxu0 0.0
        %2283 = vmatpush1.xpose.msra.mxu0 0.0
        %2284 = vmatprep.subr.mxu0 0.0
        %2285 = vmatpush1.xpose.msra.mxu0 0.0
        %2286 = vmatprep.subr.mxu0 0.0
        %2287 = vmatpush1.xpose.msra.mxu0 0.0
        %2288 = vmatprep.subr.mxu0 0.0
        %2289 = vmatpush1.xpose.msra.mxu0 0.0
        %2290 = vmatprep.subr.mxu0 0.0
        %2291 = vmatpush1.xpose.msra.mxu0 0.0
        %2292 = vmatprep.subr.mxu0 0.0
        %2293 = vmatpush1.xpose.msra.mxu0 0.0
        %2294 = vmatprep.subr.mxu0 0.0
        %2295 = vmatpush1.xpose.msra.mxu0 0.0
        %2296 = vmatprep.subr.mxu0 0.0
        %2297 = vmatpush1.xpose.msra.mxu0 0.0
        %2298 = vmatprep.subr.mxu0 0.0
        %2299 = vmatpush1.xpose.msra.mxu0 0.0
        %2300 = vmatprep.subr.mxu0 0.0
        %2301 = vmatpush1.xpose.msra.mxu0 0.0
        %2302 = vmatprep.subr.mxu0 0.0
        %2303 = vmatpush1.xpose.msra.mxu0 0.0
        %2304 = vmatprep.subr.mxu0 0.0
        %2305 = vmatpush1.xpose.msra.mxu0 0.0
        %2306 = vmatprep.subr.mxu0 0.0
        %2307 = vmatpush1.xpose.msra.mxu0 0.0
        %2308 = vmatprep.subr.mxu0 0.0
        %2309 = vmatpush1.xpose.msra.mxu0 0.0
        %2310 = vmatprep.subr.mxu0 0.0
        %2311 = vmatpush1.xpose.msra.mxu0 0.0
        %2312 = vmatprep.subr.mxu0 0.0
        %2313 = vmatpush1.xpose.msra.mxu0 0.0
        %2314 = vmatprep.subr.mxu0 0.0
        %2315 = vmatpush1.xpose.msra.mxu0 0.0
        %2316 = vmatprep.mubr.f32.mxu0 0.0
        %2317 = vmatmul.mubr.f32.gmra.mrb[0].mxu0 %v2247
        %v2318 = vpop.f32.mrb[0].mxu0
        %v2319 = vadd.f32 0.0, %v2318
        %v2320 = vpop.f32.mrb[0].mxu0
        %2321 = vdwg.mxu0
        %v2322 = vmul.f32 %v2319, 0.35355338
        %v2323 = vadd.f32 %v2322, %v549
        %v2324 = vsel %vm883, %v2323, -inf
        %2325 = vmax.xlane.f32.xlu0 %v2324
        %v2326 = vpop.xlane.xlu0 %2325
        %v2327 = vsub.f32 %v2323, %v2326
        %v2328 = vmul.f32 %v2327, 1.442695
        %v2329 = vpow.pop %v2328
        %v2330 = vsel %vm883, %v2329, 0.0
        %2331 = vadd.xlane.f32.xlu0 %v2330
        %v2332 = vpop.xlane.xlu0 %2331
        %v2333 = vrcp.pop %v2332
        %v2334 = vmul.f32 %v2329, %v2333
        %v2336 = vsel %vm883, %v2334, 0
        %2338 = vmatprep.subr.mxu0 0.0
        %2339 = vmatpush1.msra.mxu0 %v2217
        %2340 = vmatprep.subr.mxu0 0.0
        %2341 = vmatpush1.msra.mxu0 0.0
        %2342 = vmatprep.subr.mxu0 0.0
        %2343 = vmatpush1.msra.mxu0 0.0
        %2344 = vmatprep.subr.mxu0 0.0
        %2345 = vmatpush1.msra.mxu0 0.0
        %2346 = vmatprep.subr.mxu0 0.0
        %2347 = vmatpush1.msra.mxu0 0.0
        %2348 = vmatprep.subr.mxu0 0.0
        %2349 = vmatpush1.msra.mxu0 0.0
        %2350 = vmatprep.subr.mxu0 0.0
        %2351 = vmatpush1.msra.mxu0 0.0
        %2352 = vmatprep.subr.mxu0 0.0
        %2353 = vmatpush1.msra.mxu0 0.0
        %2354 = vmatprep.subr.mxu0 0.0
        %2355 = vmatpush1.msra.mxu0 0.0
        %2356 = vmatprep.subr.mxu0 0.0
        %2357 = vmatpush1.msra.mxu0 0.0
        %2358 = vmatprep.subr.mxu0 0.0
        %2359 = vmatpush1.msra.mxu0 0.0
        %2360 = vmatprep.subr.mxu0 0.0
        %2361 = vmatpush1.msra.mxu0 0.0
        %2362 = vmatprep.subr.mxu0 0.0
        %2363 = vmatpush1.msra.mxu0 0.0
        %2364 = vmatprep.subr.mxu0 0.0
        %2365 = vmatpush1.msra.mxu0 0.0
        %2366 = vmatprep.subr.mxu0 0.0
        %2367 = vmatpush1.msra.mxu0 0.0
        %2368 = vmatprep.subr.mxu0 0.0
        %2369 = vmatpush1.msra.mxu0 0.0
        %2370 = vmatprep.subr.mxu0 0.0
        %2371 = vmatpush1.msra.mxu0 0.0
        %2372 = vmatprep.subr.mxu0 0.0
        %2373 = vmatpush1.msra.mxu0 0.0
        %2374 = vmatprep.subr.mxu0 0.0
        %2375 = vmatpush1.msra.mxu0 0.0
        %2376 = vmatprep.subr.mxu0 0.0
        %2377 = vmatpush1.msra.mxu0 0.0
        %2378 = vmatprep.subr.mxu0 0.0
        %2379 = vmatpush1.msra.mxu0 0.0
        %2380 = vmatprep.subr.mxu0 0.0
        %2381 = vmatpush1.msra.mxu0 0.0
        %2382 = vmatprep.subr.mxu0 0.0
        %2383 = vmatpush1.msra.mxu0 0.0
        %2384 = vmatprep.subr.mxu0 0.0
        %2385 = vmatpush1.msra.mxu0 0.0
        %2386 = vmatprep.subr.mxu0 0.0
        %2387 = vmatpush1.msra.mxu0 0.0
        %2388 = vmatprep.subr.mxu0 0.0
        %2389 = vmatpush1.msra.mxu0 0.0
        %2390 = vmatprep.subr.mxu0 0.0
        %2391 = vmatpush1.msra.mxu0 0.0
        %2392 = vmatprep.subr.mxu0 0.0
        %2393 = vmatpush1.msra.mxu0 0.0
        %2394 = vmatprep.subr.mxu0 0.0
        %2395 = vmatpush1.msra.mxu0 0.0
        %2396 = vmatprep.subr.mxu0 0.0
        %2397 = vmatpush1.msra.mxu0 0.0
        %2398 = vmatprep.subr.mxu0 0.0
        %2399 = vmatpush1.msra.mxu0 0.0
        %2400 = vmatprep.subr.mxu0 0.0
        %2401 = vmatpush1.msra.mxu0 0.0
        %2402 = vmatprep.mubr.f32.mxu0 0.0
        %2403 = vmatmul.mubr.f32.gmra.mrb[0].mxu0 %v2336
        %v2404 = vpop.f32.mrb[0].mxu0
        %v2405 = vadd.f32 0.0, %v2404
        %v2406 = vpop.f32.mrb[0].mxu0
        %2407 = vdwg.mxu0
        %v2409 = vsel %vm804, %v2405, 0
        %2411 = vmatprep.subr.mxu0 0.0
        %2412 = vmatpush1.msra.mxu0 %v2221
        %2413 = vmatprep.subr.mxu0 0.0
        %2414 = vmatpush1.msra.mxu0 %v2222
        %2415 = vmatprep.subr.mxu0 0.0
        %2416 = vmatpush1.msra.mxu0 %v2223
        %2417 = vmatprep.subr.mxu0 0.0
        %2418 = vmatpush1.msra.mxu0 %v2224
        %2419 = vmatprep.subr.mxu0 0.0
        %2420 = vmatpush1.msra.mxu0 0.0
        %2421 = vmatprep.subr.mxu0 0.0
        %2422 = vmatpush1.msra.mxu0 0.0
        %2423 = vmatprep.subr.mxu0 0.0
        %2424 = vmatpush1.msra.mxu0 0.0
        %2425 = vmatprep.subr.mxu0 0.0
        %2426 = vmatpush1.msra.mxu0 0.0
        %2427 = vmatprep.subr.mxu0 0.0
        %2428 = vmatpush1.msra.mxu0 0.0
        %2429 = vmatprep.subr.mxu0 0.0
        %2430 = vmatpush1.msra.mxu0 0.0
        %2431 = vmatprep.subr.mxu0 0.0
        %2432 = vmatpush1.msra.mxu0 0.0
        %2433 = vmatprep.subr.mxu0 0.0
        %2434 = vmatpush1.msra.mxu0 0.0
        %2435 = vmatprep.subr.mxu0 0.0
        %2436 = vmatpush1.msra.mxu0 0.0
        %2437 = vmatprep.subr.mxu0 0.0
        %2438 = vmatpush1.msra.mxu0 0.0
        %2439 = vmatprep.subr.mxu0 0.0
        %2440 = vmatpush1.msra.mxu0 0.0
        %2441 = vmatprep.subr.mxu0 0.0
        %2442 = vmatpush1.msra.mxu0 0.0
        %2443 = vmatprep.subr.mxu0 0.0
        %2444 = vmatpush1.msra.mxu0 0.0
        %2445 = vmatprep.subr.mxu0 0.0
        %2446 = vmatpush1.msra.mxu0 0.0
        %2447 = vmatprep.subr.mxu0 0.0
        %2448 = vmatpush1.msra.mxu0 0.0
        %2449 = vmatprep.subr.mxu0 0.0
        %2450 = vmatpush1.msra.mxu0 0.0
        %2451 = vmatprep.subr.mxu0 0.0
        %2452 = vmatpush1.msra.mxu0 0.0
        %2453 = vmatprep.subr.mxu0 0.0
        %2454 = vmatpush1.msra.mxu0 0.0
        %2455 = vmatprep.subr.mxu0 0.0
        %2456 = vmatpush1.msra.mxu0 0.0
        %2457 = vmatprep.subr.mxu0 0.0
        %2458 = vmatpush1.msra.mxu0 0.0
        %2459 = vmatprep.subr.mxu0 0.0
        %2460 = vmatpush1.msra.mxu0 0.0
        %2461 = vmatprep.subr.mxu0 0.0
        %2462 = vmatpush1.msra.mxu0 0.0
        %2463 = vmatprep.subr.mxu0 0.0
        %2464 = vmatpush1.msra.mxu0 0.0
        %2465 = vmatprep.subr.mxu0 0.0
        %2466 = vmatpush1.msra.mxu0 0.0
        %2467 = vmatprep.subr.mxu0 0.0
        %2468 = vmatpush1.msra.mxu0 0.0
        %2469 = vmatprep.subr.mxu0 0.0
        %2470 = vmatpush1.msra.mxu0 0.0
        %2471 = vmatprep.subr.mxu0 0.0
        %2472 = vmatpush1.msra.mxu0 0.0
        %2473 = vmatprep.subr.mxu0 0.0
        %2474 = vmatpush1.msra.mxu0 0.0
        %2475 = vmatprep.mubr.f32.mxu0 0.0
        %2476 = vmatmul.mubr.f32.gmra.mrb[0].mxu0 %v2409
        %v2477 = vpop.f32.mrb[0].mxu0
        %v2478 = vadd.f32 0.0, %v2477
        %v2479 = vpop.f32.mrb[0].mxu0
        %2480 = vdwg.mxu0
        %v2481 = vadd.f32 %v2245, %v2478
        %2482 = vrot.lane.b32.xlu0 %v2146, 96
        %v2483 = vpop.permute.xlu0 %2482
        %2484 = vrot.lane.b32.xlu0 %v2148, 96
        %v2485 = vpop.permute.xlu0 %2484
        %v2486 = vsel %vm804, %v2483, 0
        %v2488 = vsel %vm804, %v2485, 0
        %2490 = vmatprep.subr.mxu0 0.0
        %2491 = vmatpush1.xpose.msra.mxu0 %v2488
        %2492 = vmatprep.subr.mxu0 0.0
        %2493 = vmatpush1.xpose.msra.mxu0 0.0
        %2494 = vmatprep.subr.mxu0 0.0
        %2495 = vmatpush1.xpose.msra.mxu0 0.0
        %2496 = vmatprep.subr.mxu0 0.0
        %2497 = vmatpush1.xpose.msra.mxu0 0.0
        %2498 = vmatprep.subr.mxu0 0.0
        %2499 = vmatpush1.xpose.msra.mxu0 0.0
        %2500 = vmatprep.subr.mxu0 0.0
        %2501 = vmatpush1.xpose.msra.mxu0 0.0
        %2502 = vmatprep.subr.mxu0 0.0
        %2503 = vmatpush1.xpose.msra.mxu0 0.0
        %2504 = vmatprep.subr.mxu0 0.0
        %2505 = vmatpush1.xpose.msra.mxu0 0.0
        %2506 = vmatprep.subr.mxu0 0.0
        %2507 = vmatpush1.xpose.msra.mxu0 0.0
        %2508 = vmatprep.subr.mxu0 0.0
        %2509 = vmatpush1.xpose.msra.mxu0 0.0
        %2510 = vmatprep.subr.mxu0 0.0
        %2511 = vmatpush1.xpose.msra.mxu0 0.0
        %2512 = vmatprep.subr.mxu0 0.0
        %2513 = vmatpush1.xpose.msra.mxu0 0.0
        %2514 = vmatprep.subr.mxu0 0.0
        %2515 = vmatpush1.xpose.msra.mxu0 0.0
        %2516 = vmatprep.subr.mxu0 0.0
        %2517 = vmatpush1.xpose.msra.mxu0 0.0
        %2518 = vmatprep.subr.mxu0 0.0
        %2519 = vmatpush1.xpose.msra.mxu0 0.0
        %2520 = vmatprep.subr.mxu0 0.0
        %2521 = vmatpush1.xpose.msra.mxu0 0.0
        %2522 = vmatprep.subr.mxu0 0.0
        %2523 = vmatpush1.xpose.msra.mxu0 0.0
        %2524 = vmatprep.subr.mxu0 0.0
        %2525 = vmatpush1.xpose.msra.mxu0 0.0
        %2526 = vmatprep.subr.mxu0 0.0
        %2527 = vmatpush1.xpose.msra.mxu0 0.0
        %2528 = vmatprep.subr.mxu0 0.0
        %2529 = vmatpush1.xpose.msra.mxu0 0.0
        %2530 = vmatprep.subr.mxu0 0.0
        %2531 = vmatpush1.xpose.msra.mxu0 0.0
        %2532 = vmatprep.subr.mxu0 0.0
        %2533 = vmatpush1.xpose.msra.mxu0 0.0
        %2534 = vmatprep.subr.mxu0 0.0
        %2535 = vmatpush1.xpose.msra.mxu0 0.0
        %2536 = vmatprep.subr.mxu0 0.0
        %2537 = vmatpush1.xpose.msra.mxu0 0.0
        %2538 = vmatprep.subr.mxu0 0.0
        %2539 = vmatpush1.xpose.msra.mxu0 0.0
        %2540 = vmatprep.subr.mxu0 0.0
        %2541 = vmatpush1.xpose.msra.mxu0 0.0
        %2542 = vmatprep.subr.mxu0 0.0
        %2543 = vmatpush1.xpose.msra.mxu0 0.0
        %2544 = vmatprep.subr.mxu0 0.0
        %2545 = vmatpush1.xpose.msra.mxu0 0.0
        %2546 = vmatprep.subr.mxu0 0.0
        %2547 = vmatpush1.xpose.msra.mxu0 0.0
        %2548 = vmatprep.subr.mxu0 0.0
        %2549 = vmatpush1.xpose.msra.mxu0 0.0
        %2550 = vmatprep.subr.mxu0 0.0
        %2551 = vmatpush1.xpose.msra.mxu0 0.0
        %2552 = vmatprep.subr.mxu0 0.0
        %2553 = vmatpush1.xpose.msra.mxu0 0.0
        %2554 = vmatprep.mubr.f32.mxu0 0.0
        %2555 = vmatmul.mubr.f32.gmra.mrb[0].mxu0 %v2486
        %v2556 = vpop.f32.mrb[0].mxu0
        %v2557 = vadd.f32 0.0, %v2556
        %v2558 = vpop.f32.mrb[0].mxu0
        %2559 = vdwg.mxu0
        %v2560 = vmul.f32 %v2557, 0.35355338
        %v2561 = vadd.f32 %v2560, %v549
        %v2562 = vsel %vm883, %v2561, -inf
        %2563 = vmax.xlane.f32.xlu0 %v2562
        %v2564 = vpop.xlane.xlu0 %2563
        %v2565 = vsub.f32 %v2561, %v2564
        %v2566 = vmul.f32 %v2565, 1.442695
        %v2567 = vpow.pop %v2566
        %v2568 = vsel %vm883, %v2567, 0.0
        %2569 = vadd.xlane.f32.xlu0 %v2568
        %v2570 = vpop.xlane.xlu0 %2569
        %v2571 = vrcp.pop %v2570
        %v2572 = vmul.f32 %v2567, %v2571
        %2574 = vrot.lane.b32.xlu0 %v2217, 96
        %v2575 = vpop.permute.xlu0 %2574
        %v2578 = vsel %vm883, %v2572, 0
        %2580 = vmatprep.subr.mxu0 0.0
        %2581 = vmatpush1.msra.mxu0 %v2575
        %2582 = vmatprep.subr.mxu0 0.0
        %2583 = vmatpush1.msra.mxu0 0.0
        %2584 = vmatprep.subr.mxu0 0.0
        %2585 = vmatpush1.msra.mxu0 0.0
        %2586 = vmatprep.subr.mxu0 0.0
        %2587 = vmatpush1.msra.mxu0 0.0
        %2588 = vmatprep.subr.mxu0 0.0
        %2589 = vmatpush1.msra.mxu0 0.0
        %2590 = vmatprep.subr.mxu0 0.0
        %2591 = vmatpush1.msra.mxu0 0.0
        %2592 = vmatprep.subr.mxu0 0.0
        %2593 = vmatpush1.msra.mxu0 0.0
        %2594 = vmatprep.subr.mxu0 0.0
        %2595 = vmatpush1.msra.mxu0 0.0
        %2596 = vmatprep.subr.mxu0 0.0
        %2597 = vmatpush1.msra.mxu0 0.0
        %2598 = vmatprep.subr.mxu0 0.0
        %2599 = vmatpush1.msra.mxu0 0.0
        %2600 = vmatprep.subr.mxu0 0.0
        %2601 = vmatpush1.msra.mxu0 0.0
        %2602 = vmatprep.subr.mxu0 0.0
        %2603 = vmatpush1.msra.mxu0 0.0
        %2604 = vmatprep.subr.mxu0 0.0
        %2605 = vmatpush1.msra.mxu0 0.0
        %2606 = vmatprep.subr.mxu0 0.0
        %2607 = vmatpush1.msra.mxu0 0.0
        %2608 = vmatprep.subr.mxu0 0.0
        %2609 = vmatpush1.msra.mxu0 0.0
        %2610 = vmatprep.subr.mxu0 0.0
        %2611 = vmatpush1.msra.mxu0 0.0
        %2612 = vmatprep.subr.mxu0 0.0
        %2613 = vmatpush1.msra.mxu0 0.0
        %2614 = vmatprep.subr.mxu0 0.0
        %2615 = vmatpush1.msra.mxu0 0.0
        %2616 = vmatprep.subr.mxu0 0.0
        %2617 = vmatpush1.msra.mxu0 0.0
        %2618 = vmatprep.subr.mxu0 0.0
        %2619 = vmatpush1.msra.mxu0 0.0
        %2620 = vmatprep.subr.mxu0 0.0
        %2621 = vmatpush1.msra.mxu0 0.0
        %2622 = vmatprep.subr.mxu0 0.0
        %2623 = vmatpush1.msra.mxu0 0.0
        %2624 = vmatprep.subr.mxu0 0.0
        %2625 = vmatpush1.msra.mxu0 0.0
        %2626 = vmatprep.subr.mxu0 0.0
        %2627 = vmatpush1.msra.mxu0 0.0
        %2628 = vmatprep.subr.mxu0 0.0
        %2629 = vmatpush1.msra.mxu0 0.0
        %2630 = vmatprep.subr.mxu0 0.0
        %2631 = vmatpush1.msra.mxu0 0.0
        %2632 = vmatprep.subr.mxu0 0.0
        %2633 = vmatpush1.msra.mxu0 0.0
        %2634 = vmatprep.subr.mxu0 0.0
        %2635 = vmatpush1.msra.mxu0 0.0
        %2636 = vmatprep.subr.mxu0 0.0
        %2637 = vmatpush1.msra.mxu0 0.0
        %2638 = vmatprep.subr.mxu0 0.0
        %2639 = vmatpush1.msra.mxu0 0.0
        %2640 = vmatprep.subr.mxu0 0.0
        %2641 = vmatpush1.msra.mxu0 0.0
        %2642 = vmatprep.subr.mxu0 0.0
        %2643 = vmatpush1.msra.mxu0 0.0
        %2644 = vmatprep.mubr.f32.mxu0 0.0
        %2645 = vmatmul.mubr.f32.gmra.mrb[0].mxu0 %v2578
        %v2646 = vpop.f32.mrb[0].mxu0
        %v2647 = vadd.f32 0.0, %v2646
        %v2648 = vpop.f32.mrb[0].mxu0
        %2649 = vdwg.mxu0
        %v2651 = vsel %vm804, %v2647, 0
        %2653 = vmatprep.subr.mxu0 0.0
        %2654 = vmatpush1.msra.mxu0 %v2225
        %2655 = vmatprep.subr.mxu0 0.0
        %2656 = vmatpush1.msra.mxu0 %v2226
        %2657 = vmatprep.subr.mxu0 0.0
        %2658 = vmatpush1.msra.mxu0 %v2227
        %2659 = vmatprep.subr.mxu0 0.0
        %2660 = vmatpush1.msra.mxu0 %v2228
        %2661 = vmatprep.subr.mxu0 0.0
        %2662 = vmatpush1.msra.mxu0 0.0
        %2663 = vmatprep.subr.mxu0 0.0
        %2664 = vmatpush1.msra.mxu0 0.0
        %2665 = vmatprep.subr.mxu0 0.0
        %2666 = vmatpush1.msra.mxu0 0.0
        %2667 = vmatprep.subr.mxu0 0.0
        %2668 = vmatpush1.msra.mxu0 0.0
        %2669 = vmatprep.subr.mxu0 0.0
        %2670 = vmatpush1.msra.mxu0 0.0
        %2671 = vmatprep.subr.mxu0 0.0
        %2672 = vmatpush1.msra.mxu0 0.0
        %2673 = vmatprep.subr.mxu0 0.0
        %2674 = vmatpush1.msra.mxu0 0.0
        %2675 = vmatprep.subr.mxu0 0.0
        %2676 = vmatpush1.msra.mxu0 0.0
        %2677 = vmatprep.subr.mxu0 0.0
        %2678 = vmatpush1.msra.mxu0 0.0
        %2679 = vmatprep.subr.mxu0 0.0
        %2680 = vmatpush1.msra.mxu0 0.0
        %2681 = vmatprep.subr.mxu0 0.0
        %2682 = vmatpush1.msra.mxu0 0.0
        %2683 = vmatprep.subr.mxu0 0.0
        %2684 = vmatpush1.msra.mxu0 0.0
        %2685 = vmatprep.subr.mxu0 0.0
        %2686 = vmatpush1.msra.mxu0 0.0
        %2687 = vmatprep.subr.mxu0 0.0
        %2688 = vmatpush1.msra.mxu0 0.0
        %2689 = vmatprep.subr.mxu0 0.0
        %2690 = vmatpush1.msra.mxu0 0.0
        %2691 = vmatprep.subr.mxu0 0.0
        %2692 = vmatpush1.msra.mxu0 0.0
        %2693 = vmatprep.subr.mxu0 0.0
        %2694 = vmatpush1.msra.mxu0 0.0
        %2695 = vmatprep.subr.mxu0 0.0
        %2696 = vmatpush1.msra.mxu0 0.0
        %2697 = vmatprep.subr.mxu0 0.0
        %2698 = vmatpush1.msra.mxu0 0.0
        %2699 = vmatprep.subr.mxu0 0.0
        %2700 = vmatpush1.msra.mxu0 0.0
        %2701 = vmatprep.subr.mxu0 0.0
        %2702 = vmatpush1.msra.mxu0 0.0
        %2703 = vmatprep.subr.mxu0 0.0
        %2704 = vmatpush1.msra.mxu0 0.0
        %2705 = vmatprep.subr.mxu0 0.0
        %2706 = vmatpush1.msra.mxu0 0.0
        %2707 = vmatprep.subr.mxu0 0.0
        %2708 = vmatpush1.msra.mxu0 0.0
        %2709 = vmatprep.subr.mxu0 0.0
        %2710 = vmatpush1.msra.mxu0 0.0
        %2711 = vmatprep.subr.mxu0 0.0
        %2712 = vmatpush1.msra.mxu0 0.0
        %2713 = vmatprep.subr.mxu0 0.0
        %2714 = vmatpush1.msra.mxu0 0.0
        %2715 = vmatprep.subr.mxu0 0.0
        %2716 = vmatpush1.msra.mxu0 0.0
        %2717 = vmatprep.mubr.f32.mxu0 0.0
        %2718 = vmatmul.mubr.f32.gmra.mrb[0].mxu0 %v2651
        %v2719 = vpop.f32.mrb[0].mxu0
        %v2720 = vadd.f32 0.0, %v2719
        %v2721 = vpop.f32.mrb[0].mxu0
        %2722 = vdwg.mxu0
        %v2723 = vadd.f32 %v2481, %v2720
        %2724 = vrot.lane.b32.xlu0 %v2146, 64
        %v2725 = vpop.permute.xlu0 %2724
        %2726 = vrot.lane.b32.xlu0 %v2148, 64
        %v2727 = vpop.permute.xlu0 %2726
        %v2728 = vsel %vm804, %v2725, 0
        %v2730 = vsel %vm804, %v2727, 0
        %2732 = vmatprep.subr.mxu0 0.0
        %2733 = vmatpush1.xpose.msra.mxu0 %v2730
        %2734 = vmatprep.subr.mxu0 0.0
        %2735 = vmatpush1.xpose.msra.mxu0 0.0
        %2736 = vmatprep.subr.mxu0 0.0
        %2737 = vmatpush1.xpose.msra.mxu0 0.0
        %2738 = vmatprep.subr.mxu0 0.0
        %2739 = vmatpush1.xpose.msra.mxu0 0.0
        %2740 = vmatprep.subr.mxu0 0.0
        %2741 = vmatpush1.xpose.msra.mxu0 0.0
        %2742 = vmatprep.subr.mxu0 0.0
        %2743 = vmatpush1.xpose.msra.mxu0 0.0
        %2744 = vmatprep.subr.mxu0 0.0
        %2745 = vmatpush1.xpose.msra.mxu0 0.0
        %2746 = vmatprep.subr.mxu0 0.0
        %2747 = vmatpush1.xpose.msra.mxu0 0.0
        %2748 = vmatprep.subr.mxu0 0.0
        %2749 = vmatpush1.xpose.msra.mxu0 0.0
        %2750 = vmatprep.subr.mxu0 0.0
        %2751 = vmatpush1.xpose.msra.mxu0 0.0
        %2752 = vmatprep.subr.mxu0 0.0
        %2753 = vmatpush1.xpose.msra.mxu0 0.0
        %2754 = vmatprep.subr.mxu0 0.0
        %2755 = vmatpush1.xpose.msra.mxu0 0.0
        %2756 = vmatprep.subr.mxu0 0.0
        %2757 = vmatpush1.xpose.msra.mxu0 0.0
        %2758 = vmatprep.subr.mxu0 0.0
        %2759 = vmatpush1.xpose.msra.mxu0 0.0
        %2760 = vmatprep.subr.mxu0 0.0
        %2761 = vmatpush1.xpose.msra.mxu0 0.0
        %2762 = vmatprep.subr.mxu0 0.0
        %2763 = vmatpush1.xpose.msra.mxu0 0.0
        %2764 = vmatprep.subr.mxu0 0.0
        %2765 = vmatpush1.xpose.msra.mxu0 0.0
        %2766 = vmatprep.subr.mxu0 0.0
        %2767 = vmatpush1.xpose.msra.mxu0 0.0
        %2768 = vmatprep.subr.mxu0 0.0
        %2769 = vmatpush1.xpose.msra.mxu0 0.0
        %2770 = vmatprep.subr.mxu0 0.0
        %2771 = vmatpush1.xpose.msra.mxu0 0.0
        %2772 = vmatprep.subr.mxu0 0.0
        %2773 = vmatpush1.xpose.msra.mxu0 0.0
        %2774 = vmatprep.subr.mxu0 0.0
        %2775 = vmatpush1.xpose.msra.mxu0 0.0
        %2776 = vmatprep.subr.mxu0 0.0
        %2777 = vmatpush1.xpose.msra.mxu0 0.0
        %2778 = vmatprep.subr.mxu0 0.0
        %2779 = vmatpush1.xpose.msra.mxu0 0.0
        %2780 = vmatprep.subr.mxu0 0.0
        %2781 = vmatpush1.xpose.msra.mxu0 0.0
        %2782 = vmatprep.subr.mxu0 0.0
        %2783 = vmatpush1.xpose.msra.mxu0 0.0
        %2784 = vmatprep.subr.mxu0 0.0
        %2785 = vmatpush1.xpose.msra.mxu0 0.0
        %2786 = vmatprep.subr.mxu0 0.0
        %2787 = vmatpush1.xpose.msra.mxu0 0.0
        %2788 = vmatprep.subr.mxu0 0.0
        %2789 = vmatpush1.xpose.msra.mxu0 0.0
        %2790 = vmatprep.subr.mxu0 0.0
        %2791 = vmatpush1.xpose.msra.mxu0 0.0
        %2792 = vmatprep.subr.mxu0 0.0
        %2793 = vmatpush1.xpose.msra.mxu0 0.0
        %2794 = vmatprep.subr.mxu0 0.0
        %2795 = vmatpush1.xpose.msra.mxu0 0.0
        %2796 = vmatprep.mubr.f32.mxu0 0.0
        %2797 = vmatmul.mubr.f32.gmra.mrb[0].mxu0 %v2728
        %v2798 = vpop.f32.mrb[0].mxu0
        %v2799 = vadd.f32 0.0, %v2798
        %v2800 = vpop.f32.mrb[0].mxu0
        %2801 = vdwg.mxu0
        %v2802 = vmul.f32 %v2799, 0.35355338
        %v2803 = vadd.f32 %v2802, %v549
        %v2804 = vsel %vm883, %v2803, -inf
        %2805 = vmax.xlane.f32.xlu0 %v2804
        %v2806 = vpop.xlane.xlu0 %2805
        %v2807 = vsub.f32 %v2803, %v2806
        %v2808 = vmul.f32 %v2807, 1.442695
        %v2809 = vpow.pop %v2808
        %v2810 = vsel %vm883, %v2809, 0.0
        %2811 = vadd.xlane.f32.xlu0 %v2810
        %v2812 = vpop.xlane.xlu0 %2811
        %v2813 = vrcp.pop %v2812
        %v2814 = vmul.f32 %v2809, %v2813
        %2815 = vrot.lane.b32.xlu0 %v2217, 64
        %v2816 = vpop.permute.xlu0 %2815
        %v2819 = vsel %vm883, %v2814, 0
        %2821 = vmatprep.subr.mxu0 0.0
        %2822 = vmatpush1.msra.mxu0 %v2816
        %2823 = vmatprep.subr.mxu0 0.0
        %2824 = vmatpush1.msra.mxu0 0.0
        %2825 = vmatprep.subr.mxu0 0.0
        %2826 = vmatpush1.msra.mxu0 0.0
        %2827 = vmatprep.subr.mxu0 0.0
        %2828 = vmatpush1.msra.mxu0 0.0
        %2829 = vmatprep.subr.mxu0 0.0
        %2830 = vmatpush1.msra.mxu0 0.0
        %2831 = vmatprep.subr.mxu0 0.0
        %2832 = vmatpush1.msra.mxu0 0.0
        %2833 = vmatprep.subr.mxu0 0.0
        %2834 = vmatpush1.msra.mxu0 0.0
        %2835 = vmatprep.subr.mxu0 0.0
        %2836 = vmatpush1.msra.mxu0 0.0
        %2837 = vmatprep.subr.mxu0 0.0
        %2838 = vmatpush1.msra.mxu0 0.0
        %2839 = vmatprep.subr.mxu0 0.0
        %2840 = vmatpush1.msra.mxu0 0.0
        %2841 = vmatprep.subr.mxu0 0.0
        %2842 = vmatpush1.msra.mxu0 0.0
        %2843 = vmatprep.subr.mxu0 0.0
        %2844 = vmatpush1.msra.mxu0 0.0
        %2845 = vmatprep.subr.mxu0 0.0
        %2846 = vmatpush1.msra.mxu0 0.0
        %2847 = vmatprep.subr.mxu0 0.0
        %2848 = vmatpush1.msra.mxu0 0.0
        %2849 = vmatprep.subr.mxu0 0.0
        %2850 = vmatpush1.msra.mxu0 0.0
        %2851 = vmatprep.subr.mxu0 0.0
        %2852 = vmatpush1.msra.mxu0 0.0
        %2853 = vmatprep.subr.mxu0 0.0
        %2854 = vmatpush1.msra.mxu0 0.0
        %2855 = vmatprep.subr.mxu0 0.0
        %2856 = vmatpush1.msra.mxu0 0.0
        %2857 = vmatprep.subr.mxu0 0.0
        %2858 = vmatpush1.msra.mxu0 0.0
        %2859 = vmatprep.subr.mxu0 0.0
        %2860 = vmatpush1.msra.mxu0 0.0
        %2861 = vmatprep.subr.mxu0 0.0
        %2862 = vmatpush1.msra.mxu0 0.0
        %2863 = vmatprep.subr.mxu0 0.0
        %2864 = vmatpush1.msra.mxu0 0.0
        %2865 = vmatprep.subr.mxu0 0.0
        %2866 = vmatpush1.msra.mxu0 0.0
        %2867 = vmatprep.subr.mxu0 0.0
        %2868 = vmatpush1.msra.mxu0 0.0
        %2869 = vmatprep.subr.mxu0 0.0
        %2870 = vmatpush1.msra.mxu0 0.0
        %2871 = vmatprep.subr.mxu0 0.0
        %2872 = vmatpush1.msra.mxu0 0.0
        %2873 = vmatprep.subr.mxu0 0.0
        %2874 = vmatpush1.msra.mxu0 0.0
        %2875 = vmatprep.subr.mxu0 0.0
        %2876 = vmatpush1.msra.mxu0 0.0
        %2877 = vmatprep.subr.mxu0 0.0
        %2878 = vmatpush1.msra.mxu0 0.0
        %2879 = vmatprep.subr.mxu0 0.0
        %2880 = vmatpush1.msra.mxu0 0.0
        %2881 = vmatprep.subr.mxu0 0.0
        %2882 = vmatpush1.msra.mxu0 0.0
        %2883 = vmatprep.subr.mxu0 0.0
        %2884 = vmatpush1.msra.mxu0 0.0
        %2885 = vmatprep.mubr.f32.mxu0 0.0
        %2886 = vmatmul.mubr.f32.gmra.mrb[0].mxu0 %v2819
        %v2887 = vpop.f32.mrb[0].mxu0
        %v2888 = vadd.f32 0.0, %v2887
        %v2889 = vpop.f32.mrb[0].mxu0
        %2890 = vdwg.mxu0
        %v2892 = vsel %vm804, %v2888, 0
        %2894 = vmatprep.subr.mxu0 0.0
        %2895 = vmatpush1.msra.mxu0 %v2229
        %2896 = vmatprep.subr.mxu0 0.0
        %2897 = vmatpush1.msra.mxu0 %v2230
        %2898 = vmatprep.subr.mxu0 0.0
        %2899 = vmatpush1.msra.mxu0 %v2231
        %2900 = vmatprep.subr.mxu0 0.0
        %2901 = vmatpush1.msra.mxu0 %v2232
        %2902 = vmatprep.subr.mxu0 0.0
        %2903 = vmatpush1.msra.mxu0 0.0
        %2904 = vmatprep.subr.mxu0 0.0
        %2905 = vmatpush1.msra.mxu0 0.0
        %2906 = vmatprep.subr.mxu0 0.0
        %2907 = vmatpush1.msra.mxu0 0.0
        %2908 = vmatprep.subr.mxu0 0.0
        %2909 = vmatpush1.msra.mxu0 0.0
        %2910 = vmatprep.subr.mxu0 0.0
        %2911 = vmatpush1.msra.mxu0 0.0
        %2912 = vmatprep.subr.mxu0 0.0
        %2913 = vmatpush1.msra.mxu0 0.0
        %2914 = vmatprep.subr.mxu0 0.0
        %2915 = vmatpush1.msra.mxu0 0.0
        %2916 = vmatprep.subr.mxu0 0.0
        %2917 = vmatpush1.msra.mxu0 0.0
        %2918 = vmatprep.subr.mxu0 0.0
        %2919 = vmatpush1.msra.mxu0 0.0
        %2920 = vmatprep.subr.mxu0 0.0
        %2921 = vmatpush1.msra.mxu0 0.0
        %2922 = vmatprep.subr.mxu0 0.0
        %2923 = vmatpush1.msra.mxu0 0.0
        %2924 = vmatprep.subr.mxu0 0.0
        %2925 = vmatpush1.msra.mxu0 0.0
        %2926 = vmatprep.subr.mxu0 0.0
        %2927 = vmatpush1.msra.mxu0 0.0
        %2928 = vmatprep.subr.mxu0 0.0
        %2929 = vmatpush1.msra.mxu0 0.0
        %2930 = vmatprep.subr.mxu0 0.0
        %2931 = vmatpush1.msra.mxu0 0.0
        %2932 = vmatprep.subr.mxu0 0.0
        %2933 = vmatpush1.msra.mxu0 0.0
        %2934 = vmatprep.subr.mxu0 0.0
        %2935 = vmatpush1.msra.mxu0 0.0
        %2936 = vmatprep.subr.mxu0 0.0
        %2937 = vmatpush1.msra.mxu0 0.0
        %2938 = vmatprep.subr.mxu0 0.0
        %2939 = vmatpush1.msra.mxu0 0.0
        %2940 = vmatprep.subr.mxu0 0.0
        %2941 = vmatpush1.msra.mxu0 0.0
        %2942 = vmatprep.subr.mxu0 0.0
        %2943 = vmatpush1.msra.mxu0 0.0
        %2944 = vmatprep.subr.mxu0 0.0
        %2945 = vmatpush1.msra.mxu0 0.0
        %2946 = vmatprep.subr.mxu0 0.0
        %2947 = vmatpush1.msra.mxu0 0.0
        %2948 = vmatprep.subr.mxu0 0.0
        %2949 = vmatpush1.msra.mxu0 0.0
        %2950 = vmatprep.subr.mxu0 0.0
        %2951 = vmatpush1.msra.mxu0 0.0
        %2952 = vmatprep.subr.mxu0 0.0
        %2953 = vmatpush1.msra.mxu0 0.0
        %2954 = vmatprep.subr.mxu0 0.0
        %2955 = vmatpush1.msra.mxu0 0.0
        %2956 = vmatprep.subr.mxu0 0.0
        %2957 = vmatpush1.msra.mxu0 0.0
        %2958 = vmatprep.mubr.f32.mxu0 0.0
        %2959 = vmatmul.mubr.f32.gmra.mrb[0].mxu0 %v2892
        %v2960 = vpop.f32.mrb[0].mxu0
        %v2961 = vadd.f32 0.0, %v2960
        %v2962 = vpop.f32.mrb[0].mxu0
        %2963 = vdwg.mxu0
        %v2964 = vadd.f32 %v2723, %v2961
        %2965 = vrot.lane.b32.xlu0 %v2146, 32
        %v2966 = vpop.permute.xlu0 %2965
        %2967 = vrot.lane.b32.xlu0 %v2148, 32
        %v2968 = vpop.permute.xlu0 %2967
        %v2969 = vsel %vm804, %v2966, 0
        %v2971 = vsel %vm804, %v2968, 0
        %2973 = vmatprep.subr.mxu0 0.0
        %2974 = vmatpush1.xpose.msra.mxu0 %v2971
        %2975 = vmatprep.subr.mxu0 0.0
        %2976 = vmatpush1.xpose.msra.mxu0 0.0
        %2977 = vmatprep.subr.mxu0 0.0
        %2978 = vmatpush1.xpose.msra.mxu0 0.0
        %2979 = vmatprep.subr.mxu0 0.0
        %2980 = vmatpush1.xpose.msra.mxu0 0.0
        %2981 = vmatprep.subr.mxu0 0.0
        %2982 = vmatpush1.xpose.msra.mxu0 0.0
        %2983 = vmatprep.subr.mxu0 0.0
        %2984 = vmatpush1.xpose.msra.mxu0 0.0
        %2985 = vmatprep.subr.mxu0 0.0
        %2986 = vmatpush1.xpose.msra.mxu0 0.0
        %2987 = vmatprep.subr.mxu0 0.0
        %2988 = vmatpush1.xpose.msra.mxu0 0.0
        %2989 = vmatprep.subr.mxu0 0.0
        %2990 = vmatpush1.xpose.msra.mxu0 0.0
        %2991 = vmatprep.subr.mxu0 0.0
        %2992 = vmatpush1.xpose.msra.mxu0 0.0
        %2993 = vmatprep.subr.mxu0 0.0
        %2994 = vmatpush1.xpose.msra.mxu0 0.0
        %2995 = vmatprep.subr.mxu0 0.0
        %2996 = vmatpush1.xpose.msra.mxu0 0.0
        %2997 = vmatprep.subr.mxu0 0.0
        %2998 = vmatpush1.xpose.msra.mxu0 0.0
        %2999 = vmatprep.subr.mxu0 0.0
        %3000 = vmatpush1.xpose.msra.mxu0 0.0
        %3001 = vmatprep.subr.mxu0 0.0
        %3002 = vmatpush1.xpose.msra.mxu0 0.0
        %3003 = vmatprep.subr.mxu0 0.0
        %3004 = vmatpush1.xpose.msra.mxu0 0.0
        %3005 = vmatprep.subr.mxu0 0.0
        %3006 = vmatpush1.xpose.msra.mxu0 0.0
        %3007 = vmatprep.subr.mxu0 0.0
        %3008 = vmatpush1.xpose.msra.mxu0 0.0
        %3009 = vmatprep.subr.mxu0 0.0
        %3010 = vmatpush1.xpose.msra.mxu0 0.0
        %3011 = vmatprep.subr.mxu0 0.0
        %3012 = vmatpush1.xpose.msra.mxu0 0.0
        %3013 = vmatprep.subr.mxu0 0.0
        %3014 = vmatpush1.xpose.msra.mxu0 0.0
        %3015 = vmatprep.subr.mxu0 0.0
        %3016 = vmatpush1.xpose.msra.mxu0 0.0
        %3017 = vmatprep.subr.mxu0 0.0
        %3018 = vmatpush1.xpose.msra.mxu0 0.0
        %3019 = vmatprep.subr.mxu0 0.0
        %3020 = vmatpush1.xpose.msra.mxu0 0.0
        %3021 = vmatprep.subr.mxu0 0.0
        %3022 = vmatpush1.xpose.msra.mxu0 0.0
        %3023 = vmatprep.subr.mxu0 0.0
        %3024 = vmatpush1.xpose.msra.mxu0 0.0
        %3025 = vmatprep.subr.mxu0 0.0
        %3026 = vmatpush1.xpose.msra.mxu0 0.0
        %3027 = vmatprep.subr.mxu0 0.0
        %3028 = vmatpush1.xpose.msra.mxu0 0.0
        %3029 = vmatprep.subr.mxu0 0.0
        %3030 = vmatpush1.xpose.msra.mxu0 0.0
        %3031 = vmatprep.subr.mxu0 0.0
        %3032 = vmatpush1.xpose.msra.mxu0 0.0
        %3033 = vmatprep.subr.mxu0 0.0
        %3034 = vmatpush1.xpose.msra.mxu0 0.0
        %3035 = vmatprep.subr.mxu0 0.0
        %3036 = vmatpush1.xpose.msra.mxu0 0.0
        %3037 = vmatprep.mubr.f32.mxu0 0.0
        %3038 = vmatmul.mubr.f32.gmra.mrb[0].mxu0 %v2969
        %v3039 = vpop.f32.mrb[0].mxu0
        %v3040 = vadd.f32 0.0, %v3039
        %v3041 = vpop.f32.mrb[0].mxu0
        %3042 = vdwg.mxu0
        %v3043 = vmul.f32 %v3040, 0.35355338
        %v3044 = vadd.f32 %v3043, %v549
        %v3045 = vsel %vm883, %v3044, -inf
        %3046 = vmax.xlane.f32.xlu0 %v3045
        %v3047 = vpop.xlane.xlu0 %3046
        %v3048 = vsub.f32 %v3044, %v3047
        %v3049 = vmul.f32 %v3048, 1.442695
        %v3050 = vpow.pop %v3049
        %v3051 = vsel %vm883, %v3050, 0.0
        %3052 = vadd.xlane.f32.xlu0 %v3051
        %v3053 = vpop.xlane.xlu0 %3052
        %v3054 = vrcp.pop %v3053
        %v3055 = vmul.f32 %v3050, %v3054
        %3056 = vrot.lane.b32.xlu0 %v2217, 32
        %v3057 = vpop.permute.xlu0 %3056
        %v3060 = vsel %vm883, %v3055, 0
        %3062 = vmatprep.subr.mxu0 0.0
        %3063 = vmatpush1.msra.mxu0 %v3057
        %3064 = vmatprep.subr.mxu0 0.0
        %3065 = vmatpush1.msra.mxu0 0.0
        %3066 = vmatprep.subr.mxu0 0.0
        %3067 = vmatpush1.msra.mxu0 0.0
        %3068 = vmatprep.subr.mxu0 0.0
        %3069 = vmatpush1.msra.mxu0 0.0
        %3070 = vmatprep.subr.mxu0 0.0
        %3071 = vmatpush1.msra.mxu0 0.0
        %3072 = vmatprep.subr.mxu0 0.0
        %3073 = vmatpush1.msra.mxu0 0.0
        %3074 = vmatprep.subr.mxu0 0.0
        %3075 = vmatpush1.msra.mxu0 0.0
        %3076 = vmatprep.subr.mxu0 0.0
        %3077 = vmatpush1.msra.mxu0 0.0
        %3078 = vmatprep.subr.mxu0 0.0
        %3079 = vmatpush1.msra.mxu0 0.0
        %3080 = vmatprep.subr.mxu0 0.0
        %3081 = vmatpush1.msra.mxu0 0.0
        %3082 = vmatprep.subr.mxu0 0.0
        %3083 = vmatpush1.msra.mxu0 0.0
        %3084 = vmatprep.subr.mxu0 0.0
        %3085 = vmatpush1.msra.mxu0 0.0
        %3086 = vmatprep.subr.mxu0 0.0
        %3087 = vmatpush1.msra.mxu0 0.0
        %3088 = vmatprep.subr.mxu0 0.0
        %3089 = vmatpush1.msra.mxu0 0.0
        %3090 = vmatprep.subr.mxu0 0.0
        %3091 = vmatpush1.msra.mxu0 0.0
        %3092 = vmatprep.subr.mxu0 0.0
        %3093 = vmatpush1.msra.mxu0 0.0
        %3094 = vmatprep.subr.mxu0 0.0
        %3095 = vmatpush1.msra.mxu0 0.0
        %3096 = vmatprep.subr.mxu0 0.0
        %3097 = vmatpush1.msra.mxu0 0.0
        %3098 = vmatprep.subr.mxu0 0.0
        %3099 = vmatpush1.msra.mxu0 0.0
        %3100 = vmatprep.subr.mxu0 0.0
        %3101 = vmatpush1.msra.mxu0 0.0
        %3102 = vmatprep.subr.mxu0 0.0
        %3103 = vmatpush1.msra.mxu0 0.0
        %3104 = vmatprep.subr.mxu0 0.0
        %3105 = vmatpush1.msra.mxu0 0.0
        %3106 = vmatprep.subr.mxu0 0.0
        %3107 = vmatpush1.msra.mxu0 0.0
        %3108 = vmatprep.subr.mxu0 0.0
        %3109 = vmatpush1.msra.mxu0 0.0
        %3110 = vmatprep.subr.mxu0 0.0
        %3111 = vmatpush1.msra.mxu0 0.0
        %3112 = vmatprep.subr.mxu0 0.0
        %3113 = vmatpush1.msra.mxu0 0.0
        %3114 = vmatprep.subr.mxu0 0.0
        %3115 = vmatpush1.msra.mxu0 0.0
        %3116 = vmatprep.subr.mxu0 0.0
        %3117 = vmatpush1.msra.mxu0 0.0
        %3118 = vmatprep.subr.mxu0 0.0
        %3119 = vmatpush1.msra.mxu0 0.0
        %3120 = vmatprep.subr.mxu0 0.0
        %3121 = vmatpush1.msra.mxu0 0.0
        %3122 = vmatprep.subr.mxu0 0.0
        %3123 = vmatpush1.msra.mxu0 0.0
        %3124 = vmatprep.subr.mxu0 0.0
        %3125 = vmatpush1.msra.mxu0 0.0
        %3126 = vmatprep.mubr.f32.mxu0 0.0
        %3127 = vmatmul.mubr.f32.gmra.mrb[0].mxu0 %v3060
        %v3128 = vpop.f32.mrb[0].mxu0
        %v3129 = vadd.f32 0.0, %v3128
        %v3130 = vpop.f32.mrb[0].mxu0
        %3131 = vdwg.mxu0
        %v3133 = vsel %vm804, %v3129, 0
        %3135 = vmatprep.subr.mxu0 0.0
        %3136 = vmatpush1.msra.mxu0 %v2233
        %3137 = vmatprep.subr.mxu0 0.0
        %3138 = vmatpush1.msra.mxu0 %v2234
        %3139 = vmatprep.subr.mxu0 0.0
        %3140 = vmatpush1.msra.mxu0 %v2235
        %3141 = vmatprep.subr.mxu0 0.0
        %3142 = vmatpush1.msra.mxu0 %v2236
        %3143 = vmatprep.subr.mxu0 0.0
        %3144 = vmatpush1.msra.mxu0 0.0
        %3145 = vmatprep.subr.mxu0 0.0
        %3146 = vmatpush1.msra.mxu0 0.0
        %3147 = vmatprep.subr.mxu0 0.0
        %3148 = vmatpush1.msra.mxu0 0.0
        %3149 = vmatprep.subr.mxu0 0.0
        %3150 = vmatpush1.msra.mxu0 0.0
        %3151 = vmatprep.subr.mxu0 0.0
        %3152 = vmatpush1.msra.mxu0 0.0
        %3153 = vmatprep.subr.mxu0 0.0
        %3154 = vmatpush1.msra.mxu0 0.0
        %3155 = vmatprep.subr.mxu0 0.0
        %3156 = vmatpush1.msra.mxu0 0.0
        %3157 = vmatprep.subr.mxu0 0.0
        %3158 = vmatpush1.msra.mxu0 0.0
        %3159 = vmatprep.subr.mxu0 0.0
        %3160 = vmatpush1.msra.mxu0 0.0
        %3161 = vmatprep.subr.mxu0 0.0
        %3162 = vmatpush1.msra.mxu0 0.0
        %3163 = vmatprep.subr.mxu0 0.0
        %3164 = vmatpush1.msra.mxu0 0.0
        %3165 = vmatprep.subr.mxu0 0.0
        %3166 = vmatpush1.msra.mxu0 0.0
        %3167 = vmatprep.subr.mxu0 0.0
        %3168 = vmatpush1.msra.mxu0 0.0
        %3169 = vmatprep.subr.mxu0 0.0
        %3170 = vmatpush1.msra.mxu0 0.0
        %3171 = vmatprep.subr.mxu0 0.0
        %3172 = vmatpush1.msra.mxu0 0.0
        %3173 = vmatprep.subr.mxu0 0.0
        %3174 = vmatpush1.msra.mxu0 0.0
        %3175 = vmatprep.subr.mxu0 0.0
        %3176 = vmatpush1.msra.mxu0 0.0
        %3177 = vmatprep.subr.mxu0 0.0
        %3178 = vmatpush1.msra.mxu0 0.0
        %3179 = vmatprep.subr.mxu0 0.0
        %3180 = vmatpush1.msra.mxu0 0.0
        %3181 = vmatprep.subr.mxu0 0.0
        %3182 = vmatpush1.msra.mxu0 0.0
        %3183 = vmatprep.subr.mxu0 0.0
        %3184 = vmatpush1.msra.mxu0 0.0
        %3185 = vmatprep.subr.mxu0 0.0
        %3186 = vmatpush1.msra.mxu0 0.0
        %3187 = vmatprep.subr.mxu0 0.0
        %3188 = vmatpush1.msra.mxu0 0.0
        %3189 = vmatprep.subr.mxu0 0.0
        %3190 = vmatpush1.msra.mxu0 0.0
        %3191 = vmatprep.subr.mxu0 0.0
        %3192 = vmatpush1.msra.mxu0 0.0
        %3193 = vmatprep.subr.mxu0 0.0
        %3194 = vmatpush1.msra.mxu0 0.0
        %3195 = vmatprep.subr.mxu0 0.0
        %3196 = vmatpush1.msra.mxu0 0.0
        %3197 = vmatprep.subr.mxu0 0.0
        %3198 = vmatpush1.msra.mxu0 0.0
        %3199 = vmatprep.mubr.f32.mxu0 0.0
        %3200 = vmatmul.mubr.f32.gmra.mrb[0].mxu0 %v3133
        %v3201 = vpop.f32.mrb[0].mxu0
        %v3202 = vadd.f32 0.0, %v3201
        %v3203 = vpop.f32.mrb[0].mxu0
        %3204 = vdwg.mxu0
        %v3205 = vadd.f32 %v2964, %v3202
        %s3206 = scalar_lea.vmem %s6, 2
        %v3207 = vld [vmem:[%s3206] sm:$0x3]
        %3208 = vadd.xlane.f32.xlu0 %v3205
        %v3209 = vpop.xlane.xlu0 %3208
        %v3210 = vmul.f32 %v3209, 0.03125
        %v3211 = vmul.f32 %v3205, %v3205
        %3212 = vadd.xlane.f32.xlu0 %v3211
        %v3213 = vpop.xlane.xlu0 %3212
        %v3214 = vmul.f32 %v3213, 0.03125
        %v3215 = vmul.f32 %v3210, %v3210
        %v3216 = vsub.f32 %v3214, %v3215
        %v3217 = vsub.f32 %v3205, %v3210
        %v3218 = vadd.f32 %v3216, 1e-05
        %v3219 = vrsqrt.pop %v3218
        %v3220 = vmul.f32 %v3217, %v3219
        %v3221 = vlaneseq
        %v3222 = vshrl.u32 %v3221, 7
        %v3223 = vsub.s32 0, %v3222
        %v3224 = vrot.slane %v3207, %v3223
        %v3225 = vmul.f32 %v3220, %v3224
        %v3226 = vlaneseq
        %v3227 = vshrl.u32 %v3226, 7
        %v3228 = vsub.s32 1, %v3227
        %v3229 = vrot.slane %v3207, %v3228
        %v3230 = vadd.f32 %v3225, %v3229
        %s3231 = scalar_lea.vmem [#allocation10], 128
        %v3232 = vld [vmem:[%s3231] sm:$0xff]
        %v3233 = vld [vmem:[%s3231 + $0x8] sm:$0xff]
        %v3234 = vld [vmem:[%s3231 + $0x10] sm:$0xff]
        %v3235 = vld [vmem:[%s3231 + $0x18] sm:$0xff]
        %v3236 = vld [vmem:[%s3231 + $0x20] sm:$0xff]
        %v3237 = vld [vmem:[%s3231 + $0x28] sm:$0xff]
        %v3238 = vld [vmem:[%s3231 + $0x30] sm:$0xff]
        %v3239 = vld [vmem:[%s3231 + $0x38] sm:$0xff]
        %v3240 = vld [vmem:[%s3231 + $0x40] sm:$0xff]
        %v3241 = vld [vmem:[%s3231 + $0x48] sm:$0xff]
        %v3242 = vld [vmem:[%s3231 + $0x50] sm:$0xff]
        %v3243 = vld [vmem:[%s3231 + $0x58] sm:$0xff]
        %v3244 = vld [vmem:[%s3231 + $0x60] sm:$0xff]
        %v3245 = vld [vmem:[%s3231 + $0x68] sm:$0xff]
        %v3246 = vld [vmem:[%s3231 + $0x70] sm:$0xff]
        %v3247 = vld [vmem:[%s3231 + $0x78] sm:$0xff]
        %s3248 = scalar_lea.vmem %s8, 1
        %v3249 = vld [vmem:[%s3248] sm:$0x1]
        %v3251 = vlaneseq
        %v3252 = vshrl.u32 %v3251, 7
        %v3253 = vsub.s32 0, %v3252
        %v3254 = vrot.slane %v3249, %v3253
        %3256 = vmatprep.subr.mxu0 0.0
        %3257 = vmatpush1.msra.mxu0 %v3232
        %3258 = vmatprep.subr.mxu0 0.0
        %3259 = vmatpush1.msra.mxu0 %v3233
        %3260 = vmatprep.subr.mxu0 0.0
        %3261 = vmatpush1.msra.mxu0 %v3234
        %3262 = vmatprep.subr.mxu0 0.0
        %3263 = vmatpush1.msra.mxu0 %v3235
        %3264 = vmatprep.subr.mxu0 0.0
        %3265 = vmatpush1.msra.mxu0 %v3236
        %3266 = vmatprep.subr.mxu0 0.0
        %3267 = vmatpush1.msra.mxu0 %v3237
        %3268 = vmatprep.subr.mxu0 0.0
        %3269 = vmatpush1.msra.mxu0 %v3238
        %3270 = vmatprep.subr.mxu0 0.0
        %3271 = vmatpush1.msra.mxu0 %v3239
        %3272 = vmatprep.subr.mxu0 0.0
        %3273 = vmatpush1.msra.mxu0 %v3240
        %3274 = vmatprep.subr.mxu0 0.0
        %3275 = vmatpush1.msra.mxu0 %v3241
        %3276 = vmatprep.subr.mxu0 0.0
        %3277 = vmatpush1.msra.mxu0 %v3242
        %3278 = vmatprep.subr.mxu0 0.0
        %3279 = vmatpush1.msra.mxu0 %v3243
        %3280 = vmatprep.subr.mxu0 0.0
        %3281 = vmatpush1.msra.mxu0 %v3244
        %3282 = vmatprep.subr.mxu0 0.0
        %3283 = vmatpush1.msra.mxu0 %v3245
        %3284 = vmatprep.subr.mxu0 0.0
        %3285 = vmatpush1.msra.mxu0 %v3246
        %3286 = vmatprep.subr.mxu0 0.0
        %3287 = vmatpush1.msra.mxu0 %v3247
        %3288 = vmatprep.subr.mxu0 0.0
        %3289 = vmatpush1.msra.mxu0 0.0
        %3290 = vmatprep.subr.mxu0 0.0
        %3291 = vmatpush1.msra.mxu0 0.0
        %3292 = vmatprep.subr.mxu0 0.0
        %3293 = vmatpush1.msra.mxu0 0.0
        %3294 = vmatprep.subr.mxu0 0.0
        %3295 = vmatpush1.msra.mxu0 0.0
        %3296 = vmatprep.subr.mxu0 0.0
        %3297 = vmatpush1.msra.mxu0 0.0
        %3298 = vmatprep.subr.mxu0 0.0
        %3299 = vmatpush1.msra.mxu0 0.0
        %3300 = vmatprep.subr.mxu0 0.0
        %3301 = vmatpush1.msra.mxu0 0.0
        %3302 = vmatprep.subr.mxu0 0.0
        %3303 = vmatpush1.msra.mxu0 0.0
        %3304 = vmatprep.subr.mxu0 0.0
        %3305 = vmatpush1.msra.mxu0 0.0
        %3306 = vmatprep.subr.mxu0 0.0
        %3307 = vmatpush1.msra.mxu0 0.0
        %3308 = vmatprep.subr.mxu0 0.0
        %3309 = vmatpush1.msra.mxu0 0.0
        %3310 = vmatprep.subr.mxu0 0.0
        %3311 = vmatpush1.msra.mxu0 0.0
        %3312 = vmatprep.subr.mxu0 0.0
        %3313 = vmatpush1.msra.mxu0 0.0
        %3314 = vmatprep.subr.mxu0 0.0
        %3315 = vmatpush1.msra.mxu0 0.0
        %3316 = vmatprep.subr.mxu0 0.0
        %3317 = vmatpush1.msra.mxu0 0.0
        %3318 = vmatprep.subr.mxu0 0.0
        %3319 = vmatpush1.msra.mxu0 0.0
        %3320 = vmatprep.mubr.f32.mxu0 0.0
        %3321 = vmatmul.mubr.f32.gmra.mrb[0].mxu0 %v3230
        %v3322 = vpop.f32.mrb[0].mxu0
        %v3323 = vadd.f32 %v3254, %v3322
        %v3324 = vpop.f32.mrb[0].mxu0
        %3325 = vdwg.mxu0
        %v3326 = vmul.f32 %v3323, 0.5
        %v3327 = vmul.f32 %v3323, 0.044715
        %v3328 = vmul.f32 %v3327, %v3323
        %v3329 = vmul.f32 %v3328, %v3323
        %v3330 = vadd.f32 %v3323, %v3329
        %v3331 = vmul.f32 %v3330, 0.7978845
        %v3332 = vtanh.pop %v3331
        %v3333 = vadd.f32 %v3332, 1.0
        %v3334 = vmul.f32 %v3326, %v3333
        %s3335 = scalar_lea.vmem [#allocation11], 128
        %v3336 = vld [vmem:[%s3335] sm:$0xff]
        %v3337 = vld [vmem:[%s3335 + $0x8] sm:$0xff]
        %v3338 = vld [vmem:[%s3335 + $0x10] sm:$0xff]
        %v3339 = vld [vmem:[%s3335 + $0x18] sm:$0xff]
        %v3340 = vld [vmem:[%s3335 + $0x20] sm:$0xff]
        %v3341 = vld [vmem:[%s3335 + $0x28] sm:$0xff]
        %v3342 = vld [vmem:[%s3335 + $0x30] sm:$0xff]
        %v3343 = vld [vmem:[%s3335 + $0x38] sm:$0xff]
        %v3344 = vld [vmem:[%s3335 + $0x40] sm:$0xff]
        %v3345 = vld [vmem:[%s3335 + $0x48] sm:$0xff]
        %v3346 = vld [vmem:[%s3335 + $0x50] sm:$0xff]
        %v3347 = vld [vmem:[%s3335 + $0x58] sm:$0xff]
        %v3348 = vld [vmem:[%s3335 + $0x60] sm:$0xff]
        %v3349 = vld [vmem:[%s3335 + $0x68] sm:$0xff]
        %v3350 = vld [vmem:[%s3335 + $0x70] sm:$0xff]
        %v3351 = vld [vmem:[%s3335 + $0x78] sm:$0xff]
        %3352 = vmatprep.subr.mxu0 0.0
        %3353 = vmatpush1.msra.mxu0 %v3336
        %3354 = vmatprep.subr.mxu0 0.0
        %3355 = vmatpush1.msra.mxu0 %v3337
        %3356 = vmatprep.subr.mxu0 0.0
        %3357 = vmatpush1.msra.mxu0 %v3338
        %3358 = vmatprep.subr.mxu0 0.0
        %3359 = vmatpush1.msra.mxu0 %v3339
        %3360 = vmatprep.subr.mxu0 0.0
        %3361 = vmatpush1.msra.mxu0 %v3340
        %3362 = vmatprep.subr.mxu0 0.0
        %3363 = vmatpush1.msra.mxu0 %v3341
        %3364 = vmatprep.subr.mxu0 0.0
        %3365 = vmatpush1.msra.mxu0 %v3342
        %3366 = vmatprep.subr.mxu0 0.0
        %3367 = vmatpush1.msra.mxu0 %v3343
        %3368 = vmatprep.subr.mxu0 0.0
        %3369 = vmatpush1.msra.mxu0 %v3344
        %3370 = vmatprep.subr.mxu0 0.0
        %3371 = vmatpush1.msra.mxu0 %v3345
        %3372 = vmatprep.subr.mxu0 0.0
        %3373 = vmatpush1.msra.mxu0 %v3346
        %3374 = vmatprep.subr.mxu0 0.0
        %3375 = vmatpush1.msra.mxu0 %v3347
        %3376 = vmatprep.subr.mxu0 0.0
        %3377 = vmatpush1.msra.mxu0 %v3348
        %3378 = vmatprep.subr.mxu0 0.0
        %3379 = vmatpush1.msra.mxu0 %v3349
        %3380 = vmatprep.subr.mxu0 0.0
        %3381 = vmatpush1.msra.mxu0 %v3350
        %3382 = vmatprep.subr.mxu0 0.0
        %3383 = vmatpush1.msra.mxu0 %v3351
        %3384 = vmatprep.subr.mxu0 0.0
        %3385 = vmatpush1.msra.mxu0 0.0
        %3386 = vmatprep.subr.mxu0 0.0
        %3387 = vmatpush1.msra.mxu0 0.0
        %3388 = vmatprep.subr.mxu0 0.0
        %3389 = vmatpush1.msra.mxu0 0.0
        %3390 = vmatprep.subr.mxu0 0.0
        %3391 = vmatpush1.msra.mxu0 0.0
        %3392 = vmatprep.subr.mxu0 0.0
        %3393 = vmatpush1.msra.mxu0 0.0
        %3394 = vmatprep.subr.mxu0 0.0
        %3395 = vmatpush1.msra.mxu0 0.0
        %3396 = vmatprep.subr.mxu0 0.0
        %3397 = vmatpush1.msra.mxu0 0.0
        %3398 = vmatprep.subr.mxu0 0.0
        %3399 = vmatpush1.msra.mxu0 0.0
        %3400 = vmatprep.subr.mxu0 0.0
        %3401 = vmatpush1.msra.mxu0 0.0
        %3402 = vmatprep.subr.mxu0 0.0
        %3403 = vmatpush1.msra.mxu0 0.0
        %3404 = vmatprep.subr.mxu0 0.0
        %3405 = vmatpush1.msra.mxu0 0.0
        %3406 = vmatprep.subr.mxu0 0.0
        %3407 = vmatpush1.msra.mxu0 0.0
        %3408 = vmatprep.subr.mxu0 0.0
        %3409 = vmatpush1.msra.mxu0 0.0
        %3410 = vmatprep.subr.mxu0 0.0
        %3411 = vmatpush1.msra.mxu0 0.0
        %3412 = vmatprep.subr.mxu0 0.0
        %3413 = vmatpush1.msra.mxu0 0.0
        %3414 = vmatprep.subr.mxu0 0.0
        %3415 = vmatpush1.msra.mxu0 0.0
        %3416 = vmatprep.mubr.f32.mxu0 0.0
        %3417 = vmatmul.mubr.f32.gmra.mrb[0].mxu0 %v3334
        %v3418 = vpop.f32.mrb[0].mxu0
        %v3419 = vadd.f32 0.0, %v3418
        %v3420 = vpop.f32.mrb[0].mxu0
        %3421 = vdwg.mxu0
        %v3422 = vadd.f32 %v3205, %v3419
        %s3423 = scalar_lea.vmem %s10, 1
        %v3424 = vld [vmem:[%s3423] sm:$0x1]
        %v3426 = vlaneseq
        %v3427 = vshrl.u32 %v3426, 7
        %v3428 = vsub.s32 0, %v3427
        %v3429 = vrot.slane %v3424, %v3428
        %v3431 = vadd.f32 %v3422, %v3429
        %v3432 = vld [vmem:[%s11] sm:$0x3]
        %3433 = vadd.xlane.f32.xlu0 %v3431
        %v3434 = vpop.xlane.xlu0 %3433
        %v3435 = vmul.f32 %v3434, 0.03125
        %v3436 = vmul.f32 %v3431, %v3431
        %3437 = vadd.xlane.f32.xlu0 %v3436
        %v3438 = vpop.xlane.xlu0 %3437
        %v3439 = vmul.f32 %v3438, 0.03125
        %v3440 = vmul.f32 %v3435, %v3435
        %v3441 = vsub.f32 %v3439, %v3440
        %v3442 = vsub.f32 %v3431, %v3435
        %v3443 = vadd.f32 %v3441, 1e-05
        %v3444 = vrsqrt.pop %v3443
        %v3445 = vmul.f32 %v3442, %v3444
        %v3446 = vlaneseq
        %v3447 = vshrl.u32 %v3446, 7
        %v3448 = vsub.s32 0, %v3447
        %v3449 = vrot.slane %v3432, %v3448
        %v3450 = vmul.f32 %v3445, %v3449
        %v3451 = vlaneseq
        %v3452 = vshrl.u32 %v3451, 7
        %v3453 = vsub.s32 1, %v3452
        %v3454 = vrot.slane %v3432, %v3453
        %v3455 = vadd.f32 %v3450, %v3454
        %v3456 = vld [vmem:[#allocation13] sm:$0xff]
        %v3457 = vld [vmem:[#allocation13 + $0x8] sm:$0xff]
        %v3458 = vld [vmem:[#allocation13 + $0x10] sm:$0xff]
        %v3459 = vld [vmem:[#allocation13 + $0x18] sm:$0xff]
        %v3460 = vld [vmem:[#allocation13 + $0x20] sm:$0xff]
        %v3461 = vld [vmem:[#allocation13 + $0x28] sm:$0xff]
        %v3462 = vld [vmem:[#allocation13 + $0x30] sm:$0xff]
        %v3463 = vld [vmem:[#allocation13 + $0x38] sm:$0xff]
        %v3464 = vld [vmem:[#allocation13 + $0x40] sm:$0xff]
        %v3465 = vld [vmem:[#allocation13 + $0x48] sm:$0xff]
        %v3466 = vld [vmem:[#allocation13 + $0x50] sm:$0xff]
        %v3467 = vld [vmem:[#allocation13 + $0x58] sm:$0xff]
        %v3468 = vld [vmem:[#allocation13 + $0x60] sm:$0xff]
        %v3469 = vld [vmem:[#allocation13 + $0x68] sm:$0xff]
        %v3470 = vld [vmem:[#allocation13 + $0x70] sm:$0xff]
        %v3471 = vld [vmem:[#allocation13 + $0x78] sm:$0xff]
        %3472 = vmatprep.subr.mxu0 0.0
        %3473 = vmatpush1.msra.mxu0 %v3456
        %3474 = vmatprep.subr.mxu0 0.0
        %3475 = vmatpush1.msra.mxu0 %v3457
        %3476 = vmatprep.subr.mxu0 0.0
        %3477 = vmatpush1.msra.mxu0 %v3458
        %3478 = vmatprep.subr.mxu0 0.0
        %3479 = vmatpush1.msra.mxu0 %v3459
        %3480 = vmatprep.subr.mxu0 0.0
        %3481 = vmatpush1.msra.mxu0 %v3460
        %3482 = vmatprep.subr.mxu0 0.0
        %3483 = vmatpush1.msra.mxu0 %v3461
        %3484 = vmatprep.subr.mxu0 0.0
        %3485 = vmatpush1.msra.mxu0 %v3462
        %3486 = vmatprep.subr.mxu0 0.0
        %3487 = vmatpush1.msra.mxu0 %v3463
        %3488 = vmatprep.subr.mxu0 0.0
        %3489 = vmatpush1.msra.mxu0 %v3464
        %3490 = vmatprep.subr.mxu0 0.0
        %3491 = vmatpush1.msra.mxu0 %v3465
        %3492 = vmatprep.subr.mxu0 0.0
        %3493 = vmatpush1.msra.mxu0 %v3466
        %3494 = vmatprep.subr.mxu0 0.0
        %3495 = vmatpush1.msra.mxu0 %v3467
        %3496 = vmatprep.subr.mxu0 0.0
        %3497 = vmatpush1.msra.mxu0 %v3468
        %3498 = vmatprep.subr.mxu0 0.0
        %3499 = vmatpush1.msra.mxu0 %v3469
        %3500 = vmatprep.subr.mxu0 0.0
        %3501 = vmatpush1.msra.mxu0 %v3470
        %3502 = vmatprep.subr.mxu0 0.0
        %3503 = vmatpush1.msra.mxu0 %v3471
        %3504 = vmatprep.subr.mxu0 0.0
        %3505 = vmatpush1.msra.mxu0 0.0
        %3506 = vmatprep.subr.mxu0 0.0
        %3507 = vmatpush1.msra.mxu0 0.0
        %3508 = vmatprep.subr.mxu0 0.0
        %3509 = vmatpush1.msra.mxu0 0.0
        %3510 = vmatprep.subr.mxu0 0.0
        %3511 = vmatpush1.msra.mxu0 0.0
        %3512 = vmatprep.subr.mxu0 0.0
        %3513 = vmatpush1.msra.mxu0 0.0
        %3514 = vmatprep.subr.mxu0 0.0
        %3515 = vmatpush1.msra.mxu0 0.0
        %3516 = vmatprep.subr.mxu0 0.0
        %3517 = vmatpush1.msra.mxu0 0.0
        %3518 = vmatprep.subr.mxu0 0.0
        %3519 = vmatpush1.msra.mxu0 0.0
        %3520 = vmatprep.subr.mxu0 0.0
        %3521 = vmatpush1.msra.mxu0 0.0
        %3522 = vmatprep.subr.mxu0 0.0
        %3523 = vmatpush1.msra.mxu0 0.0
        %3524 = vmatprep.subr.mxu0 0.0
        %3525 = vmatpush1.msra.mxu0 0.0
        %3526 = vmatprep.subr.mxu0 0.0
        %3527 = vmatpush1.msra.mxu0 0.0
        %3528 = vmatprep.subr.mxu0 0.0
        %3529 = vmatpush1.msra.mxu0 0.0
        %3530 = vmatprep.subr.mxu0 0.0
        %3531 = vmatpush1.msra.mxu0 0.0
        %3532 = vmatprep.subr.mxu0 0.0
        %3533 = vmatpush1.msra.mxu0 0.0
        %3534 = vmatprep.subr.mxu0 0.0
        %3535 = vmatpush1.msra.mxu0 0.0
        %3536 = vmatprep.mubr.f32.mxu0 0.0
        %3537 = vmatmul.mubr.f32.gmra.mrb[0].mxu0 %v3455
        %v3538 = vpop.f32.mrb[0].mxu0
        %v3539 = vadd.f32 0.0, %v3538
        %v3540 = vpop.f32.mrb[0].mxu0
        %3541 = vdwg.mxu0
        %3542 = vst [vmem:[%s542] sm:$0xff] %v3539
        %s3543 = sand.u32 %s319, 1
        %s3544 = scalar_lea.sflag [#allocation4], %s3543
        %s3545 = sand.u32 %s319, 1
        %s3546 = smul.addr %s3545, 8
        %s3547 = scalar_lea.vmem [#allocation14], %s3546
        // Predicated region
        $region101: #{tpu_custom_call.1} parent=71 // pred_check
          %p3548 = pneg %p329
        $region102: #{tpu_custom_call.1} parent=71 // pred_check_branch
          %3550 = sbr.rel (%p3548) target = $region104
        $region103: #{tpu_custom_call.1} parent=71 // pred_region
          %s3552 = ssub.s32 128, 128
          %3553 = vsyncadd %s3544, %s3552
          %s3554 = smul.addr %s33, 128
          %s3555 = scalar_lea.hbm %s13, %s3554
          %s3557 = sshll.u32 %s3547, 4
          %s3558 = int_to_ptr.vmem [resolvable:$true] %s3557
          %3560 = dma.vmem_to_hbm [thread:$0]  %s3558, 128, %s3555, %s3544
        $region104: #{tpu_custom_call.1} parent=71 // pred_fallthru
          _
      $region72: #{tpu_custom_call.1} parent=5 // pred_fallthru
        _
      %p3561 = scmp.le.s32.totalorder 2, %s28
      // Predicated region
      $region105: #{tpu_custom_call.1} parent=5 // pred_check
        %p3562 = pneg %p3561
      $region106: #{tpu_custom_call.1} parent=5 // pred_check_branch
        %3564 = sbr.rel (%p3562) target = $region108
      $region107: #{tpu_custom_call.1} parent=5 // pred_region
        %s3565 = ssub.s32 %s28, 2
        // Predicated region
        $region109: #{tpu_custom_call.1} parent=107 // pred_check
          %p3566 = pneg %p335
        $region110: #{tpu_custom_call.1} parent=107 // pred_check_branch
          %3568 = sbr.rel (%p3566) target = $region112
        $region111: #{tpu_custom_call.1} parent=107 // pred_region
          %s3569 = sand.u32 %s320, 1
          %s3570 = scalar_lea.sflag [#allocation4], %s3569
          %s3571 = sand.u32 %s320, 1
          %s3572 = smul.addr %s3571, 8
          %s3573 = scalar_lea.vmem [#allocation14], %s3572
          %3574 = dma.done %s3570, 128
        $region112: #{tpu_custom_call.1} parent=107 // pred_fallthru
          _
      $region108: #{tpu_custom_call.1} parent=5 // pred_fallthru
        _
    $region6: #{tpu_custom_call.1} parent=1 // loop_footer
      %s32 = sadd.s32 1, %s28
    $region7: #{tpu_custom_call.1} parent=1 // loop_footer_branch
      %27 = sbr.rel target = $region3
    $region8: #{tpu_custom_call.1} parent=1 // loop_exit
      _
    %3575 = vsyncpa [#allocation3], 1
    %s3576 = scalar_lea.sflag [#allocation3], 1
    %3577 = vsyncpa %s3576, 1
    %3578 = vsyncpa [#allocation6], 1
    %3579 = vsyncpa [#allocation9], 1
    %3580 = vsyncpa [#allocation12], 1
    %3581 = vsyncpa [#allocation4], 1
    %s3582 = scalar_lea.sflag [#allocation4], 1
    %3583 = vsyncpa %s3582, 1

</llo_original>
